<compile_context>
chip_gen: v7x
topology: tpu7x:2x2x1
jax: 0.10.0
libtpu: 0.0.40
codegen_flags: <defaults>
</compile_context>

<pallas_src>
import math

import jax
import jax.numpy as jnp
from jax import lax
from jax.experimental import pallas as pl
from jax.experimental.pallas import tpu as pltpu


_VMEM = pl.BlockSpec(memory_space=pltpu.MemorySpace.VMEM)


def _round_up(n, m):
    return ((n + m - 1) // m) * m


def _vmem_capacity_bytes():
    """Physical VMEM of the local chip generation; conservative fallback."""
    try:
        info = pltpu.get_tpu_info()
        cap = getattr(info, "vmem_capacity_bytes", None)
        if cap:
            return int(cap)
    except Exception:
        pass
    return 64 << 20  # v7x per-TensorCore VMEM (smallest of the supported gens)


def _lstm_fused_kernel(x_ref, len_ref, w_ih0_ref, w_ihr_ref, w_hh_ref, b_ref,
                       w_fc_ref, b_fc_ref, logits_ref, seq_sc, proj_sc):
    """Fused multi-layer LSTM + FC head.

    Gate order along the fused 4Hp axis is (i, f, o, g).

    x_ref:     (T*Bp, Din)   bf16, time-major rows (row = t*Bp + b)
    len_ref:   (Bp, 1)       int32 valid lengths (0 for padded batch rows)
    w_ih0_ref: (Din, 4Hp)    bf16, layer-0 input weights (gates fused)
    w_ihr_ref: (max(L-1,1), Hp, 4Hp) bf16, input weights for layers 1..L-1
    w_hh_ref:  (L, Hp, 4Hp)  bf16, recurrent weights
    b_ref:     (L, 1, 4Hp)   f32, b_ih + b_hh
    w_fc_ref:  (Hp, Cp)      bf16
    b_fc_ref:  (1, Cp)       f32
    logits_ref:(Bp, Cp)      f32 output
    seq_sc:    (T*Bp, Hp)    bf16 scratch, inter-layer hidden sequence
    proj_sc:   (T*Bp, 4Hp)   bf16 scratch, hoisted input projection (bias NOT folded)
    """
    Bp = len_ref.shape[0]
    TBp, Hp = seq_sc.shape
    T = TBp // Bp
    L = w_hh_ref.shape[0]

    # Unroll policy: fully unroll short static loops; back off when gate tiles get big.
    if Hp >= 512:
        unroll = 1
    elif T <= 16:
        unroll = T
    else:
        unroll = 2

    lens = len_ref[...]                                     # (Bp, 1) int32

    h_last = jnp.zeros((Bp, Hp), jnp.float32)
    for layer in range(L):
        # ---- Hoisted input projection for the whole sequence (one big MXU matmul),
        #      stored bf16; bias stays f32 and is added per-step at gate time. ----
        if layer == 0:
            proj = jnp.dot(x_ref[...], w_ih0_ref[...],
                           preferred_element_type=jnp.float32)
        else:
            proj = jnp.dot(seq_sc[...], w_ihr_ref[layer - 1],
                           preferred_element_type=jnp.float32)
        proj_sc[...] = proj.astype(proj_sc.dtype)

        w_hh_l = w_hh_ref[layer]                            # (Hp, 4Hp) bf16, loop-invariant
        b_l = b_ref[layer]                                  # (1, 4Hp)  f32,  loop-invariant
        write_seq = layer < L - 1

        def step(t, carry, *, _w_hh=w_hh_l, _b=b_l, _write_seq=write_seq):
            h_prev, c_prev = carry
            row = pl.multiple_of(t * Bp, Bp)
            # One fused (Bp, 4Hp) gate tile per step: precomputed x-proj + h @ W_hh + b.
            gates = (proj_sc[pl.ds(row, Bp), :].astype(jnp.float32)
                     + _b
                     + jnp.dot(h_prev.astype(jnp.bfloat16), _w_hh,
                               preferred_element_type=jnp.float32))
            # Gate order (i, f, o, g): one sigmoid over a contiguous 3*Hp slice,
            # one tanh over the trailing Hp slice.
            sig = jax.nn.sigmoid(gates[:, 0:3 * Hp])
            i_g = sig[:, 0 * Hp:1 * Hp]
            f_g = sig[:, 1 * Hp:2 * Hp]
            o_g = sig[:, 2 * Hp:3 * Hp]
            g_g = jnp.tanh(gates[:, 3 * Hp:4 * Hp])
            c_new = f_g * c_prev + i_g * g_g
            h_new = o_g * jnp.tanh(c_new)
            # Packed-sequence semantics: freeze state for rows whose sequence ended.
            valid = t < lens                                # (Bp, 1) bool
            h_upd = jnp.where(valid, h_new, h_prev)
            c_upd = jnp.where(valid, c_new, c_prev)
            if _write_seq:
                seq_sc[pl.ds(row, Bp), :] = h_upd.astype(seq_sc.dtype)
            return (h_upd, c_upd)

        # TODO(synk): on v6e/v7x carry h in bf16 between steps (keep c f32); kept f32
        #             here so the same kernel stays safe on v5e (no bf16 VALU/EUP).
        zeros = jnp.zeros((Bp, Hp), jnp.float32)
        h_last, _ = lax.fori_loop(0, T, step, (zeros, zeros), unroll=unroll)

    # ---- Fused FC head: logits = h_n[-1] @ W_fc + b_fc (lane-dense Cp output). ----
    logits_ref[...] = (jnp.dot(h_last.astype(jnp.bfloat16), w_fc_ref[...],
                               preferred_element_type=jnp.float32)
                       + b_fc_ref[...])


def _pad_reorder_gates(w, h, hp):
    """Reorder fused gates (i,f,g,o) -> (i,f,o,g) and pad each gate block to hp wide."""
    lead = w.shape[:-1]
    w4 = w.reshape(*lead, 4, h)
    w4 = w4[..., (0, 1, 3, 2), :]                           # i,f,g,o -> i,f,o,g
    w4 = jnp.pad(w4, [(0, 0)] * len(lead) + [(0, 0), (0, hp - h)])
    return w4.reshape(*lead, 4 * hp)


def lstm_classifier_forward(x, lengths, layer_params, fc_params):
    """x: (B, T, D) float32 batch-first; lengths: (B,) int -> logits (B, C)."""
    B, T, D = x.shape
    L = len(layer_params)
    H = layer_params[0][1].shape[0]                         # w_hh: (H, 4H)
    C = fc_params[0].shape[1]

    Hp = _round_up(H, 128)                                  # lane-dense gate/state tiles
    Bp = _round_up(B, 16)                                   # bf16 sublane multiple
    Cp = _round_up(C, 128)                                  # lane-dense logits store

    # ---- Pack / pad weights (zero padding keeps padded hidden units exactly 0). ----
    w_ih0 = _pad_reorder_gates(layer_params[0][0], H, Hp).astype(jnp.bfloat16)  # (D, 4Hp)
    if L > 1:
        w_ihr = jnp.stack([jnp.pad(_pad_reorder_gates(w_ih, H, Hp), ((0, Hp - H), (0, 0)))
                           for (w_ih, _, _) in layer_params[1:]]).astype(jnp.bfloat16)
    else:
        w_ihr = jnp.zeros((1, Hp, 4 * Hp), jnp.bfloat16)    # unused placeholder
    w_hh = jnp.stack([jnp.pad(_pad_reorder_gates(whh, H, Hp), ((0, Hp - H), (0, 0)))
                      for (_, whh, _) in layer_params]).astype(jnp.bfloat16)     # (L, Hp, 4Hp)
    b = jnp.stack([_pad_reorder_gates(bb, H, Hp) for (_, _, bb) in layer_params])  # (L,1,4Hp) f32
    w_fc = jnp.pad(fc_params[0], ((0, Hp - H), (0, Cp - C))).astype(jnp.bfloat16)
    b_fc = jnp.pad(fc_params[1], ((0, 0), (0, Cp - C)))                          # (1, Cp) f32

    # ---- Pack / pad activations: time-major, batch padded, flattened, bf16. ----
    x_tm = jnp.transpose(x, (1, 0, 2))                      # (T, B, D)
    x_tm = jnp.pad(x_tm, ((0, 0), (0, Bp - B), (0, 0)))
    x2d = x_tm.reshape(T * Bp, D).astype(jnp.bfloat16)
    len2 = jnp.pad(lengths.astype(jnp.int32), (0, Bp - B)).reshape(Bp, 1)

    inputs = (x2d, len2, w_ih0, w_ihr, w_hh, b, w_fc, b_fc)
    in_bytes = sum(a.size * a.dtype.itemsize for a in inputs)
    scratch_bytes = T * Bp * Hp * 2 + T * Bp * 4 * Hp * 2   # seq_sc + bf16 proj_sc
    out_bytes = Bp * Cp * 4
    needed = 2 * in_bytes + 2 * out_bytes + scratch_bytes + (4 << 20)
    vmem_cap = int(0.87 * _vmem_capacity_bytes())           # leave compiler headroom
    vmem_limit = int(min(max(needed, 8 << 20), vmem_cap))

    logits_p = pl.pallas_call(
        _lstm_fused_kernel,
        out_shape=jax.ShapeDtypeStruct((Bp, Cp), jnp.float32),
        in_specs=[_VMEM] * len(inputs),
        out_specs=_VMEM,
        scratch_shapes=[pltpu.VMEM((T * Bp, Hp), jnp.bfloat16),      # inter-layer sequence
                        pltpu.VMEM((T * Bp, 4 * Hp), jnp.bfloat16)],  # hoisted x-projection
        compiler_params=pltpu.CompilerParams(vmem_limit_bytes=vmem_limit),
    )(*inputs)
    return logits_p[:B, :C]


def init_params(key, input_dim, hidden_dim, num_layers, num_classes):
    """Deterministic synthetic init, PyTorch-style U(-1/sqrt(H), 1/sqrt(H)).

    Weights are stored gate-fused in PyTorch gate order (i, f, g, o) along the last
    axis: W_ih (Din, 4H), W_hh (H, 4H), b = b_ih + b_hh (1, 4H). The kernel pack step
    reorders to (i, f, o, g).
    """
    stdv = 1.0 / math.sqrt(hidden_dim)
    layers = []
    for layer in range(num_layers):
        din = input_dim if layer == 0 else hidden_dim
        key, k1, k2, k3, k4 = jax.random.split(key, 5)
        w_ih = jax.random.uniform(k1, (din, 4 * hidden_dim), jnp.float32, -stdv, stdv)
        w_hh = jax.random.uniform(k2, (hidden_dim, 4 * hidden_dim), jnp.float32, -stdv, stdv)
        b_ih = jax.random.uniform(k3, (1, 4 * hidden_dim), jnp.float32, -stdv, stdv)
        b_hh = jax.random.uniform(k4, (1, 4 * hidden_dim), jnp.float32, -stdv, stdv)
        layers.append((w_ih, w_hh, b_ih + b_hh))
    key, k5, k6 = jax.random.split(key, 3)
    w_fc = jax.random.uniform(k5, (hidden_dim, num_classes), jnp.float32, -stdv, stdv)
    b_fc = jax.random.uniform(k6, (1, num_classes), jnp.float32, -stdv, stdv)
    return layers, (w_fc, b_fc)


def reference_forward(x, lengths, layer_params, fc_params):
    """Pure-JAX f32 reference reproducing the PyTorch module's forward (i,f,g,o order)."""
    B, T, _ = x.shape
    seq = x
    h = None
    for (w_ih, w_hh, b) in layer_params:
        H = w_hh.shape[0]
        h = jnp.zeros((B, H), jnp.float32)
        c = jnp.zeros((B, H), jnp.float32)
        outs = []
        for t in range(T):
            gates = seq[:, t, :] @ w_ih + h @ w_hh + b
            i_g = jax.nn.sigmoid(gates[:, 0 * H:1 * H])
            f_g = jax.nn.sigmoid(gates[:, 1 * H:2 * H])
            g_g = jnp.tanh(gates[:, 2 * H:3 * H])
            o_g = jax.nn.sigmoid(gates[:, 3 * H:4 * H])
            c_new = f_g * c + i_g * g_g
            h_new = o_g * jnp.tanh(c_new)
            valid = (t < lengths)[:, None]
            h = jnp.where(valid, h_new, h)
            c = jnp.where(valid, c_new, c)
            outs.append(h)
        seq = jnp.stack(outs, axis=1)
    w_fc, b_fc = fc_params
    return h @ w_fc + b_fc


if __name__ == "__main__":
    B, T = 2, 8
    input_dim, hidden_dim, num_layers, num_classes = 16, 32, 2, 5

    key = jax.random.PRNGKey(0)
    key, k_x = jax.random.split(key)
    x = jax.random.normal(k_x, (B, T, input_dim), dtype=jnp.float32)
    lengths = jnp.array([8, 5], dtype=jnp.int32)   # padded positions beyond length ignored

    layer_params, fc_params = init_params(key, input_dim, hidden_dim, num_layers, num_classes)

    fwd = jax.jit(lstm_classifier_forward)
    logits = fwd(x, lengths, layer_params, fc_params)
    jax.block_until_ready(logits)

    assert logits.shape == (B, num_classes)

    ref = reference_forward(x, lengths, layer_params, fc_params)
    assert jnp.allclose(logits, ref, atol=5e-2, rtol=5e-2), (
        f"max abs diff {float(jnp.max(jnp.abs(logits - ref)))}")

    print("KERNEL_OK")
</pallas_src>

<mosaic_0001>
module attributes {stable_mosaic.version = 11 : i64} {
  func.func @_lstm_fused_kernel(%arg0: memref<128x16xbf16, #tpu.memory_space<vmem>>, %arg1: memref<16x1xi32, #tpu.memory_space<vmem>>, %arg2: memref<16x512xbf16, #tpu.memory_space<vmem>>, %arg3: memref<1x128x512xbf16, #tpu.memory_space<vmem>>, %arg4: memref<2x128x512xbf16, #tpu.memory_space<vmem>>, %arg5: memref<2x1x512xf32, #tpu.memory_space<vmem>>, %arg6: memref<128x128xbf16, #tpu.memory_space<vmem>>, %arg7: memref<1x128xf32, #tpu.memory_space<vmem>>, %arg8: memref<16x128xf32, #tpu.memory_space<vmem>>, %arg9: memref<128x128xbf16, #tpu.memory_space<vmem>>, %arg10: memref<128x512xbf16, #tpu.memory_space<vmem>>) attributes {dimension_semantics = [], scalar_prefetch = 0 : i64, scratch_operands = 2 : i64, tpu.core_type = #tpu.core_type<tc>} {
    %c0 = arith.constant 0 : index
    %c0_0 = arith.constant 0 : index
    %0 = vector.load %arg1[%c0, %c0_0] : memref<16x1xi32, #tpu.memory_space<vmem>>, vector<16x1xi32>
    %c0_1 = arith.constant 0 : index
    %c0_2 = arith.constant 0 : index
    %1 = vector.load %arg0[%c0_1, %c0_2] : memref<128x16xbf16, #tpu.memory_space<vmem>>, vector<128x16xbf16>
    %c0_3 = arith.constant 0 : index
    %c0_4 = arith.constant 0 : index
    %2 = vector.load %arg2[%c0_3, %c0_4] : memref<16x512xbf16, #tpu.memory_space<vmem>>, vector<16x512xbf16>
    %cst = arith.constant dense<0.000000e+00> : vector<128x512xf32>
    %3 = tpu.matmul %1, %2, %cst {dimension_numbers = #tpu.dot_dimension_numbers<[1], [0], [0], [1], [0, 0, 1, 1], [], []>} : vector<128x16xbf16>, vector<16x512xbf16>, vector<128x512xf32> -> vector<128x512xf32>
    %4 = arith.truncf %3 : vector<128x512xf32> to vector<128x512xbf16>
    %c0_5 = arith.constant 0 : index
    %c0_6 = arith.constant 0 : index
    %5 = vector.load %arg10[%c0_5, %c0_6] : memref<128x512xbf16, #tpu.memory_space<vmem>>, vector<128x512xbf16>
    tpu.vector_store %arg10[%c0_5, %c0_6], %4 {strides = array<i32>} : memref<128x512xbf16, #tpu.memory_space<vmem>>, vector<128x512xbf16>,
    %c0_7 = arith.constant 0 : index
    %c0_8 = arith.constant 0 : index
    %c0_9 = arith.constant 0 : index
    %6 = vector.load %arg4[%c0_7, %c0_8, %c0_9] : memref<2x128x512xbf16, #tpu.memory_space<vmem>>, vector<1x128x512xbf16>
    %7 = vector.shape_cast %6 : vector<1x128x512xbf16> to vector<128x512xbf16>
    %c0_10 = arith.constant 0 : index
    %c0_11 = arith.constant 0 : index
    %c0_12 = arith.constant 0 : index
    %8 = vector.load %arg5[%c0_10, %c0_11, %c0_12] : memref<2x1x512xf32, #tpu.memory_space<vmem>>, vector<1x1x512xf32>
    %9 = vector.shape_cast %8 : vector<1x1x512xf32> to vector<1x512xf32>
    %cst_13 = arith.constant 0.000000e+00 : f32
    %10 = vector.broadcast %cst_13 : f32 to vector<16x128xf32>
    %c0_i32 = arith.constant 0 : i32
    %c16_i32 = arith.constant 16 : i32
    %11 = arith.muli %c0_i32, %c16_i32 : i32
    %12 = tpu.assume_multiple %11, 16 : i32
    %13 = arith.index_cast %12 : i32 to index
    %c0_14 = arith.constant 0 : index
    %14 = vector.load %arg10[%13, %c0_14] : memref<128x512xbf16, #tpu.memory_space<vmem>>, vector<16x512xbf16>
    %15 = arith.extf %14 : vector<16x512xbf16> to vector<16x512xf32>
    %16 = vector.broadcast %9 : vector<1x512xf32> to vector<16x512xf32>
    %17 = arith.addf %15, %16 : vector<16x512xf32>
    %18 = arith.truncf %10 : vector<16x128xf32> to vector<16x128xbf16>
    %cst_15 = arith.constant dense<0.000000e+00> : vector<16x512xf32>
    %19 = tpu.matmul %18, %7, %cst_15 {dimension_numbers = #tpu.dot_dimension_numbers<[1], [0], [0], [1], [0, 0, 1, 1], [], []>} : vector<16x128xbf16>, vector<128x512xbf16>, vector<16x512xf32> -> vector<16x512xf32>
    %20 = arith.addf %17, %19 : vector<16x512xf32>
    %21 = vector.extract_strided_slice %20 {offsets = [0, 0], sizes = [16, 384], strides = [1, 1]} : vector<16x512xf32> to vector<16x384xf32>
    %22 = arith.negf %21 : vector<16x384xf32>
    %23 = math.exp %22 : vector<16x384xf32>
    %cst_16 = arith.constant 1.000000e+00 : f32
    %24 = vector.broadcast %cst_16 : f32 to vector<16x384xf32>
    %25 = arith.addf %24, %23 : vector<16x384xf32>
    %26 = arith.divf %24, %25 : vector<16x384xf32>
    %27 = vector.extract_strided_slice %26 {offsets = [0, 0], sizes = [16, 128], strides = [1, 1]} : vector<16x384xf32> to vector<16x128xf32>
    %28 = vector.extract_strided_slice %26 {offsets = [0, 128], sizes = [16, 128], strides = [1, 1]} : vector<16x384xf32> to vector<16x128xf32>
    %29 = vector.extract_strided_slice %26 {offsets = [0, 256], sizes = [16, 128], strides = [1, 1]} : vector<16x384xf32> to vector<16x128xf32>
    %30 = vector.extract_strided_slice %20 {offsets = [0, 384], sizes = [16, 128], strides = [1, 1]} : vector<16x512xf32> to vector<16x128xf32>
    %31 = math.tanh %30 : vector<16x128xf32>
    %32 = arith.mulf %28, %10 : vector<16x128xf32>
    %33 = arith.mulf %27, %31 : vector<16x128xf32>
    %34 = arith.addf %32, %33 : vector<16x128xf32>
    %35 = math.tanh %34 : vector<16x128xf32>
    %36 = arith.mulf %29, %35 : vector<16x128xf32>
    %37 = vector.broadcast %c0_i32 : i32 to vector<16x1xi32>
    %38 = arith.cmpi slt, %37, %0 : vector<16x1xi32>
    %39 = vector.shape_cast %38 : vector<16x1xi1> to vector<16x1xi1>
    %40 = vector.broadcast %39 : vector<16x1xi1> to vector<16x128xi1>
    %41 = arith.select %40, %36, %10 : vector<16x128xi1>, vector<16x128xf32>
    %42 = vector.shape_cast %38 : vector<16x1xi1> to vector<16x1xi1>
    %43 = vector.broadcast %42 : vector<16x1xi1> to vector<16x128xi1>
    %44 = arith.select %43, %34, %10 : vector<16x128xi1>, vector<16x128xf32>
    %45 = arith.truncf %41 : vector<16x128xf32> to vector<16x128xbf16>
    %46 = arith.index_cast %12 : i32 to index
    %c0_17 = arith.constant 0 : index
    %47 = vector.load %arg9[%46, %c0_17] : memref<128x128xbf16, #tpu.memory_space<vmem>>, vector<16x128xbf16>
    tpu.vector_store %arg9[%46, %c0_17], %45 {strides = array<i32>} : memref<128x128xbf16, #tpu.memory_space<vmem>>, vector<16x128xbf16>,
    %c1_i32 = arith.constant 1 : i32
    %c16_i32_18 = arith.constant 16 : i32
    %48 = arith.muli %c1_i32, %c16_i32_18 : i32
    %49 = tpu.assume_multiple %48, 16 : i32
    %50 = arith.index_cast %49 : i32 to index
    %c0_19 = arith.constant 0 : index
    %51 = vector.load %arg10[%50, %c0_19] : memref<128x512xbf16, #tpu.memory_space<vmem>>, vector<16x512xbf16>
    %52 = arith.extf %51 : vector<16x512xbf16> to vector<16x512xf32>
    %53 = vector.broadcast %9 : vector<1x512xf32> to vector<16x512xf32>
    %54 = arith.addf %52, %53 : vector<16x512xf32>
    %55 = arith.truncf %41 : vector<16x128xf32> to vector<16x128xbf16>
    %cst_20 = arith.constant dense<0.000000e+00> : vector<16x512xf32>
    %56 = tpu.matmul %55, %7, %cst_20 {dimension_numbers = #tpu.dot_dimension_numbers<[1], [0], [0], [1], [0, 0, 1, 1], [], []>} : vector<16x128xbf16>, vector<128x512xbf16>, vector<16x512xf32> -> vector<16x512xf32>
    %57 = arith.addf %54, %56 : vector<16x512xf32>
    %58 = vector.extract_strided_slice %57 {offsets = [0, 0], sizes = [16, 384], strides = [1, 1]} : vector<16x512xf32> to vector<16x384xf32>
    %59 = arith.negf %58 : vector<16x384xf32>
    %60 = math.exp %59 : vector<16x384xf32>
    %cst_21 = arith.constant 1.000000e+00 : f32
    %61 = vector.broadcast %cst_21 : f32 to vector<16x384xf32>
    %62 = arith.addf %61, %60 : vector<16x384xf32>
    %63 = arith.divf %61, %62 : vector<16x384xf32>
    %64 = vector.extract_strided_slice %63 {offsets = [0, 0], sizes = [16, 128], strides = [1, 1]} : vector<16x384xf32> to vector<16x128xf32>
    %65 = vector.extract_strided_slice %63 {offsets = [0, 128], sizes = [16, 128], strides = [1, 1]} : vector<16x384xf32> to vector<16x128xf32>
    %66 = vector.extract_strided_slice %63 {offsets = [0, 256], sizes = [16, 128], strides = [1, 1]} : vector<16x384xf32> to vector<16x128xf32>
    %67 = vector.extract_strided_slice %57 {offsets = [0, 384], sizes = [16, 128], strides = [1, 1]} : vector<16x512xf32> to vector<16x128xf32>
    %68 = math.tanh %67 : vector<16x128xf32>
    %69 = arith.mulf %65, %44 : vector<16x128xf32>
    %70 = arith.mulf %64, %68 : vector<16x128xf32>
    %71 = arith.addf %69, %70 : vector<16x128xf32>
    %72 = math.tanh %71 : vector<16x128xf32>
    %73 = arith.mulf %66, %72 : vector<16x128xf32>
    %74 = vector.broadcast %c1_i32 : i32 to vector<16x1xi32>
    %75 = arith.cmpi slt, %74, %0 : vector<16x1xi32>
    %76 = vector.shape_cast %75 : vector<16x1xi1> to vector<16x1xi1>
    %77 = vector.broadcast %76 : vector<16x1xi1> to vector<16x128xi1>
    %78 = arith.select %77, %73, %41 : vector<16x128xi1>, vector<16x128xf32>
    %79 = vector.shape_cast %75 : vector<16x1xi1> to vector<16x1xi1>
    %80 = vector.broadcast %79 : vector<16x1xi1> to vector<16x128xi1>
    %81 = arith.select %80, %71, %44 : vector<16x128xi1>, vector<16x128xf32>
    %82 = arith.truncf %78 : vector<16x128xf32> to vector<16x128xbf16>
    %83 = arith.index_cast %49 : i32 to index
    %c0_22 = arith.constant 0 : index
    %84 = vector.load %arg9[%83, %c0_22] : memref<128x128xbf16, #tpu.memory_space<vmem>>, vector<16x128xbf16>
    tpu.vector_store %arg9[%83, %c0_22], %82 {strides = array<i32>} : memref<128x128xbf16, #tpu.memory_space<vmem>>, vector<16x128xbf16>,
    %c2_i32 = arith.constant 2 : i32
    %c16_i32_23 = arith.constant 16 : i32
    %85 = arith.muli %c2_i32, %c16_i32_23 : i32
    %86 = tpu.assume_multiple %85, 16 : i32
    %87 = arith.index_cast %86 : i32 to index
    %c0_24 = arith.constant 0 : index
    %88 = vector.load %arg10[%87, %c0_24] : memref<128x512xbf16, #tpu.memory_space<vmem>>, vector<16x512xbf16>
    %89 = arith.extf %88 : vector<16x512xbf16> to vector<16x512xf32>
    %90 = vector.broadcast %9 : vector<1x512xf32> to vector<16x512xf32>
    %91 = arith.addf %89, %90 : vector<16x512xf32>
    %92 = arith.truncf %78 : vector<16x128xf32> to vector<16x128xbf16>
    %cst_25 = arith.constant dense<0.000000e+00> : vector<16x512xf32>
    %93 = tpu.matmul %92, %7, %cst_25 {dimension_numbers = #tpu.dot_dimension_numbers<[1], [0], [0], [1], [0, 0, 1, 1], [], []>} : vector<16x128xbf16>, vector<128x512xbf16>, vector<16x512xf32> -> vector<16x512xf32>
    %94 = arith.addf %91, %93 : vector<16x512xf32>
    %95 = vector.extract_strided_slice %94 {offsets = [0, 0], sizes = [16, 384], strides = [1, 1]} : vector<16x512xf32> to vector<16x384xf32>
    %96 = arith.negf %95 : vector<16x384xf32>
    %97 = math.exp %96 : vector<16x384xf32>
    %cst_26 = arith.constant 1.000000e+00 : f32
    %98 = vector.broadcast %cst_26 : f32 to vector<16x384xf32>
    %99 = arith.addf %98, %97 : vector<16x384xf32>
    %100 = arith.divf %98, %99 : vector<16x384xf32>
    %101 = vector.extract_strided_slice %100 {offsets = [0, 0], sizes = [16, 128], strides = [1, 1]} : vector<16x384xf32> to vector<16x128xf32>
    %102 = vector.extract_strided_slice %100 {offsets = [0, 128], sizes = [16, 128], strides = [1, 1]} : vector<16x384xf32> to vector<16x128xf32>
    %103 = vector.extract_strided_slice %100 {offsets = [0, 256], sizes = [16, 128], strides = [1, 1]} : vector<16x384xf32> to vector<16x128xf32>
    %104 = vector.extract_strided_slice %94 {offsets = [0, 384], sizes = [16, 128], strides = [1, 1]} : vector<16x512xf32> to vector<16x128xf32>
    %105 = math.tanh %104 : vector<16x128xf32>
    %106 = arith.mulf %102, %81 : vector<16x128xf32>
    %107 = arith.mulf %101, %105 : vector<16x128xf32>
    %108 = arith.addf %106, %107 : vector<16x128xf32>
    %109 = math.tanh %108 : vector<16x128xf32>
    %110 = arith.mulf %103, %109 : vector<16x128xf32>
    %111 = vector.broadcast %c2_i32 : i32 to vector<16x1xi32>
    %112 = arith.cmpi slt, %111, %0 : vector<16x1xi32>
    %113 = vector.shape_cast %112 : vector<16x1xi1> to vector<16x1xi1>
    %114 = vector.broadcast %113 : vector<16x1xi1> to vector<16x128xi1>
    %115 = arith.select %114, %110, %78 : vector<16x128xi1>, vector<16x128xf32>
    %116 = vector.shape_cast %112 : vector<16x1xi1> to vector<16x1xi1>
    %117 = vector.broadcast %116 : vector<16x1xi1> to vector<16x128xi1>
    %118 = arith.select %117, %108, %81 : vector<16x128xi1>, vector<16x128xf32>
    %119 = arith.truncf %115 : vector<16x128xf32> to vector<16x128xbf16>
    %120 = arith.index_cast %86 : i32 to index
    %c0_27 = arith.constant 0 : index
    %121 = vector.load %arg9[%120, %c0_27] : memref<128x128xbf16, #tpu.memory_space<vmem>>, vector<16x128xbf16>
    tpu.vector_store %arg9[%120, %c0_27], %119 {strides = array<i32>} : memref<128x128xbf16, #tpu.memory_space<vmem>>, vector<16x128xbf16>,
    %c3_i32 = arith.constant 3 : i32
    %c16_i32_28 = arith.constant 16 : i32
    %122 = arith.muli %c3_i32, %c16_i32_28 : i32
    %123 = tpu.assume_multiple %122, 16 : i32
    %124 = arith.index_cast %123 : i32 to index
    %c0_29 = arith.constant 0 : index
    %125 = vector.load %arg10[%124, %c0_29] : memref<128x512xbf16, #tpu.memory_space<vmem>>, vector<16x512xbf16>
    %126 = arith.extf %125 : vector<16x512xbf16> to vector<16x512xf32>
    %127 = vector.broadcast %9 : vector<1x512xf32> to vector<16x512xf32>
    %128 = arith.addf %126, %127 : vector<16x512xf32>
    %129 = arith.truncf %115 : vector<16x128xf32> to vector<16x128xbf16>
    %cst_30 = arith.constant dense<0.000000e+00> : vector<16x512xf32>
    %130 = tpu.matmul %129, %7, %cst_30 {dimension_numbers = #tpu.dot_dimension_numbers<[1], [0], [0], [1], [0, 0, 1, 1], [], []>} : vector<16x128xbf16>, vector<128x512xbf16>, vector<16x512xf32> -> vector<16x512xf32>
    %131 = arith.addf %128, %130 : vector<16x512xf32>
    %132 = vector.extract_strided_slice %131 {offsets = [0, 0], sizes = [16, 384], strides = [1, 1]} : vector<16x512xf32> to vector<16x384xf32>
    %133 = arith.negf %132 : vector<16x384xf32>
    %134 = math.exp %133 : vector<16x384xf32>
    %cst_31 = arith.constant 1.000000e+00 : f32
    %135 = vector.broadcast %cst_31 : f32 to vector<16x384xf32>
    %136 = arith.addf %135, %134 : vector<16x384xf32>
    %137 = arith.divf %135, %136 : vector<16x384xf32>
    %138 = vector.extract_strided_slice %137 {offsets = [0, 0], sizes = [16, 128], strides = [1, 1]} : vector<16x384xf32> to vector<16x128xf32>
    %139 = vector.extract_strided_slice %137 {offsets = [0, 128], sizes = [16, 128], strides = [1, 1]} : vector<16x384xf32> to vector<16x128xf32>
    %140 = vector.extract_strided_slice %137 {offsets = [0, 256], sizes = [16, 128], strides = [1, 1]} : vector<16x384xf32> to vector<16x128xf32>
    %141 = vector.extract_strided_slice %131 {offsets = [0, 384], sizes = [16, 128], strides = [1, 1]} : vector<16x512xf32> to vector<16x128xf32>
    %142 = math.tanh %141 : vector<16x128xf32>
    %143 = arith.mulf %139, %118 : vector<16x128xf32>
    %144 = arith.mulf %138, %142 : vector<16x128xf32>
    %145 = arith.addf %143, %144 : vector<16x128xf32>
    %146 = math.tanh %145 : vector<16x128xf32>
    %147 = arith.mulf %140, %146 : vector<16x128xf32>
    %148 = vector.broadcast %c3_i32 : i32 to vector<16x1xi32>
    %149 = arith.cmpi slt, %148, %0 : vector<16x1xi32>
    %150 = vector.shape_cast %149 : vector<16x1xi1> to vector<16x1xi1>
    %151 = vector.broadcast %150 : vector<16x1xi1> to vector<16x128xi1>
    %152 = arith.select %151, %147, %115 : vector<16x128xi1>, vector<16x128xf32>
    %153 = vector.shape_cast %149 : vector<16x1xi1> to vector<16x1xi1>
    %154 = vector.broadcast %153 : vector<16x1xi1> to vector<16x128xi1>
    %155 = arith.select %154, %145, %118 : vector<16x128xi1>, vector<16x128xf32>
    %156 = arith.truncf %152 : vector<16x128xf32> to vector<16x128xbf16>
    %157 = arith.index_cast %123 : i32 to index
    %c0_32 = arith.constant 0 : index
    %158 = vector.load %arg9[%157, %c0_32] : memref<128x128xbf16, #tpu.memory_space<vmem>>, vector<16x128xbf16>
    tpu.vector_store %arg9[%157, %c0_32], %156 {strides = array<i32>} : memref<128x128xbf16, #tpu.memory_space<vmem>>, vector<16x128xbf16>,
    %c4_i32 = arith.constant 4 : i32
    %c16_i32_33 = arith.constant 16 : i32
    %159 = arith.muli %c4_i32, %c16_i32_33 : i32
    %160 = tpu.assume_multiple %159, 16 : i32
    %161 = arith.index_cast %160 : i32 to index
    %c0_34 = arith.constant 0 : index
    %162 = vector.load %arg10[%161, %c0_34] : memref<128x512xbf16, #tpu.memory_space<vmem>>, vector<16x512xbf16>
    %163 = arith.extf %162 : vector<16x512xbf16> to vector<16x512xf32>
    %164 = vector.broadcast %9 : vector<1x512xf32> to vector<16x512xf32>
    %165 = arith.addf %163, %164 : vector<16x512xf32>
    %166 = arith.truncf %152 : vector<16x128xf32> to vector<16x128xbf16>
    %cst_35 = arith.constant dense<0.000000e+00> : vector<16x512xf32>
    %167 = tpu.matmul %166, %7, %cst_35 {dimension_numbers = #tpu.dot_dimension_numbers<[1], [0], [0], [1], [0, 0, 1, 1], [], []>} : vector<16x128xbf16>, vector<128x512xbf16>, vector<16x512xf32> -> vector<16x512xf32>
    %168 = arith.addf %165, %167 : vector<16x512xf32>
    %169 = vector.extract_strided_slice %168 {offsets = [0, 0], sizes = [16, 384], strides = [1, 1]} : vector<16x512xf32> to vector<16x384xf32>
    %170 = arith.negf %169 : vector<16x384xf32>
    %171 = math.exp %170 : vector<16x384xf32>
    %cst_36 = arith.constant 1.000000e+00 : f32
    %172 = vector.broadcast %cst_36 : f32 to vector<16x384xf32>
    %173 = arith.addf %172, %171 : vector<16x384xf32>
    %174 = arith.divf %172, %173 : vector<16x384xf32>
    %175 = vector.extract_strided_slice %174 {offsets = [0, 0], sizes = [16, 128], strides = [1, 1]} : vector<16x384xf32> to vector<16x128xf32>
    %176 = vector.extract_strided_slice %174 {offsets = [0, 128], sizes = [16, 128], strides = [1, 1]} : vector<16x384xf32> to vector<16x128xf32>
    %177 = vector.extract_strided_slice %174 {offsets = [0, 256], sizes = [16, 128], strides = [1, 1]} : vector<16x384xf32> to vector<16x128xf32>
    %178 = vector.extract_strided_slice %168 {offsets = [0, 384], sizes = [16, 128], strides = [1, 1]} : vector<16x512xf32> to vector<16x128xf32>
    %179 = math.tanh %178 : vector<16x128xf32>
    %180 = arith.mulf %176, %155 : vector<16x128xf32>
    %181 = arith.mulf %175, %179 : vector<16x128xf32>
    %182 = arith.addf %180, %181 : vector<16x128xf32>
    %183 = math.tanh %182 : vector<16x128xf32>
    %184 = arith.mulf %177, %183 : vector<16x128xf32>
    %185 = vector.broadcast %c4_i32 : i32 to vector<16x1xi32>
    %186 = arith.cmpi slt, %185, %0 : vector<16x1xi32>
    %187 = vector.shape_cast %186 : vector<16x1xi1> to vector<16x1xi1>
    %188 = vector.broadcast %187 : vector<16x1xi1> to vector<16x128xi1>
    %189 = arith.select %188, %184, %152 : vector<16x128xi1>, vector<16x128xf32>
    %190 = vector.shape_cast %186 : vector<16x1xi1> to vector<16x1xi1>
    %191 = vector.broadcast %190 : vector<16x1xi1> to vector<16x128xi1>
    %192 = arith.select %191, %182, %155 : vector<16x128xi1>, vector<16x128xf32>
    %193 = arith.truncf %189 : vector<16x128xf32> to vector<16x128xbf16>
    %194 = arith.index_cast %160 : i32 to index
    %c0_37 = arith.constant 0 : index
    %195 = vector.load %arg9[%194, %c0_37] : memref<128x128xbf16, #tpu.memory_space<vmem>>, vector<16x128xbf16>
    tpu.vector_store %arg9[%194, %c0_37], %193 {strides = array<i32>} : memref<128x128xbf16, #tpu.memory_space<vmem>>, vector<16x128xbf16>,
    %c5_i32 = arith.constant 5 : i32
    %c16_i32_38 = arith.constant 16 : i32
    %196 = arith.muli %c5_i32, %c16_i32_38 : i32
    %197 = tpu.assume_multiple %196, 16 : i32
    %198 = arith.index_cast %197 : i32 to index
    %c0_39 = arith.constant 0 : index
    %199 = vector.load %arg10[%198, %c0_39] : memref<128x512xbf16, #tpu.memory_space<vmem>>, vector<16x512xbf16>
    %200 = arith.extf %199 : vector<16x512xbf16> to vector<16x512xf32>
    %201 = vector.broadcast %9 : vector<1x512xf32> to vector<16x512xf32>
    %202 = arith.addf %200, %201 : vector<16x512xf32>
    %203 = arith.truncf %189 : vector<16x128xf32> to vector<16x128xbf16>
    %cst_40 = arith.constant dense<0.000000e+00> : vector<16x512xf32>
    %204 = tpu.matmul %203, %7, %cst_40 {dimension_numbers = #tpu.dot_dimension_numbers<[1], [0], [0], [1], [0, 0, 1, 1], [], []>} : vector<16x128xbf16>, vector<128x512xbf16>, vector<16x512xf32> -> vector<16x512xf32>
    %205 = arith.addf %202, %204 : vector<16x512xf32>
    %206 = vector.extract_strided_slice %205 {offsets = [0, 0], sizes = [16, 384], strides = [1, 1]} : vector<16x512xf32> to vector<16x384xf32>
    %207 = arith.negf %206 : vector<16x384xf32>
    %208 = math.exp %207 : vector<16x384xf32>
    %cst_41 = arith.constant 1.000000e+00 : f32
    %209 = vector.broadcast %cst_41 : f32 to vector<16x384xf32>
    %210 = arith.addf %209, %208 : vector<16x384xf32>
    %211 = arith.divf %209, %210 : vector<16x384xf32>
    %212 = vector.extract_strided_slice %211 {offsets = [0, 0], sizes = [16, 128], strides = [1, 1]} : vector<16x384xf32> to vector<16x128xf32>
    %213 = vector.extract_strided_slice %211 {offsets = [0, 128], sizes = [16, 128], strides = [1, 1]} : vector<16x384xf32> to vector<16x128xf32>
    %214 = vector.extract_strided_slice %211 {offsets = [0, 256], sizes = [16, 128], strides = [1, 1]} : vector<16x384xf32> to vector<16x128xf32>
    %215 = vector.extract_strided_slice %205 {offsets = [0, 384], sizes = [16, 128], strides = [1, 1]} : vector<16x512xf32> to vector<16x128xf32>
    %216 = math.tanh %215 : vector<16x128xf32>
    %217 = arith.mulf %213, %192 : vector<16x128xf32>
    %218 = arith.mulf %212, %216 : vector<16x128xf32>
    %219 = arith.addf %217, %218 : vector<16x128xf32>
    %220 = math.tanh %219 : vector<16x128xf32>
    %221 = arith.mulf %214, %220 : vector<16x128xf32>
    %222 = vector.broadcast %c5_i32 : i32 to vector<16x1xi32>
    %223 = arith.cmpi slt, %222, %0 : vector<16x1xi32>
    %224 = vector.shape_cast %223 : vector<16x1xi1> to vector<16x1xi1>
    %225 = vector.broadcast %224 : vector<16x1xi1> to vector<16x128xi1>
    %226 = arith.select %225, %221, %189 : vector<16x128xi1>, vector<16x128xf32>
    %227 = vector.shape_cast %223 : vector<16x1xi1> to vector<16x1xi1>
    %228 = vector.broadcast %227 : vector<16x1xi1> to vector<16x128xi1>
    %229 = arith.select %228, %219, %192 : vector<16x128xi1>, vector<16x128xf32>
    %230 = arith.truncf %226 : vector<16x128xf32> to vector<16x128xbf16>
    %231 = arith.index_cast %197 : i32 to index
    %c0_42 = arith.constant 0 : index
    %232 = vector.load %arg9[%231, %c0_42] : memref<128x128xbf16, #tpu.memory_space<vmem>>, vector<16x128xbf16>
    tpu.vector_store %arg9[%231, %c0_42], %230 {strides = array<i32>} : memref<128x128xbf16, #tpu.memory_space<vmem>>, vector<16x128xbf16>,
    %c6_i32 = arith.constant 6 : i32
    %c16_i32_43 = arith.constant 16 : i32
    %233 = arith.muli %c6_i32, %c16_i32_43 : i32
    %234 = tpu.assume_multiple %233, 16 : i32
    %235 = arith.index_cast %234 : i32 to index
    %c0_44 = arith.constant 0 : index
    %236 = vector.load %arg10[%235, %c0_44] : memref<128x512xbf16, #tpu.memory_space<vmem>>, vector<16x512xbf16>
    %237 = arith.extf %236 : vector<16x512xbf16> to vector<16x512xf32>
    %238 = vector.broadcast %9 : vector<1x512xf32> to vector<16x512xf32>
    %239 = arith.addf %237, %238 : vector<16x512xf32>
    %240 = arith.truncf %226 : vector<16x128xf32> to vector<16x128xbf16>
    %cst_45 = arith.constant dense<0.000000e+00> : vector<16x512xf32>
    %241 = tpu.matmul %240, %7, %cst_45 {dimension_numbers = #tpu.dot_dimension_numbers<[1], [0], [0], [1], [0, 0, 1, 1], [], []>} : vector<16x128xbf16>, vector<128x512xbf16>, vector<16x512xf32> -> vector<16x512xf32>
    %242 = arith.addf %239, %241 : vector<16x512xf32>
    %243 = vector.extract_strided_slice %242 {offsets = [0, 0], sizes = [16, 384], strides = [1, 1]} : vector<16x512xf32> to vector<16x384xf32>
    %244 = arith.negf %243 : vector<16x384xf32>
    %245 = math.exp %244 : vector<16x384xf32>
    %cst_46 = arith.constant 1.000000e+00 : f32
    %246 = vector.broadcast %cst_46 : f32 to vector<16x384xf32>
    %247 = arith.addf %246, %245 : vector<16x384xf32>
    %248 = arith.divf %246, %247 : vector<16x384xf32>
    %249 = vector.extract_strided_slice %248 {offsets = [0, 0], sizes = [16, 128], strides = [1, 1]} : vector<16x384xf32> to vector<16x128xf32>
    %250 = vector.extract_strided_slice %248 {offsets = [0, 128], sizes = [16, 128], strides = [1, 1]} : vector<16x384xf32> to vector<16x128xf32>
    %251 = vector.extract_strided_slice %248 {offsets = [0, 256], sizes = [16, 128], strides = [1, 1]} : vector<16x384xf32> to vector<16x128xf32>
    %252 = vector.extract_strided_slice %242 {offsets = [0, 384], sizes = [16, 128], strides = [1, 1]} : vector<16x512xf32> to vector<16x128xf32>
    %253 = math.tanh %252 : vector<16x128xf32>
    %254 = arith.mulf %250, %229 : vector<16x128xf32>
    %255 = arith.mulf %249, %253 : vector<16x128xf32>
    %256 = arith.addf %254, %255 : vector<16x128xf32>
    %257 = math.tanh %256 : vector<16x128xf32>
    %258 = arith.mulf %251, %257 : vector<16x128xf32>
    %259 = vector.broadcast %c6_i32 : i32 to vector<16x1xi32>
    %260 = arith.cmpi slt, %259, %0 : vector<16x1xi32>
    %261 = vector.shape_cast %260 : vector<16x1xi1> to vector<16x1xi1>
    %262 = vector.broadcast %261 : vector<16x1xi1> to vector<16x128xi1>
    %263 = arith.select %262, %258, %226 : vector<16x128xi1>, vector<16x128xf32>
    %264 = vector.shape_cast %260 : vector<16x1xi1> to vector<16x1xi1>
    %265 = vector.broadcast %264 : vector<16x1xi1> to vector<16x128xi1>
    %266 = arith.select %265, %256, %229 : vector<16x128xi1>, vector<16x128xf32>
    %267 = arith.truncf %263 : vector<16x128xf32> to vector<16x128xbf16>
    %268 = arith.index_cast %234 : i32 to index
    %c0_47 = arith.constant 0 : index
    %269 = vector.load %arg9[%268, %c0_47] : memref<128x128xbf16, #tpu.memory_space<vmem>>, vector<16x128xbf16>
    tpu.vector_store %arg9[%268, %c0_47], %267 {strides = array<i32>} : memref<128x128xbf16, #tpu.memory_space<vmem>>, vector<16x128xbf16>,
    %c7_i32 = arith.constant 7 : i32
    %c16_i32_48 = arith.constant 16 : i32
    %270 = arith.muli %c7_i32, %c16_i32_48 : i32
    %271 = tpu.assume_multiple %270, 16 : i32
    %272 = arith.index_cast %271 : i32 to index
    %c0_49 = arith.constant 0 : index
    %273 = vector.load %arg10[%272, %c0_49] : memref<128x512xbf16, #tpu.memory_space<vmem>>, vector<16x512xbf16>
    %274 = arith.extf %273 : vector<16x512xbf16> to vector<16x512xf32>
    %275 = vector.broadcast %9 : vector<1x512xf32> to vector<16x512xf32>
    %276 = arith.addf %274, %275 : vector<16x512xf32>
    %277 = arith.truncf %263 : vector<16x128xf32> to vector<16x128xbf16>
    %cst_50 = arith.constant dense<0.000000e+00> : vector<16x512xf32>
    %278 = tpu.matmul %277, %7, %cst_50 {dimension_numbers = #tpu.dot_dimension_numbers<[1], [0], [0], [1], [0, 0, 1, 1], [], []>} : vector<16x128xbf16>, vector<128x512xbf16>, vector<16x512xf32> -> vector<16x512xf32>
    %279 = arith.addf %276, %278 : vector<16x512xf32>
    %280 = vector.extract_strided_slice %279 {offsets = [0, 0], sizes = [16, 384], strides = [1, 1]} : vector<16x512xf32> to vector<16x384xf32>
    %281 = arith.negf %280 : vector<16x384xf32>
    %282 = math.exp %281 : vector<16x384xf32>
    %cst_51 = arith.constant 1.000000e+00 : f32
    %283 = vector.broadcast %cst_51 : f32 to vector<16x384xf32>
    %284 = arith.addf %283, %282 : vector<16x384xf32>
    %285 = arith.divf %283, %284 : vector<16x384xf32>
    %286 = vector.extract_strided_slice %285 {offsets = [0, 0], sizes = [16, 128], strides = [1, 1]} : vector<16x384xf32> to vector<16x128xf32>
    %287 = vector.extract_strided_slice %285 {offsets = [0, 128], sizes = [16, 128], strides = [1, 1]} : vector<16x384xf32> to vector<16x128xf32>
    %288 = vector.extract_strided_slice %285 {offsets = [0, 256], sizes = [16, 128], strides = [1, 1]} : vector<16x384xf32> to vector<16x128xf32>
    %289 = vector.extract_strided_slice %279 {offsets = [0, 384], sizes = [16, 128], strides = [1, 1]} : vector<16x512xf32> to vector<16x128xf32>
    %290 = math.tanh %289 : vector<16x128xf32>
    %291 = arith.mulf %287, %266 : vector<16x128xf32>
    %292 = arith.mulf %286, %290 : vector<16x128xf32>
    %293 = arith.addf %291, %292 : vector<16x128xf32>
    %294 = math.tanh %293 : vector<16x128xf32>
    %295 = arith.mulf %288, %294 : vector<16x128xf32>
    %296 = vector.broadcast %c7_i32 : i32 to vector<16x1xi32>
    %297 = arith.cmpi slt, %296, %0 : vector<16x1xi32>
    %298 = vector.shape_cast %297 : vector<16x1xi1> to vector<16x1xi1>
    %299 = vector.broadcast %298 : vector<16x1xi1> to vector<16x128xi1>
    %300 = arith.select %299, %295, %263 : vector<16x128xi1>, vector<16x128xf32>
    %301 = vector.shape_cast %297 : vector<16x1xi1> to vector<16x1xi1>
    %302 = vector.broadcast %301 : vector<16x1xi1> to vector<16x128xi1>
    %303 = arith.select %302, %293, %266 : vector<16x128xi1>, vector<16x128xf32>
    %304 = arith.truncf %300 : vector<16x128xf32> to vector<16x128xbf16>
    %305 = arith.index_cast %271 : i32 to index
    %c0_52 = arith.constant 0 : index
    %306 = vector.load %arg9[%305, %c0_52] : memref<128x128xbf16, #tpu.memory_space<vmem>>, vector<16x128xbf16>
    tpu.vector_store %arg9[%305, %c0_52], %304 {strides = array<i32>} : memref<128x128xbf16, #tpu.memory_space<vmem>>, vector<16x128xbf16>,
    %c8_i32 = arith.constant 8 : i32
    %c0_53 = arith.constant 0 : index
    %c0_54 = arith.constant 0 : index
    %307 = vector.load %arg9[%c0_53, %c0_54] : memref<128x128xbf16, #tpu.memory_space<vmem>>, vector<128x128xbf16>
    %c0_55 = arith.constant 0 : index
    %c0_56 = arith.constant 0 : index
    %c0_57 = arith.constant 0 : index
    %308 = vector.load %arg3[%c0_55, %c0_56, %c0_57] : memref<1x128x512xbf16, #tpu.memory_space<vmem>>, vector<1x128x512xbf16>
    %309 = vector.shape_cast %308 : vector<1x128x512xbf16> to vector<128x512xbf16>
    %cst_58 = arith.constant dense<0.000000e+00> : vector<128x512xf32>
    %310 = tpu.matmul %307, %309, %cst_58 {dimension_numbers = #tpu.dot_dimension_numbers<[1], [0], [0], [1], [0, 0, 1, 1], [], []>} : vector<128x128xbf16>, vector<128x512xbf16>, vector<128x512xf32> -> vector<128x512xf32>
    %311 = arith.truncf %310 : vector<128x512xf32> to vector<128x512xbf16>
    %c0_59 = arith.constant 0 : index
    %c0_60 = arith.constant 0 : index
    %312 = vector.load %arg10[%c0_59, %c0_60] : memref<128x512xbf16, #tpu.memory_space<vmem>>, vector<128x512xbf16>
    tpu.vector_store %arg10[%c0_59, %c0_60], %311 {strides = array<i32>} : memref<128x512xbf16, #tpu.memory_space<vmem>>, vector<128x512xbf16>,
    %c1 = arith.constant 1 : index
    %c0_61 = arith.constant 0 : index
    %c0_62 = arith.constant 0 : index
    %313 = vector.load %arg4[%c1, %c0_61, %c0_62] : memref<2x128x512xbf16, #tpu.memory_space<vmem>>, vector<1x128x512xbf16>
    %314 = vector.shape_cast %313 : vector<1x128x512xbf16> to vector<128x512xbf16>
    %c1_63 = arith.constant 1 : index
    %c0_64 = arith.constant 0 : index
    %c0_65 = arith.constant 0 : index
    %315 = vector.load %arg5[%c1_63, %c0_64, %c0_65] : memref<2x1x512xf32, #tpu.memory_space<vmem>>, vector<1x1x512xf32>
    %316 = vector.shape_cast %315 : vector<1x1x512xf32> to vector<1x512xf32>
    %cst_66 = arith.constant 0.000000e+00 : f32
    %317 = vector.broadcast %cst_66 : f32 to vector<16x128xf32>
    %c0_i32_67 = arith.constant 0 : i32
    %c16_i32_68 = arith.constant 16 : i32
    %318 = arith.muli %c0_i32_67, %c16_i32_68 : i32
    %319 = tpu.assume_multiple %318, 16 : i32
    %320 = arith.index_cast %319 : i32 to index
    %c0_69 = arith.constant 0 : index
    %321 = vector.load %arg10[%320, %c0_69] : memref<128x512xbf16, #tpu.memory_space<vmem>>, vector<16x512xbf16>
    %322 = arith.extf %321 : vector<16x512xbf16> to vector<16x512xf32>
    %323 = vector.broadcast %316 : vector<1x512xf32> to vector<16x512xf32>
    %324 = arith.addf %322, %323 : vector<16x512xf32>
    %325 = arith.truncf %317 : vector<16x128xf32> to vector<16x128xbf16>
    %cst_70 = arith.constant dense<0.000000e+00> : vector<16x512xf32>
    %326 = tpu.matmul %325, %314, %cst_70 {dimension_numbers = #tpu.dot_dimension_numbers<[1], [0], [0], [1], [0, 0, 1, 1], [], []>} : vector<16x128xbf16>, vector<128x512xbf16>, vector<16x512xf32> -> vector<16x512xf32>
    %327 = arith.addf %324, %326 : vector<16x512xf32>
    %328 = vector.extract_strided_slice %327 {offsets = [0, 0], sizes = [16, 384], strides = [1, 1]} : vector<16x512xf32> to vector<16x384xf32>
    %329 = arith.negf %328 : vector<16x384xf32>
    %330 = math.exp %329 : vector<16x384xf32>
    %cst_71 = arith.constant 1.000000e+00 : f32
    %331 = vector.broadcast %cst_71 : f32 to vector<16x384xf32>
    %332 = arith.addf %331, %330 : vector<16x384xf32>
    %333 = arith.divf %331, %332 : vector<16x384xf32>
    %334 = vector.extract_strided_slice %333 {offsets = [0, 0], sizes = [16, 128], strides = [1, 1]} : vector<16x384xf32> to vector<16x128xf32>
    %335 = vector.extract_strided_slice %333 {offsets = [0, 128], sizes = [16, 128], strides = [1, 1]} : vector<16x384xf32> to vector<16x128xf32>
    %336 = vector.extract_strided_slice %333 {offsets = [0, 256], sizes = [16, 128], strides = [1, 1]} : vector<16x384xf32> to vector<16x128xf32>
    %337 = vector.extract_strided_slice %327 {offsets = [0, 384], sizes = [16, 128], strides = [1, 1]} : vector<16x512xf32> to vector<16x128xf32>
    %338 = math.tanh %337 : vector<16x128xf32>
    %339 = arith.mulf %335, %317 : vector<16x128xf32>
    %340 = arith.mulf %334, %338 : vector<16x128xf32>
    %341 = arith.addf %339, %340 : vector<16x128xf32>
    %342 = math.tanh %341 : vector<16x128xf32>
    %343 = arith.mulf %336, %342 : vector<16x128xf32>
    %344 = vector.broadcast %c0_i32_67 : i32 to vector<16x1xi32>
    %345 = arith.cmpi slt, %344, %0 : vector<16x1xi32>
    %346 = vector.shape_cast %345 : vector<16x1xi1> to vector<16x1xi1>
    %347 = vector.broadcast %346 : vector<16x1xi1> to vector<16x128xi1>
    %348 = arith.select %347, %343, %317 : vector<16x128xi1>, vector<16x128xf32>
    %349 = vector.shape_cast %345 : vector<16x1xi1> to vector<16x1xi1>
    %350 = vector.broadcast %349 : vector<16x1xi1> to vector<16x128xi1>
    %351 = arith.select %350, %341, %317 : vector<16x128xi1>, vector<16x128xf32>
    %c1_i32_72 = arith.constant 1 : i32
    %c16_i32_73 = arith.constant 16 : i32
    %352 = arith.muli %c1_i32_72, %c16_i32_73 : i32
    %353 = tpu.assume_multiple %352, 16 : i32
    %354 = arith.index_cast %353 : i32 to index
    %c0_74 = arith.constant 0 : index
    %355 = vector.load %arg10[%354, %c0_74] : memref<128x512xbf16, #tpu.memory_space<vmem>>, vector<16x512xbf16>
    %356 = arith.extf %355 : vector<16x512xbf16> to vector<16x512xf32>
    %357 = vector.broadcast %316 : vector<1x512xf32> to vector<16x512xf32>
    %358 = arith.addf %356, %357 : vector<16x512xf32>
    %359 = arith.truncf %348 : vector<16x128xf32> to vector<16x128xbf16>
    %cst_75 = arith.constant dense<0.000000e+00> : vector<16x512xf32>
    %360 = tpu.matmul %359, %314, %cst_75 {dimension_numbers = #tpu.dot_dimension_numbers<[1], [0], [0], [1], [0, 0, 1, 1], [], []>} : vector<16x128xbf16>, vector<128x512xbf16>, vector<16x512xf32> -> vector<16x512xf32>
    %361 = arith.addf %358, %360 : vector<16x512xf32>
    %362 = vector.extract_strided_slice %361 {offsets = [0, 0], sizes = [16, 384], strides = [1, 1]} : vector<16x512xf32> to vector<16x384xf32>
    %363 = arith.negf %362 : vector<16x384xf32>
    %364 = math.exp %363 : vector<16x384xf32>
    %cst_76 = arith.constant 1.000000e+00 : f32
    %365 = vector.broadcast %cst_76 : f32 to vector<16x384xf32>
    %366 = arith.addf %365, %364 : vector<16x384xf32>
    %367 = arith.divf %365, %366 : vector<16x384xf32>
    %368 = vector.extract_strided_slice %367 {offsets = [0, 0], sizes = [16, 128], strides = [1, 1]} : vector<16x384xf32> to vector<16x128xf32>
    %369 = vector.extract_strided_slice %367 {offsets = [0, 128], sizes = [16, 128], strides = [1, 1]} : vector<16x384xf32> to vector<16x128xf32>
    %370 = vector.extract_strided_slice %367 {offsets = [0, 256], sizes = [16, 128], strides = [1, 1]} : vector<16x384xf32> to vector<16x128xf32>
    %371 = vector.extract_strided_slice %361 {offsets = [0, 384], sizes = [16, 128], strides = [1, 1]} : vector<16x512xf32> to vector<16x128xf32>
    %372 = math.tanh %371 : vector<16x128xf32>
    %373 = arith.mulf %369, %351 : vector<16x128xf32>
    %374 = arith.mulf %368, %372 : vector<16x128xf32>
    %375 = arith.addf %373, %374 : vector<16x128xf32>
    %376 = math.tanh %375 : vector<16x128xf32>
    %377 = arith.mulf %370, %376 : vector<16x128xf32>
    %378 = vector.broadcast %c1_i32_72 : i32 to vector<16x1xi32>
    %379 = arith.cmpi slt, %378, %0 : vector<16x1xi32>
    %380 = vector.shape_cast %379 : vector<16x1xi1> to vector<16x1xi1>
    %381 = vector.broadcast %380 : vector<16x1xi1> to vector<16x128xi1>
    %382 = arith.select %381, %377, %348 : vector<16x128xi1>, vector<16x128xf32>
    %383 = vector.shape_cast %379 : vector<16x1xi1> to vector<16x1xi1>
    %384 = vector.broadcast %383 : vector<16x1xi1> to vector<16x128xi1>
    %385 = arith.select %384, %375, %351 : vector<16x128xi1>, vector<16x128xf32>
    %c2_i32_77 = arith.constant 2 : i32
    %c16_i32_78 = arith.constant 16 : i32
    %386 = arith.muli %c2_i32_77, %c16_i32_78 : i32
    %387 = tpu.assume_multiple %386, 16 : i32
    %388 = arith.index_cast %387 : i32 to index
    %c0_79 = arith.constant 0 : index
    %389 = vector.load %arg10[%388, %c0_79] : memref<128x512xbf16, #tpu.memory_space<vmem>>, vector<16x512xbf16>
    %390 = arith.extf %389 : vector<16x512xbf16> to vector<16x512xf32>
    %391 = vector.broadcast %316 : vector<1x512xf32> to vector<16x512xf32>
    %392 = arith.addf %390, %391 : vector<16x512xf32>
    %393 = arith.truncf %382 : vector<16x128xf32> to vector<16x128xbf16>
    %cst_80 = arith.constant dense<0.000000e+00> : vector<16x512xf32>
    %394 = tpu.matmul %393, %314, %cst_80 {dimension_numbers = #tpu.dot_dimension_numbers<[1], [0], [0], [1], [0, 0, 1, 1], [], []>} : vector<16x128xbf16>, vector<128x512xbf16>, vector<16x512xf32> -> vector<16x512xf32>
    %395 = arith.addf %392, %394 : vector<16x512xf32>
    %396 = vector.extract_strided_slice %395 {offsets = [0, 0], sizes = [16, 384], strides = [1, 1]} : vector<16x512xf32> to vector<16x384xf32>
    %397 = arith.negf %396 : vector<16x384xf32>
    %398 = math.exp %397 : vector<16x384xf32>
    %cst_81 = arith.constant 1.000000e+00 : f32
    %399 = vector.broadcast %cst_81 : f32 to vector<16x384xf32>
    %400 = arith.addf %399, %398 : vector<16x384xf32>
    %401 = arith.divf %399, %400 : vector<16x384xf32>
    %402 = vector.extract_strided_slice %401 {offsets = [0, 0], sizes = [16, 128], strides = [1, 1]} : vector<16x384xf32> to vector<16x128xf32>
    %403 = vector.extract_strided_slice %401 {offsets = [0, 128], sizes = [16, 128], strides = [1, 1]} : vector<16x384xf32> to vector<16x128xf32>
    %404 = vector.extract_strided_slice %401 {offsets = [0, 256], sizes = [16, 128], strides = [1, 1]} : vector<16x384xf32> to vector<16x128xf32>
    %405 = vector.extract_strided_slice %395 {offsets = [0, 384], sizes = [16, 128], strides = [1, 1]} : vector<16x512xf32> to vector<16x128xf32>
    %406 = math.tanh %405 : vector<16x128xf32>
    %407 = arith.mulf %403, %385 : vector<16x128xf32>
    %408 = arith.mulf %402, %406 : vector<16x128xf32>
    %409 = arith.addf %407, %408 : vector<16x128xf32>
    %410 = math.tanh %409 : vector<16x128xf32>
    %411 = arith.mulf %404, %410 : vector<16x128xf32>
    %412 = vector.broadcast %c2_i32_77 : i32 to vector<16x1xi32>
    %413 = arith.cmpi slt, %412, %0 : vector<16x1xi32>
    %414 = vector.shape_cast %413 : vector<16x1xi1> to vector<16x1xi1>
    %415 = vector.broadcast %414 : vector<16x1xi1> to vector<16x128xi1>
    %416 = arith.select %415, %411, %382 : vector<16x128xi1>, vector<16x128xf32>
    %417 = vector.shape_cast %413 : vector<16x1xi1> to vector<16x1xi1>
    %418 = vector.broadcast %417 : vector<16x1xi1> to vector<16x128xi1>
    %419 = arith.select %418, %409, %385 : vector<16x128xi1>, vector<16x128xf32>
    %c3_i32_82 = arith.constant 3 : i32
    %c16_i32_83 = arith.constant 16 : i32
    %420 = arith.muli %c3_i32_82, %c16_i32_83 : i32
    %421 = tpu.assume_multiple %420, 16 : i32
    %422 = arith.index_cast %421 : i32 to index
    %c0_84 = arith.constant 0 : index
    %423 = vector.load %arg10[%422, %c0_84] : memref<128x512xbf16, #tpu.memory_space<vmem>>, vector<16x512xbf16>
    %424 = arith.extf %423 : vector<16x512xbf16> to vector<16x512xf32>
    %425 = vector.broadcast %316 : vector<1x512xf32> to vector<16x512xf32>
    %426 = arith.addf %424, %425 : vector<16x512xf32>
    %427 = arith.truncf %416 : vector<16x128xf32> to vector<16x128xbf16>
    %cst_85 = arith.constant dense<0.000000e+00> : vector<16x512xf32>
    %428 = tpu.matmul %427, %314, %cst_85 {dimension_numbers = #tpu.dot_dimension_numbers<[1], [0], [0], [1], [0, 0, 1, 1], [], []>} : vector<16x128xbf16>, vector<128x512xbf16>, vector<16x512xf32> -> vector<16x512xf32>
    %429 = arith.addf %426, %428 : vector<16x512xf32>
    %430 = vector.extract_strided_slice %429 {offsets = [0, 0], sizes = [16, 384], strides = [1, 1]} : vector<16x512xf32> to vector<16x384xf32>
    %431 = arith.negf %430 : vector<16x384xf32>
    %432 = math.exp %431 : vector<16x384xf32>
    %cst_86 = arith.constant 1.000000e+00 : f32
    %433 = vector.broadcast %cst_86 : f32 to vector<16x384xf32>
    %434 = arith.addf %433, %432 : vector<16x384xf32>
    %435 = arith.divf %433, %434 : vector<16x384xf32>
    %436 = vector.extract_strided_slice %435 {offsets = [0, 0], sizes = [16, 128], strides = [1, 1]} : vector<16x384xf32> to vector<16x128xf32>
    %437 = vector.extract_strided_slice %435 {offsets = [0, 128], sizes = [16, 128], strides = [1, 1]} : vector<16x384xf32> to vector<16x128xf32>
    %438 = vector.extract_strided_slice %435 {offsets = [0, 256], sizes = [16, 128], strides = [1, 1]} : vector<16x384xf32> to vector<16x128xf32>
    %439 = vector.extract_strided_slice %429 {offsets = [0, 384], sizes = [16, 128], strides = [1, 1]} : vector<16x512xf32> to vector<16x128xf32>
    %440 = math.tanh %439 : vector<16x128xf32>
    %441 = arith.mulf %437, %419 : vector<16x128xf32>
    %442 = arith.mulf %436, %440 : vector<16x128xf32>
    %443 = arith.addf %441, %442 : vector<16x128xf32>
    %444 = math.tanh %443 : vector<16x128xf32>
    %445 = arith.mulf %438, %444 : vector<16x128xf32>
    %446 = vector.broadcast %c3_i32_82 : i32 to vector<16x1xi32>
    %447 = arith.cmpi slt, %446, %0 : vector<16x1xi32>
    %448 = vector.shape_cast %447 : vector<16x1xi1> to vector<16x1xi1>
    %449 = vector.broadcast %448 : vector<16x1xi1> to vector<16x128xi1>
    %450 = arith.select %449, %445, %416 : vector<16x128xi1>, vector<16x128xf32>
    %451 = vector.shape_cast %447 : vector<16x1xi1> to vector<16x1xi1>
    %452 = vector.broadcast %451 : vector<16x1xi1> to vector<16x128xi1>
    %453 = arith.select %452, %443, %419 : vector<16x128xi1>, vector<16x128xf32>
    %c4_i32_87 = arith.constant 4 : i32
    %c16_i32_88 = arith.constant 16 : i32
    %454 = arith.muli %c4_i32_87, %c16_i32_88 : i32
    %455 = tpu.assume_multiple %454, 16 : i32
    %456 = arith.index_cast %455 : i32 to index
    %c0_89 = arith.constant 0 : index
    %457 = vector.load %arg10[%456, %c0_89] : memref<128x512xbf16, #tpu.memory_space<vmem>>, vector<16x512xbf16>
    %458 = arith.extf %457 : vector<16x512xbf16> to vector<16x512xf32>
    %459 = vector.broadcast %316 : vector<1x512xf32> to vector<16x512xf32>
    %460 = arith.addf %458, %459 : vector<16x512xf32>
    %461 = arith.truncf %450 : vector<16x128xf32> to vector<16x128xbf16>
    %cst_90 = arith.constant dense<0.000000e+00> : vector<16x512xf32>
    %462 = tpu.matmul %461, %314, %cst_90 {dimension_numbers = #tpu.dot_dimension_numbers<[1], [0], [0], [1], [0, 0, 1, 1], [], []>} : vector<16x128xbf16>, vector<128x512xbf16>, vector<16x512xf32> -> vector<16x512xf32>
    %463 = arith.addf %460, %462 : vector<16x512xf32>
    %464 = vector.extract_strided_slice %463 {offsets = [0, 0], sizes = [16, 384], strides = [1, 1]} : vector<16x512xf32> to vector<16x384xf32>
    %465 = arith.negf %464 : vector<16x384xf32>
    %466 = math.exp %465 : vector<16x384xf32>
    %cst_91 = arith.constant 1.000000e+00 : f32
    %467 = vector.broadcast %cst_91 : f32 to vector<16x384xf32>
    %468 = arith.addf %467, %466 : vector<16x384xf32>
    %469 = arith.divf %467, %468 : vector<16x384xf32>
    %470 = vector.extract_strided_slice %469 {offsets = [0, 0], sizes = [16, 128], strides = [1, 1]} : vector<16x384xf32> to vector<16x128xf32>
    %471 = vector.extract_strided_slice %469 {offsets = [0, 128], sizes = [16, 128], strides = [1, 1]} : vector<16x384xf32> to vector<16x128xf32>
    %472 = vector.extract_strided_slice %469 {offsets = [0, 256], sizes = [16, 128], strides = [1, 1]} : vector<16x384xf32> to vector<16x128xf32>
    %473 = vector.extract_strided_slice %463 {offsets = [0, 384], sizes = [16, 128], strides = [1, 1]} : vector<16x512xf32> to vector<16x128xf32>
    %474 = math.tanh %473 : vector<16x128xf32>
    %475 = arith.mulf %471, %453 : vector<16x128xf32>
    %476 = arith.mulf %470, %474 : vector<16x128xf32>
    %477 = arith.addf %475, %476 : vector<16x128xf32>
    %478 = math.tanh %477 : vector<16x128xf32>
    %479 = arith.mulf %472, %478 : vector<16x128xf32>
    %480 = vector.broadcast %c4_i32_87 : i32 to vector<16x1xi32>
    %481 = arith.cmpi slt, %480, %0 : vector<16x1xi32>
    %482 = vector.shape_cast %481 : vector<16x1xi1> to vector<16x1xi1>
    %483 = vector.broadcast %482 : vector<16x1xi1> to vector<16x128xi1>
    %484 = arith.select %483, %479, %450 : vector<16x128xi1>, vector<16x128xf32>
    %485 = vector.shape_cast %481 : vector<16x1xi1> to vector<16x1xi1>
    %486 = vector.broadcast %485 : vector<16x1xi1> to vector<16x128xi1>
    %487 = arith.select %486, %477, %453 : vector<16x128xi1>, vector<16x128xf32>
    %c5_i32_92 = arith.constant 5 : i32
    %c16_i32_93 = arith.constant 16 : i32
    %488 = arith.muli %c5_i32_92, %c16_i32_93 : i32
    %489 = tpu.assume_multiple %488, 16 : i32
    %490 = arith.index_cast %489 : i32 to index
    %c0_94 = arith.constant 0 : index
    %491 = vector.load %arg10[%490, %c0_94] : memref<128x512xbf16, #tpu.memory_space<vmem>>, vector<16x512xbf16>
    %492 = arith.extf %491 : vector<16x512xbf16> to vector<16x512xf32>
    %493 = vector.broadcast %316 : vector<1x512xf32> to vector<16x512xf32>
    %494 = arith.addf %492, %493 : vector<16x512xf32>
    %495 = arith.truncf %484 : vector<16x128xf32> to vector<16x128xbf16>
    %cst_95 = arith.constant dense<0.000000e+00> : vector<16x512xf32>
    %496 = tpu.matmul %495, %314, %cst_95 {dimension_numbers = #tpu.dot_dimension_numbers<[1], [0], [0], [1], [0, 0, 1, 1], [], []>} : vector<16x128xbf16>, vector<128x512xbf16>, vector<16x512xf32> -> vector<16x512xf32>
    %497 = arith.addf %494, %496 : vector<16x512xf32>
    %498 = vector.extract_strided_slice %497 {offsets = [0, 0], sizes = [16, 384], strides = [1, 1]} : vector<16x512xf32> to vector<16x384xf32>
    %499 = arith.negf %498 : vector<16x384xf32>
    %500 = math.exp %499 : vector<16x384xf32>
    %cst_96 = arith.constant 1.000000e+00 : f32
    %501 = vector.broadcast %cst_96 : f32 to vector<16x384xf32>
    %502 = arith.addf %501, %500 : vector<16x384xf32>
    %503 = arith.divf %501, %502 : vector<16x384xf32>
    %504 = vector.extract_strided_slice %503 {offsets = [0, 0], sizes = [16, 128], strides = [1, 1]} : vector<16x384xf32> to vector<16x128xf32>
    %505 = vector.extract_strided_slice %503 {offsets = [0, 128], sizes = [16, 128], strides = [1, 1]} : vector<16x384xf32> to vector<16x128xf32>
    %506 = vector.extract_strided_slice %503 {offsets = [0, 256], sizes = [16, 128], strides = [1, 1]} : vector<16x384xf32> to vector<16x128xf32>
    %507 = vector.extract_strided_slice %497 {offsets = [0, 384], sizes = [16, 128], strides = [1, 1]} : vector<16x512xf32> to vector<16x128xf32>
    %508 = math.tanh %507 : vector<16x128xf32>
    %509 = arith.mulf %505, %487 : vector<16x128xf32>
    %510 = arith.mulf %504, %508 : vector<16x128xf32>
    %511 = arith.addf %509, %510 : vector<16x128xf32>
    %512 = math.tanh %511 : vector<16x128xf32>
    %513 = arith.mulf %506, %512 : vector<16x128xf32>
    %514 = vector.broadcast %c5_i32_92 : i32 to vector<16x1xi32>
    %515 = arith.cmpi slt, %514, %0 : vector<16x1xi32>
    %516 = vector.shape_cast %515 : vector<16x1xi1> to vector<16x1xi1>
    %517 = vector.broadcast %516 : vector<16x1xi1> to vector<16x128xi1>
    %518 = arith.select %517, %513, %484 : vector<16x128xi1>, vector<16x128xf32>
    %519 = vector.shape_cast %515 : vector<16x1xi1> to vector<16x1xi1>
    %520 = vector.broadcast %519 : vector<16x1xi1> to vector<16x128xi1>
    %521 = arith.select %520, %511, %487 : vector<16x128xi1>, vector<16x128xf32>
    %c6_i32_97 = arith.constant 6 : i32
    %c16_i32_98 = arith.constant 16 : i32
    %522 = arith.muli %c6_i32_97, %c16_i32_98 : i32
    %523 = tpu.assume_multiple %522, 16 : i32
    %524 = arith.index_cast %523 : i32 to index
    %c0_99 = arith.constant 0 : index
    %525 = vector.load %arg10[%524, %c0_99] : memref<128x512xbf16, #tpu.memory_space<vmem>>, vector<16x512xbf16>
    %526 = arith.extf %525 : vector<16x512xbf16> to vector<16x512xf32>
    %527 = vector.broadcast %316 : vector<1x512xf32> to vector<16x512xf32>
    %528 = arith.addf %526, %527 : vector<16x512xf32>
    %529 = arith.truncf %518 : vector<16x128xf32> to vector<16x128xbf16>
    %cst_100 = arith.constant dense<0.000000e+00> : vector<16x512xf32>
    %530 = tpu.matmul %529, %314, %cst_100 {dimension_numbers = #tpu.dot_dimension_numbers<[1], [0], [0], [1], [0, 0, 1, 1], [], []>} : vector<16x128xbf16>, vector<128x512xbf16>, vector<16x512xf32> -> vector<16x512xf32>
    %531 = arith.addf %528, %530 : vector<16x512xf32>
    %532 = vector.extract_strided_slice %531 {offsets = [0, 0], sizes = [16, 384], strides = [1, 1]} : vector<16x512xf32> to vector<16x384xf32>
    %533 = arith.negf %532 : vector<16x384xf32>
    %534 = math.exp %533 : vector<16x384xf32>
    %cst_101 = arith.constant 1.000000e+00 : f32
    %535 = vector.broadcast %cst_101 : f32 to vector<16x384xf32>
    %536 = arith.addf %535, %534 : vector<16x384xf32>
    %537 = arith.divf %535, %536 : vector<16x384xf32>
    %538 = vector.extract_strided_slice %537 {offsets = [0, 0], sizes = [16, 128], strides = [1, 1]} : vector<16x384xf32> to vector<16x128xf32>
    %539 = vector.extract_strided_slice %537 {offsets = [0, 128], sizes = [16, 128], strides = [1, 1]} : vector<16x384xf32> to vector<16x128xf32>
    %540 = vector.extract_strided_slice %537 {offsets = [0, 256], sizes = [16, 128], strides = [1, 1]} : vector<16x384xf32> to vector<16x128xf32>
    %541 = vector.extract_strided_slice %531 {offsets = [0, 384], sizes = [16, 128], strides = [1, 1]} : vector<16x512xf32> to vector<16x128xf32>
    %542 = math.tanh %541 : vector<16x128xf32>
    %543 = arith.mulf %539, %521 : vector<16x128xf32>
    %544 = arith.mulf %538, %542 : vector<16x128xf32>
    %545 = arith.addf %543, %544 : vector<16x128xf32>
    %546 = math.tanh %545 : vector<16x128xf32>
    %547 = arith.mulf %540, %546 : vector<16x128xf32>
    %548 = vector.broadcast %c6_i32_97 : i32 to vector<16x1xi32>
    %549 = arith.cmpi slt, %548, %0 : vector<16x1xi32>
    %550 = vector.shape_cast %549 : vector<16x1xi1> to vector<16x1xi1>
    %551 = vector.broadcast %550 : vector<16x1xi1> to vector<16x128xi1>
    %552 = arith.select %551, %547, %518 : vector<16x128xi1>, vector<16x128xf32>
    %553 = vector.shape_cast %549 : vector<16x1xi1> to vector<16x1xi1>
    %554 = vector.broadcast %553 : vector<16x1xi1> to vector<16x128xi1>
    %555 = arith.select %554, %545, %521 : vector<16x128xi1>, vector<16x128xf32>
    %c7_i32_102 = arith.constant 7 : i32
    %c16_i32_103 = arith.constant 16 : i32
    %556 = arith.muli %c7_i32_102, %c16_i32_103 : i32
    %557 = tpu.assume_multiple %556, 16 : i32
    %558 = arith.index_cast %557 : i32 to index
    %c0_104 = arith.constant 0 : index
    %559 = vector.load %arg10[%558, %c0_104] : memref<128x512xbf16, #tpu.memory_space<vmem>>, vector<16x512xbf16>
    %560 = arith.extf %559 : vector<16x512xbf16> to vector<16x512xf32>
    %561 = vector.broadcast %316 : vector<1x512xf32> to vector<16x512xf32>
    %562 = arith.addf %560, %561 : vector<16x512xf32>
    %563 = arith.truncf %552 : vector<16x128xf32> to vector<16x128xbf16>
    %cst_105 = arith.constant dense<0.000000e+00> : vector<16x512xf32>
    %564 = tpu.matmul %563, %314, %cst_105 {dimension_numbers = #tpu.dot_dimension_numbers<[1], [0], [0], [1], [0, 0, 1, 1], [], []>} : vector<16x128xbf16>, vector<128x512xbf16>, vector<16x512xf32> -> vector<16x512xf32>
    %565 = arith.addf %562, %564 : vector<16x512xf32>
    %566 = vector.extract_strided_slice %565 {offsets = [0, 0], sizes = [16, 384], strides = [1, 1]} : vector<16x512xf32> to vector<16x384xf32>
    %567 = arith.negf %566 : vector<16x384xf32>
    %568 = math.exp %567 : vector<16x384xf32>
    %cst_106 = arith.constant 1.000000e+00 : f32
    %569 = vector.broadcast %cst_106 : f32 to vector<16x384xf32>
    %570 = arith.addf %569, %568 : vector<16x384xf32>
    %571 = arith.divf %569, %570 : vector<16x384xf32>
    %572 = vector.extract_strided_slice %571 {offsets = [0, 0], sizes = [16, 128], strides = [1, 1]} : vector<16x384xf32> to vector<16x128xf32>
    %573 = vector.extract_strided_slice %571 {offsets = [0, 128], sizes = [16, 128], strides = [1, 1]} : vector<16x384xf32> to vector<16x128xf32>
    %574 = vector.extract_strided_slice %571 {offsets = [0, 256], sizes = [16, 128], strides = [1, 1]} : vector<16x384xf32> to vector<16x128xf32>
    %575 = vector.extract_strided_slice %565 {offsets = [0, 384], sizes = [16, 128], strides = [1, 1]} : vector<16x512xf32> to vector<16x128xf32>
    %576 = math.tanh %575 : vector<16x128xf32>
    %577 = arith.mulf %573, %555 : vector<16x128xf32>
    %578 = arith.mulf %572, %576 : vector<16x128xf32>
    %579 = arith.addf %577, %578 : vector<16x128xf32>
    %580 = math.tanh %579 : vector<16x128xf32>
    %581 = arith.mulf %574, %580 : vector<16x128xf32>
    %582 = vector.broadcast %c7_i32_102 : i32 to vector<16x1xi32>
    %583 = arith.cmpi slt, %582, %0 : vector<16x1xi32>
    %584 = vector.shape_cast %583 : vector<16x1xi1> to vector<16x1xi1>
    %585 = vector.broadcast %584 : vector<16x1xi1> to vector<16x128xi1>
    %586 = arith.select %585, %581, %552 : vector<16x128xi1>, vector<16x128xf32>
    %587 = vector.shape_cast %583 : vector<16x1xi1> to vector<16x1xi1>
    %588 = vector.broadcast %587 : vector<16x1xi1> to vector<16x128xi1>
    %589 = arith.select %588, %579, %555 : vector<16x128xi1>, vector<16x128xf32>
    %c8_i32_107 = arith.constant 8 : i32
    %590 = arith.truncf %586 : vector<16x128xf32> to vector<16x128xbf16>
    %c0_108 = arith.constant 0 : index
    %c0_109 = arith.constant 0 : index
    %591 = vector.load %arg6[%c0_108, %c0_109] : memref<128x128xbf16, #tpu.memory_space<vmem>>, vector<128x128xbf16>
    %cst_110 = arith.constant dense<0.000000e+00> : vector<16x128xf32>
    %592 = tpu.matmul %590, %591, %cst_110 {dimension_numbers = #tpu.dot_dimension_numbers<[1], [0], [0], [1], [0, 0, 1, 1], [], []>} : vector<16x128xbf16>, vector<128x128xbf16>, vector<16x128xf32> -> vector<16x128xf32>
    %c0_111 = arith.constant 0 : index
    %c0_112 = arith.constant 0 : index
    %593 = vector.load %arg7[%c0_111, %c0_112] : memref<1x128xf32, #tpu.memory_space<vmem>>, vector<1x128xf32>
    %594 = vector.broadcast %593 : vector<1x128xf32> to vector<16x128xf32>
    %595 = arith.addf %592, %594 : vector<16x128xf32>
    %c0_113 = arith.constant 0 : index
    %c0_114 = arith.constant 0 : index
    %596 = vector.load %arg8[%c0_113, %c0_114] : memref<16x128xf32, #tpu.memory_space<vmem>>, vector<16x128xf32>
    tpu.vector_store %arg8[%c0_113, %c0_114], %595 {strides = array<i32>} : memref<16x128xf32, #tpu.memory_space<vmem>>, vector<16x128xf32>,
    return
  }
}

</mosaic_0001>

<llo_original>
// kernel: lstm_classifier_forward.1
$region0: #{lstm_classifier_forward.1}
  #allocation0 [shape = 'u32[]', space=smem, size = 0x4, offset = 0x4, fixed_abs, tag = 'smem constant byte address 0x4 - core index']
  #allocation1 [shape = 'u32[144,128]{1,0:T(1,128)}', space=vmem, size = 0x12000, scoped, tag = 'internal scratch']
  #allocation2 [shape = 'bf16[128,128]{1,0:T(16,128)(2,1)}', space=vmem, size = 0x8000, scoped, tag = 'scratch operand']
  #allocation3 [shape = 'bf16[128,512]{1,0:T(16,128)(2,1)}', space=vmem, size = 0x20000, scoped, tag = 'scratch operand']
  %s0 = inlined_call_operand.vmem [shape: bf16[128,16], index: 0, kind: input, shape index: {}]
  %s1 = inlined_call_operand.vmem [shape: s32[16,1], index: 1, kind: input, shape index: {}]
  %s2 = inlined_call_operand.vmem [shape: bf16[16,512], index: 2, kind: input, shape index: {}]
  %s3 = inlined_call_operand.vmem [shape: bf16[1,128,512], index: 3, kind: input, shape index: {}]
  %s4 = inlined_call_operand.vmem [shape: bf16[2,128,512], index: 4, kind: input, shape index: {}]
  %s5 = inlined_call_operand.vmem [shape: f32[2,1,512], index: 5, kind: input, shape index: {}]
  %s6 = inlined_call_operand.vmem [shape: bf16[128,128], index: 6, kind: input, shape index: {}]
  %s7 = inlined_call_operand.vmem [shape: f32[1,128], index: 7, kind: input, shape index: {}]
  %s8 = inlined_call_operand.vmem [shape: f32[16,128], index: 8, kind: output, shape index: {}]
  %s9 = sld [smem:[#allocation0]]
  $region42: #{lstm_classifier_forward.1} parent=0
    _
  %s11 = ssub.s32 1, %s9
  %s12 = scalar_select 0, %s11, %s9
  // Predicated region
  $region2: #{lstm_classifier_forward.1} parent=0 // pred_check
    _
  $region3: #{lstm_classifier_forward.1} parent=0 // pred_check_branch
    %14 = sbr.rel (0) target = $region5
  $region4: #{lstm_classifier_forward.1} parent=0 // pred_region
    _
  $region5: #{lstm_classifier_forward.1} parent=0 // pred_fallthru
    _
  // Predicated region
  $region6: #{lstm_classifier_forward.1} parent=0 // pred_check
    _
  $region7: #{lstm_classifier_forward.1} parent=0 // pred_check_branch
    %16 = sbr.rel (0) target = $region9
  $region8: #{lstm_classifier_forward.1} parent=0 // pred_region
    _
  $region9: #{lstm_classifier_forward.1} parent=0 // pred_fallthru
    _
  // Predicated region
  $region10: #{lstm_classifier_forward.1} parent=0 // pred_check
    _
  $region11: #{lstm_classifier_forward.1} parent=0 // pred_check_branch
    %18 = sbr.rel (0) target = $region13
  $region12: #{lstm_classifier_forward.1} parent=0 // pred_region
    _
  $region13: #{lstm_classifier_forward.1} parent=0 // pred_fallthru
    _
  // Predicated region
  $region14: #{lstm_classifier_forward.1} parent=0 // pred_check
    _
  $region15: #{lstm_classifier_forward.1} parent=0 // pred_check_branch
    %20 = sbr.rel (0) target = $region17
  $region16: #{lstm_classifier_forward.1} parent=0 // pred_region
    _
  $region17: #{lstm_classifier_forward.1} parent=0 // pred_fallthru
    _
  // Predicated region
  $region18: #{lstm_classifier_forward.1} parent=0 // pred_check
    _
  $region19: #{lstm_classifier_forward.1} parent=0 // pred_check_branch
    %22 = sbr.rel (0) target = $region21
  $region20: #{lstm_classifier_forward.1} parent=0 // pred_region
    _
  $region21: #{lstm_classifier_forward.1} parent=0 // pred_fallthru
    _
  // Predicated region
  $region22: #{lstm_classifier_forward.1} parent=0 // pred_check
    _
  $region23: #{lstm_classifier_forward.1} parent=0 // pred_check_branch
    %24 = sbr.rel (0) target = $region25
  $region24: #{lstm_classifier_forward.1} parent=0 // pred_region
    _
  $region25: #{lstm_classifier_forward.1} parent=0 // pred_fallthru
    _
  // Predicated region
  $region26: #{lstm_classifier_forward.1} parent=0 // pred_check
    _
  $region27: #{lstm_classifier_forward.1} parent=0 // pred_check_branch
    %26 = sbr.rel (0) target = $region29
  $region28: #{lstm_classifier_forward.1} parent=0 // pred_region
    _
  $region29: #{lstm_classifier_forward.1} parent=0 // pred_fallthru
    _
  // Predicated region
  $region30: #{lstm_classifier_forward.1} parent=0 // pred_check
    _
  $region31: #{lstm_classifier_forward.1} parent=0 // pred_check_branch
    %28 = sbr.rel (0) target = $region33
  $region32: #{lstm_classifier_forward.1} parent=0 // pred_region
    _
  $region33: #{lstm_classifier_forward.1} parent=0 // pred_fallthru
    _
  %v30 = vld [vmem:[%s1] sm:$0xff]
  %v31 = vld [vmem:[%s1 + $0x8] sm:$0xff]
  %v32 = vld [vmem:[%s0] sm:$0xf]
  %v33 = vld [vmem:[%s0 + $0x4] sm:$0xf]
  %v34 = vld [vmem:[%s0 + $0x8] sm:$0xf]
  %v35 = vld [vmem:[%s0 + $0xc] sm:$0xf]
  %v36 = vld [vmem:[%s0 + $0x10] sm:$0xf]
  %v37 = vld [vmem:[%s0 + $0x14] sm:$0xf]
  %v38 = vld [vmem:[%s0 + $0x18] sm:$0xf]
  %v39 = vld [vmem:[%s0 + $0x1c] sm:$0xf]
  %v40 = vld [vmem:[%s0 + $0x20] sm:$0xf]
  %v41 = vld [vmem:[%s0 + $0x24] sm:$0xf]
  %v42 = vld [vmem:[%s0 + $0x28] sm:$0xf]
  %v43 = vld [vmem:[%s0 + $0x2c] sm:$0xf]
  %v44 = vld [vmem:[%s0 + $0x30] sm:$0xf]
  %v45 = vld [vmem:[%s0 + $0x34] sm:$0xf]
  %v46 = vld [vmem:[%s0 + $0x38] sm:$0xf]
  %v47 = vld [vmem:[%s0 + $0x3c] sm:$0xf]
  %v48 = vld [vmem:[%s2] sm:$0xff]
  %v49 = vld [vmem:[%s2 + $0x8] sm:$0xff]
  %v50 = vld [vmem:[%s2 + $0x10] sm:$0xff]
  %v51 = vld [vmem:[%s2 + $0x18] sm:$0xff]
  %v68 = vunpack.c.l.b16 %v32
  %v69 = vunpack.c.l.b16 %v33
  %v70 = vunpack.c.l.b16 %v34
  %v71 = vunpack.c.l.b16 %v35
  %v72 = vunpack.c.l.b16 %v36
  %v73 = vunpack.c.l.b16 %v37
  %v74 = vunpack.c.l.b16 %v38
  %v75 = vunpack.c.l.b16 %v39
  %v76 = vunpack.c.l.b16 %v40
  %v77 = vunpack.c.l.b16 %v41
  %v78 = vunpack.c.l.b16 %v42
  %v79 = vunpack.c.l.b16 %v43
  %v80 = vunpack.c.l.b16 %v44
  %v81 = vunpack.c.l.b16 %v45
  %v82 = vunpack.c.l.b16 %v46
  %v83 = vunpack.c.l.b16 %v47
  %v84 = vpack.c.b16 %v69, %v68
  %v85 = vpack.c.b16 %v71, %v70
  %v86 = vpack.c.b16 %v73, %v72
  %v87 = vpack.c.b16 %v75, %v74
  %v88 = vpack.c.b16 %v77, %v76
  %v89 = vpack.c.b16 %v79, %v78
  %v90 = vpack.c.b16 %v81, %v80
  %v91 = vpack.c.b16 %v83, %v82
  %v96 = vunpack.c.l.b16 %v48
  %v97 = vunpack.c.h.b16 %v48
  %v98 = vunpack.c.l.b16 %v49
  %v99 = vunpack.c.h.b16 %v49
  %v100 = vunpack.c.l.b16 %v50
  %v101 = vunpack.c.h.b16 %v50
  %v102 = vunpack.c.l.b16 %v51
  %v103 = vunpack.c.h.b16 %v51
  %v104 = vpack.c.b16 %v100, %v96
  %v105 = vpack.c.b16 %v101, %v97
  %v106 = vpack.c.b16 %v102, %v98
  %v107 = vpack.c.b16 %v103, %v99
  %vm112 = vcmask 130048
  %v114 = vsel %vm112, %v84, 0
  %v117 = vsel %vm112, %v85, 0
  %v120 = vsel %vm112, %v86, 0
  %v123 = vsel %vm112, %v87, 0
  %v126 = vsel %vm112, %v88, 0
  %v129 = vsel %vm112, %v89, 0
  %v132 = vsel %vm112, %v90, 0
  %v135 = vsel %vm112, %v91, 0
  %137 = vmatprep.subr.bf16.mxu0 %v105
  %138 = vmatpush1.bf16.msra.mxu0 %v104
  %139 = vmatprep.subr.bf16.mxu0 0
  %140 = vmatpush1.bf16.msra.mxu0 0
  %141 = vmatprep.subr.bf16.mxu0 0
  %142 = vmatpush1.bf16.msra.mxu0 0
  %143 = vmatprep.subr.bf16.mxu0 0
  %144 = vmatpush1.bf16.msra.mxu0 0
  %145 = vmatprep.subr.bf16.mxu0 0
  %146 = vmatpush1.bf16.msra.mxu0 0
  %147 = vmatprep.subr.bf16.mxu0 0
  %148 = vmatpush1.bf16.msra.mxu0 0
  %149 = vmatprep.subr.bf16.mxu0 0
  %150 = vmatpush1.bf16.msra.mxu0 0
  %151 = vmatprep.subr.bf16.mxu0 0
  %152 = vmatpush1.bf16.msra.mxu0 0
  %153 = vmatprep.subr.bf16.mxu0 0
  %154 = vmatpush1.bf16.msra.mxu0 0
  %155 = vmatprep.subr.bf16.mxu0 0
  %156 = vmatpush1.bf16.msra.mxu0 0
  %157 = vmatprep.subr.bf16.mxu0 0
  %158 = vmatpush1.bf16.msra.mxu0 0
  %159 = vmatprep.subr.bf16.mxu0 0
  %160 = vmatpush1.bf16.msra.mxu0 0
  %161 = vmatprep.subr.bf16.mxu0 0
  %162 = vmatpush1.bf16.msra.mxu0 0
  %163 = vmatprep.subr.bf16.mxu0 0
  %164 = vmatpush1.bf16.msra.mxu0 0
  %165 = vmatprep.subr.bf16.mxu0 0
  %166 = vmatpush1.bf16.msra.mxu0 0
  %167 = vmatprep.subr.bf16.mxu0 0
  %168 = vmatpush1.bf16.msra.mxu0 0
  %169 = vmatprep.mubr.bf16.mxu0 0
  %170 = vmatmul.mubr.bf16.gmra.mrb[0].mxu0 %v114
  %v171 = vpop.f32.mrb[0].mxu0
  %v172 = vadd.f32 0.0, %v171
  %v173 = vpop.f32.mrb[0].mxu0
  %v174 = vadd.f32 0.0, %v173
  %v175 = vpop.f32.mrb[0].mxu0
  %v176 = vadd.f32 0.0, %v175
  %v177 = vpop.f32.mrb[0].mxu0
  %v178 = vadd.f32 0.0, %v177
  %179 = vmatprep.mubr.bf16.mxu0 0
  %180 = vmatmul.mubr.bf16.gmra.mrb[0].mxu0 %v117
  %v181 = vpop.f32.mrb[0].mxu0
  %v182 = vadd.f32 0.0, %v181
  %v183 = vpop.f32.mrb[0].mxu0
  %v184 = vadd.f32 0.0, %v183
  %v185 = vpop.f32.mrb[0].mxu0
  %v186 = vadd.f32 0.0, %v185
  %v187 = vpop.f32.mrb[0].mxu0
  %v188 = vadd.f32 0.0, %v187
  %189 = vmatprep.mubr.bf16.mxu0 0
  %190 = vmatmul.mubr.bf16.gmra.mrb[0].mxu0 %v120
  %v191 = vpop.f32.mrb[0].mxu0
  %v192 = vadd.f32 0.0, %v191
  %v193 = vpop.f32.mrb[0].mxu0
  %v194 = vadd.f32 0.0, %v193
  %v195 = vpop.f32.mrb[0].mxu0
  %v196 = vadd.f32 0.0, %v195
  %v197 = vpop.f32.mrb[0].mxu0
  %v198 = vadd.f32 0.0, %v197
  %199 = vmatprep.mubr.bf16.mxu0 0
  %200 = vmatmul.mubr.bf16.gmra.mrb[0].mxu0 %v123
  %v201 = vpop.f32.mrb[0].mxu0
  %v202 = vadd.f32 0.0, %v201
  %v203 = vpop.f32.mrb[0].mxu0
  %v204 = vadd.f32 0.0, %v203
  %v205 = vpop.f32.mrb[0].mxu0
  %v206 = vadd.f32 0.0, %v205
  %v207 = vpop.f32.mrb[0].mxu0
  %v208 = vadd.f32 0.0, %v207
  %209 = vmatprep.mubr.bf16.mxu0 0
  %210 = vmatmul.mubr.bf16.gmra.mrb[0].mxu0 %v126
  %v211 = vpop.f32.mrb[0].mxu0
  %v212 = vadd.f32 0.0, %v211
  %v213 = vpop.f32.mrb[0].mxu0
  %v214 = vadd.f32 0.0, %v213
  %v215 = vpop.f32.mrb[0].mxu0
  %v216 = vadd.f32 0.0, %v215
  %v217 = vpop.f32.mrb[0].mxu0
  %v218 = vadd.f32 0.0, %v217
  %219 = vmatprep.mubr.bf16.mxu0 0
  %220 = vmatmul.mubr.bf16.gmra.mrb[0].mxu0 %v129
  %v221 = vpop.f32.mrb[0].mxu0
  %v222 = vadd.f32 0.0, %v221
  %v223 = vpop.f32.mrb[0].mxu0
  %v224 = vadd.f32 0.0, %v223
  %v225 = vpop.f32.mrb[0].mxu0
  %v226 = vadd.f32 0.0, %v225
  %v227 = vpop.f32.mrb[0].mxu0
  %v228 = vadd.f32 0.0, %v227
  %229 = vmatprep.mubr.bf16.mxu0 0
  %230 = vmatmul.mubr.bf16.gmra.mrb[0].mxu0 %v132
  %v231 = vpop.f32.mrb[0].mxu0
  %v232 = vadd.f32 0.0, %v231
  %v233 = vpop.f32.mrb[0].mxu0
  %v234 = vadd.f32 0.0, %v233
  %v235 = vpop.f32.mrb[0].mxu0
  %v236 = vadd.f32 0.0, %v235
  %v237 = vpop.f32.mrb[0].mxu0
  %v238 = vadd.f32 0.0, %v237
  %239 = vmatprep.mubr.bf16.mxu0 0
  %240 = vmatmul.mubr.bf16.gmra.mrb[0].mxu0 %v135
  %v241 = vpop.f32.mrb[0].mxu0
  %v242 = vadd.f32 0.0, %v241
  %v243 = vpop.f32.mrb[0].mxu0
  %v244 = vadd.f32 0.0, %v243
  %v245 = vpop.f32.mrb[0].mxu0
  %v246 = vadd.f32 0.0, %v245
  %v247 = vpop.f32.mrb[0].mxu0
  %v248 = vadd.f32 0.0, %v247
  %249 = vdwg.mxu0
  %250 = vmatprep.subr.bf16.mxu0 %v107
  %251 = vmatpush1.bf16.msra.mxu0 %v106
  %252 = vmatprep.subr.bf16.mxu0 0
  %253 = vmatpush1.bf16.msra.mxu0 0
  %254 = vmatprep.subr.bf16.mxu0 0
  %255 = vmatpush1.bf16.msra.mxu0 0
  %256 = vmatprep.subr.bf16.mxu0 0
  %257 = vmatpush1.bf16.msra.mxu0 0
  %258 = vmatprep.subr.bf16.mxu0 0
  %259 = vmatpush1.bf16.msra.mxu0 0
  %260 = vmatprep.subr.bf16.mxu0 0
  %261 = vmatpush1.bf16.msra.mxu0 0
  %262 = vmatprep.subr.bf16.mxu0 0
  %263 = vmatpush1.bf16.msra.mxu0 0
  %264 = vmatprep.subr.bf16.mxu0 0
  %265 = vmatpush1.bf16.msra.mxu0 0
  %266 = vmatprep.subr.bf16.mxu0 0
  %267 = vmatpush1.bf16.msra.mxu0 0
  %268 = vmatprep.subr.bf16.mxu0 0
  %269 = vmatpush1.bf16.msra.mxu0 0
  %270 = vmatprep.subr.bf16.mxu0 0
  %271 = vmatpush1.bf16.msra.mxu0 0
  %272 = vmatprep.subr.bf16.mxu0 0
  %273 = vmatpush1.bf16.msra.mxu0 0
  %274 = vmatprep.subr.bf16.mxu0 0
  %275 = vmatpush1.bf16.msra.mxu0 0
  %276 = vmatprep.subr.bf16.mxu0 0
  %277 = vmatpush1.bf16.msra.mxu0 0
  %278 = vmatprep.subr.bf16.mxu0 0
  %279 = vmatpush1.bf16.msra.mxu0 0
  %280 = vmatprep.subr.bf16.mxu0 0
  %281 = vmatpush1.bf16.msra.mxu0 0
  %282 = vmatprep.mubr.bf16.mxu0 0
  %283 = vmatmul.mubr.bf16.gmra.mrb[0].mxu0 %v114
  %v284 = vpop.f32.mrb[0].mxu0
  %v285 = vadd.f32 0.0, %v284
  %v286 = vpop.f32.mrb[0].mxu0
  %v287 = vadd.f32 0.0, %v286
  %v288 = vpop.f32.mrb[0].mxu0
  %v289 = vadd.f32 0.0, %v288
  %v290 = vpop.f32.mrb[0].mxu0
  %v291 = vadd.f32 0.0, %v290
  %292 = vmatprep.mubr.bf16.mxu0 0
  %293 = vmatmul.mubr.bf16.gmra.mrb[0].mxu0 %v117
  %v294 = vpop.f32.mrb[0].mxu0
  %v295 = vadd.f32 0.0, %v294
  %v296 = vpop.f32.mrb[0].mxu0
  %v297 = vadd.f32 0.0, %v296
  %v298 = vpop.f32.mrb[0].mxu0
  %v299 = vadd.f32 0.0, %v298
  %v300 = vpop.f32.mrb[0].mxu0
  %v301 = vadd.f32 0.0, %v300
  %302 = vmatprep.mubr.bf16.mxu0 0
  %303 = vmatmul.mubr.bf16.gmra.mrb[0].mxu0 %v120
  %v304 = vpop.f32.mrb[0].mxu0
  %v305 = vadd.f32 0.0, %v304
  %v306 = vpop.f32.mrb[0].mxu0
  %v307 = vadd.f32 0.0, %v306
  %v308 = vpop.f32.mrb[0].mxu0
  %v309 = vadd.f32 0.0, %v308
  %v310 = vpop.f32.mrb[0].mxu0
  %v311 = vadd.f32 0.0, %v310
  %312 = vmatprep.mubr.bf16.mxu0 0
  %313 = vmatmul.mubr.bf16.gmra.mrb[0].mxu0 %v123
  %v314 = vpop.f32.mrb[0].mxu0
  %v315 = vadd.f32 0.0, %v314
  %v316 = vpop.f32.mrb[0].mxu0
  %v317 = vadd.f32 0.0, %v316
  %v318 = vpop.f32.mrb[0].mxu0
  %v319 = vadd.f32 0.0, %v318
  %v320 = vpop.f32.mrb[0].mxu0
  %v321 = vadd.f32 0.0, %v320
  %322 = vmatprep.mubr.bf16.mxu0 0
  %323 = vmatmul.mubr.bf16.gmra.mrb[0].mxu0 %v126
  %v324 = vpop.f32.mrb[0].mxu0
  %v325 = vadd.f32 0.0, %v324
  %v326 = vpop.f32.mrb[0].mxu0
  %v327 = vadd.f32 0.0, %v326
  %v328 = vpop.f32.mrb[0].mxu0
  %v329 = vadd.f32 0.0, %v328
  %v330 = vpop.f32.mrb[0].mxu0
  %v331 = vadd.f32 0.0, %v330
  %332 = vmatprep.mubr.bf16.mxu0 0
  %333 = vmatmul.mubr.bf16.gmra.mrb[0].mxu0 %v129
  %v334 = vpop.f32.mrb[0].mxu0
  %v335 = vadd.f32 0.0, %v334
  %v336 = vpop.f32.mrb[0].mxu0
  %v337 = vadd.f32 0.0, %v336
  %v338 = vpop.f32.mrb[0].mxu0
  %v339 = vadd.f32 0.0, %v338
  %v340 = vpop.f32.mrb[0].mxu0
  %v341 = vadd.f32 0.0, %v340
  %342 = vmatprep.mubr.bf16.mxu0 0
  %343 = vmatmul.mubr.bf16.gmra.mrb[0].mxu0 %v132
  %v344 = vpop.f32.mrb[0].mxu0
  %v345 = vadd.f32 0.0, %v344
  %v346 = vpop.f32.mrb[0].mxu0
  %v347 = vadd.f32 0.0, %v346
  %v348 = vpop.f32.mrb[0].mxu0
  %v349 = vadd.f32 0.0, %v348
  %v350 = vpop.f32.mrb[0].mxu0
  %v351 = vadd.f32 0.0, %v350
  %352 = vmatprep.mubr.bf16.mxu0 0
  %353 = vmatmul.mubr.bf16.gmra.mrb[0].mxu0 %v135
  %v354 = vpop.f32.mrb[0].mxu0
  %v355 = vadd.f32 0.0, %v354
  %v356 = vpop.f32.mrb[0].mxu0
  %v357 = vadd.f32 0.0, %v356
  %v358 = vpop.f32.mrb[0].mxu0
  %v359 = vadd.f32 0.0, %v358
  %v360 = vpop.f32.mrb[0].mxu0
  %v361 = vadd.f32 0.0, %v360
  %362 = vdwg.mxu0
  %v363 = vpack.c.bf16 %v176, %v172
  %v364 = vpack.c.bf16 %v178, %v174
  %v365 = vpack.c.bf16 %v289, %v285
  %v366 = vpack.c.bf16 %v291, %v287
  %v367 = vpack.c.bf16 %v186, %v182
  %v368 = vpack.c.bf16 %v188, %v184
  %v369 = vpack.c.bf16 %v299, %v295
  %v370 = vpack.c.bf16 %v301, %v297
  %v371 = vpack.c.bf16 %v196, %v192
  %v372 = vpack.c.bf16 %v198, %v194
  %v373 = vpack.c.bf16 %v309, %v305
  %v374 = vpack.c.bf16 %v311, %v307
  %v375 = vpack.c.bf16 %v206, %v202
  %v376 = vpack.c.bf16 %v208, %v204
  %v377 = vpack.c.bf16 %v319, %v315
  %v378 = vpack.c.bf16 %v321, %v317
  %v379 = vpack.c.bf16 %v216, %v212
  %v380 = vpack.c.bf16 %v218, %v214
  %v381 = vpack.c.bf16 %v329, %v325
  %v382 = vpack.c.bf16 %v331, %v327
  %v383 = vpack.c.bf16 %v226, %v222
  %v384 = vpack.c.bf16 %v228, %v224
  %v385 = vpack.c.bf16 %v339, %v335
  %v386 = vpack.c.bf16 %v341, %v337
  %v387 = vpack.c.bf16 %v236, %v232
  %v388 = vpack.c.bf16 %v238, %v234
  %v389 = vpack.c.bf16 %v349, %v345
  %v390 = vpack.c.bf16 %v351, %v347
  %v391 = vpack.c.bf16 %v246, %v242
  %v392 = vpack.c.bf16 %v248, %v244
  %v393 = vpack.c.bf16 %v359, %v355
  %v394 = vpack.c.bf16 %v361, %v357
  %395 = vst [vmem:[#allocation3] sm:$0xff] %v363
  %396 = vst [vmem:[#allocation3 + $0x8] sm:$0xff] %v364
  %397 = vst [vmem:[#allocation3 + $0x10] sm:$0xff] %v365
  %398 = vst [vmem:[#allocation3 + $0x18] sm:$0xff] %v366
  %399 = vst [vmem:[#allocation3 + $0x20] sm:$0xff] %v367
  %400 = vst [vmem:[#allocation3 + $0x28] sm:$0xff] %v368
  %401 = vst [vmem:[#allocation3 + $0x30] sm:$0xff] %v369
  %402 = vst [vmem:[#allocation3 + $0x38] sm:$0xff] %v370
  %403 = vst [vmem:[#allocation3 + $0x40] sm:$0xff] %v371
  %404 = vst [vmem:[#allocation3 + $0x48] sm:$0xff] %v372
  %405 = vst [vmem:[#allocation3 + $0x50] sm:$0xff] %v373
  %406 = vst [vmem:[#allocation3 + $0x58] sm:$0xff] %v374
  %407 = vst [vmem:[#allocation3 + $0x60] sm:$0xff] %v375
  %408 = vst [vmem:[#allocation3 + $0x68] sm:$0xff] %v376
  %409 = vst [vmem:[#allocation3 + $0x70] sm:$0xff] %v377
  %410 = vst [vmem:[#allocation3 + $0x78] sm:$0xff] %v378
  %411 = vst [vmem:[#allocation3 + $0x80] sm:$0xff] %v379
  %412 = vst [vmem:[#allocation3 + $0x88] sm:$0xff] %v380
  %413 = vst [vmem:[#allocation3 + $0x90] sm:$0xff] %v381
  %414 = vst [vmem:[#allocation3 + $0x98] sm:$0xff] %v382
  %415 = vst [vmem:[#allocation3 + $0xa0] sm:$0xff] %v383
  %416 = vst [vmem:[#allocation3 + $0xa8] sm:$0xff] %v384
  %417 = vst [vmem:[#allocation3 + $0xb0] sm:$0xff] %v385
  %418 = vst [vmem:[#allocation3 + $0xb8] sm:$0xff] %v386
  %419 = vst [vmem:[#allocation3 + $0xc0] sm:$0xff] %v387
  %420 = vst [vmem:[#allocation3 + $0xc8] sm:$0xff] %v388
  %421 = vst [vmem:[#allocation3 + $0xd0] sm:$0xff] %v389
  %422 = vst [vmem:[#allocation3 + $0xd8] sm:$0xff] %v390
  %423 = vst [vmem:[#allocation3 + $0xe0] sm:$0xff] %v391
  %424 = vst [vmem:[#allocation3 + $0xe8] sm:$0xff] %v392
  %425 = vst [vmem:[#allocation3 + $0xf0] sm:$0xff] %v393
  %426 = vst [vmem:[#allocation3 + $0xf8] sm:$0xff] %v394
  %v427 = vld [vmem:[%s4] sm:$0xff]
  %v428 = vld [vmem:[%s4 + $0x8] sm:$0xff]
  %v429 = vld [vmem:[%s4 + $0x10] sm:$0xff]
  %v430 = vld [vmem:[%s4 + $0x18] sm:$0xff]
  %v431 = vld [vmem:[%s4 + $0x20] sm:$0xff]
  %v432 = vld [vmem:[%s4 + $0x28] sm:$0xff]
  %v433 = vld [vmem:[%s4 + $0x30] sm:$0xff]
  %v434 = vld [vmem:[%s4 + $0x38] sm:$0xff]
  %v435 = vld [vmem:[%s4 + $0x40] sm:$0xff]
  %v436 = vld [vmem:[%s4 + $0x48] sm:$0xff]
  %v437 = vld [vmem:[%s4 + $0x50] sm:$0xff]
  %v438 = vld [vmem:[%s4 + $0x58] sm:$0xff]
  %v439 = vld [vmem:[%s4 + $0x60] sm:$0xff]
  %v440 = vld [vmem:[%s4 + $0x68] sm:$0xff]
  %v441 = vld [vmem:[%s4 + $0x70] sm:$0xff]
  %v442 = vld [vmem:[%s4 + $0x78] sm:$0xff]
  %v443 = vld [vmem:[%s4 + $0x80] sm:$0xff]
  %v444 = vld [vmem:[%s4 + $0x88] sm:$0xff]
  %v445 = vld [vmem:[%s4 + $0x90] sm:$0xff]
  %v446 = vld [vmem:[%s4 + $0x98] sm:$0xff]
  %v447 = vld [vmem:[%s4 + $0xa0] sm:$0xff]
  %v448 = vld [vmem:[%s4 + $0xa8] sm:$0xff]
  %v449 = vld [vmem:[%s4 + $0xb0] sm:$0xff]
  %v450 = vld [vmem:[%s4 + $0xb8] sm:$0xff]
  %v451 = vld [vmem:[%s4 + $0xc0] sm:$0xff]
  %v452 = vld [vmem:[%s4 + $0xc8] sm:$0xff]
  %v453 = vld [vmem:[%s4 + $0xd0] sm:$0xff]
  %v454 = vld [vmem:[%s4 + $0xd8] sm:$0xff]
  %v455 = vld [vmem:[%s4 + $0xe0] sm:$0xff]
  %v456 = vld [vmem:[%s4 + $0xe8] sm:$0xff]
  %v457 = vld [vmem:[%s4 + $0xf0] sm:$0xff]
  %v458 = vld [vmem:[%s4 + $0xf8] sm:$0xff]
  %v459 = vld [vmem:[%s5] sm:$0xf]
  %s460 = smul.u32 0, 4
  %s461 = smul.addr %s460, 8
  %s462 = scalar_lea.vmem [#allocation3], %s461
  %v463 = vld [vmem:[%s462] sm:$0xff]
  %v464 = vld [vmem:[%s462 + $0x8] sm:$0xff]
  %v465 = vld [vmem:[%s462 + $0x10] sm:$0xff]
  %v466 = vld [vmem:[%s462 + $0x18] sm:$0xff]
  %v467 = vunpack.c.l.bf16 %v463
  %v468 = vunpack.c.l.bf16 %v464
  %v469 = vunpack.c.l.bf16 %v465
  %v470 = vunpack.c.l.bf16 %v466
  %v471 = vunpack.c.h.bf16 %v463
  %v472 = vunpack.c.h.bf16 %v464
  %v473 = vunpack.c.h.bf16 %v465
  %v474 = vunpack.c.h.bf16 %v466
  %v476 = vlaneseq
  %v477 = vshrl.u32 %v476, 7
  %v478 = vsub.s32 0, %v477
  %v479 = vrot.slane %v459, %v478
  %v480 = vlaneseq
  %v481 = vshrl.u32 %v480, 7
  %v482 = vsub.s32 1, %v481
  %v483 = vrot.slane %v459, %v482
  %v484 = vlaneseq
  %v485 = vshrl.u32 %v484, 7
  %v486 = vsub.s32 2, %v485
  %v487 = vrot.slane %v459, %v486
  %v488 = vlaneseq
  %v489 = vshrl.u32 %v488, 7
  %v490 = vsub.s32 3, %v489
  %v491 = vrot.slane %v459, %v490
  %v496 = vadd.f32 %v467, %v479
  %v497 = vadd.f32 %v468, %v483
  %v498 = vadd.f32 %v469, %v487
  %v499 = vadd.f32 %v470, %v491
  %v500 = vadd.f32 %v471, %v479
  %v501 = vadd.f32 %v472, %v483
  %v502 = vadd.f32 %v473, %v487
  %v503 = vadd.f32 %v474, %v491
  %v536 = vunpack.c.l.b16 %v427
  %v537 = vunpack.c.h.b16 %v427
  %v538 = vunpack.c.l.b16 %v428
  %v539 = vunpack.c.h.b16 %v428
  %v540 = vunpack.c.l.b16 %v429
  %v541 = vunpack.c.h.b16 %v429
  %v542 = vunpack.c.l.b16 %v430
  %v543 = vunpack.c.h.b16 %v430
  %v544 = vunpack.c.l.b16 %v431
  %v545 = vunpack.c.h.b16 %v431
  %v546 = vunpack.c.l.b16 %v432
  %v547 = vunpack.c.h.b16 %v432
  %v548 = vunpack.c.l.b16 %v433
  %v549 = vunpack.c.h.b16 %v433
  %v550 = vunpack.c.l.b16 %v434
  %v551 = vunpack.c.h.b16 %v434
  %v552 = vunpack.c.l.b16 %v435
  %v553 = vunpack.c.h.b16 %v435
  %v554 = vunpack.c.l.b16 %v436
  %v555 = vunpack.c.h.b16 %v436
  %v556 = vunpack.c.l.b16 %v437
  %v557 = vunpack.c.h.b16 %v437
  %v558 = vunpack.c.l.b16 %v438
  %v559 = vunpack.c.h.b16 %v438
  %v560 = vunpack.c.l.b16 %v439
  %v561 = vunpack.c.h.b16 %v439
  %v562 = vunpack.c.l.b16 %v440
  %v563 = vunpack.c.h.b16 %v440
  %v564 = vunpack.c.l.b16 %v441
  %v565 = vunpack.c.h.b16 %v441
  %v566 = vunpack.c.l.b16 %v442
  %v567 = vunpack.c.h.b16 %v442
  %v568 = vunpack.c.l.b16 %v443
  %v569 = vunpack.c.h.b16 %v443
  %v570 = vunpack.c.l.b16 %v444
  %v571 = vunpack.c.h.b16 %v444
  %v572 = vunpack.c.l.b16 %v445
  %v573 = vunpack.c.h.b16 %v445
  %v574 = vunpack.c.l.b16 %v446
  %v575 = vunpack.c.h.b16 %v446
  %v576 = vunpack.c.l.b16 %v447
  %v577 = vunpack.c.h.b16 %v447
  %v578 = vunpack.c.l.b16 %v448
  %v579 = vunpack.c.h.b16 %v448
  %v580 = vunpack.c.l.b16 %v449
  %v581 = vunpack.c.h.b16 %v449
  %v582 = vunpack.c.l.b16 %v450
  %v583 = vunpack.c.h.b16 %v450
  %v584 = vunpack.c.l.b16 %v451
  %v585 = vunpack.c.h.b16 %v451
  %v586 = vunpack.c.l.b16 %v452
  %v587 = vunpack.c.h.b16 %v452
  %v588 = vunpack.c.l.b16 %v453
  %v589 = vunpack.c.h.b16 %v453
  %v590 = vunpack.c.l.b16 %v454
  %v591 = vunpack.c.h.b16 %v454
  %v592 = vunpack.c.l.b16 %v455
  %v593 = vunpack.c.h.b16 %v455
  %v594 = vunpack.c.l.b16 %v456
  %v595 = vunpack.c.h.b16 %v456
  %v596 = vunpack.c.l.b16 %v457
  %v597 = vunpack.c.h.b16 %v457
  %v598 = vunpack.c.l.b16 %v458
  %v599 = vunpack.c.h.b16 %v458
  %v600 = vpack.c.b16 %v540, %v536
  %v601 = vpack.c.b16 %v541, %v537
  %v602 = vpack.c.b16 %v542, %v538
  %v603 = vpack.c.b16 %v543, %v539
  %v604 = vpack.c.b16 %v548, %v544
  %v605 = vpack.c.b16 %v549, %v545
  %v606 = vpack.c.b16 %v550, %v546
  %v607 = vpack.c.b16 %v551, %v547
  %v608 = vpack.c.b16 %v556, %v552
  %v609 = vpack.c.b16 %v557, %v553
  %v610 = vpack.c.b16 %v558, %v554
  %v611 = vpack.c.b16 %v559, %v555
  %v612 = vpack.c.b16 %v564, %v560
  %v613 = vpack.c.b16 %v565, %v561
  %v614 = vpack.c.b16 %v566, %v562
  %v615 = vpack.c.b16 %v567, %v563
  %v616 = vpack.c.b16 %v572, %v568
  %v617 = vpack.c.b16 %v573, %v569
  %v618 = vpack.c.b16 %v574, %v570
  %v619 = vpack.c.b16 %v575, %v571
  %v620 = vpack.c.b16 %v580, %v576
  %v621 = vpack.c.b16 %v581, %v577
  %v622 = vpack.c.b16 %v582, %v578
  %v623 = vpack.c.b16 %v583, %v579
  %v624 = vpack.c.b16 %v588, %v584
  %v625 = vpack.c.b16 %v589, %v585
  %v626 = vpack.c.b16 %v590, %v586
  %v627 = vpack.c.b16 %v591, %v587
  %v628 = vpack.c.b16 %v596, %v592
  %v629 = vpack.c.b16 %v597, %v593
  %v630 = vpack.c.b16 %v598, %v594
  %v631 = vpack.c.b16 %v599, %v595
  %664 = vmatprep.subr.bf16.mxu0 %v601
  %665 = vmatpush1.bf16.msra.mxu0 %v600
  %666 = vmatprep.subr.bf16.mxu0 %v605
  %667 = vmatpush1.bf16.msra.mxu0 %v604
  %668 = vmatprep.subr.bf16.mxu0 %v609
  %669 = vmatpush1.bf16.msra.mxu0 %v608
  %670 = vmatprep.subr.bf16.mxu0 %v613
  %671 = vmatpush1.bf16.msra.mxu0 %v612
  %672 = vmatprep.subr.bf16.mxu0 %v617
  %673 = vmatpush1.bf16.msra.mxu0 %v616
  %674 = vmatprep.subr.bf16.mxu0 %v621
  %675 = vmatpush1.bf16.msra.mxu0 %v620
  %676 = vmatprep.subr.bf16.mxu0 %v625
  %677 = vmatpush1.bf16.msra.mxu0 %v624
  %678 = vmatprep.subr.bf16.mxu0 %v629
  %679 = vmatpush1.bf16.msra.mxu0 %v628
  %680 = vmatprep.subr.bf16.mxu0 0
  %681 = vmatpush1.bf16.msra.mxu0 0
  %682 = vmatprep.subr.bf16.mxu0 0
  %683 = vmatpush1.bf16.msra.mxu0 0
  %684 = vmatprep.subr.bf16.mxu0 0
  %685 = vmatpush1.bf16.msra.mxu0 0
  %686 = vmatprep.subr.bf16.mxu0 0
  %687 = vmatpush1.bf16.msra.mxu0 0
  %688 = vmatprep.subr.bf16.mxu0 0
  %689 = vmatpush1.bf16.msra.mxu0 0
  %690 = vmatprep.subr.bf16.mxu0 0
  %691 = vmatpush1.bf16.msra.mxu0 0
  %692 = vmatprep.subr.bf16.mxu0 0
  %693 = vmatpush1.bf16.msra.mxu0 0
  %694 = vmatprep.subr.bf16.mxu0 0
  %695 = vmatpush1.bf16.msra.mxu0 0
  %696 = vmatprep.mubr.bf16.mxu0 0
  %697 = vmatmul.mubr.bf16.gmra.mrb[0].mxu0 0
  %v698 = vpop.f32.mrb[0].mxu0
  %v699 = vadd.f32 0.0, %v698
  %v700 = vpop.f32.mrb[0].mxu0
  %v701 = vadd.f32 0.0, %v700
  %v702 = vpop.f32.mrb[0].mxu0
  %v703 = vadd.f32 0.0, %v702
  %v704 = vpop.f32.mrb[0].mxu0
  %v705 = vadd.f32 0.0, %v704
  %706 = vdwg.mxu0
  %707 = vmatprep.subr.bf16.mxu0 %v603
  %708 = vmatpush1.bf16.msra.mxu0 %v602
  %709 = vmatprep.subr.bf16.mxu0 %v607
  %710 = vmatpush1.bf16.msra.mxu0 %v606
  %711 = vmatprep.subr.bf16.mxu0 %v611
  %712 = vmatpush1.bf16.msra.mxu0 %v610
  %713 = vmatprep.subr.bf16.mxu0 %v615
  %714 = vmatpush1.bf16.msra.mxu0 %v614
  %715 = vmatprep.subr.bf16.mxu0 %v619
  %716 = vmatpush1.bf16.msra.mxu0 %v618
  %717 = vmatprep.subr.bf16.mxu0 %v623
  %718 = vmatpush1.bf16.msra.mxu0 %v622
  %719 = vmatprep.subr.bf16.mxu0 %v627
  %720 = vmatpush1.bf16.msra.mxu0 %v626
  %721 = vmatprep.subr.bf16.mxu0 %v631
  %722 = vmatpush1.bf16.msra.mxu0 %v630
  %723 = vmatprep.subr.bf16.mxu0 0
  %724 = vmatpush1.bf16.msra.mxu0 0
  %725 = vmatprep.subr.bf16.mxu0 0
  %726 = vmatpush1.bf16.msra.mxu0 0
  %727 = vmatprep.subr.bf16.mxu0 0
  %728 = vmatpush1.bf16.msra.mxu0 0
  %729 = vmatprep.subr.bf16.mxu0 0
  %730 = vmatpush1.bf16.msra.mxu0 0
  %731 = vmatprep.subr.bf16.mxu0 0
  %732 = vmatpush1.bf16.msra.mxu0 0
  %733 = vmatprep.subr.bf16.mxu0 0
  %734 = vmatpush1.bf16.msra.mxu0 0
  %735 = vmatprep.subr.bf16.mxu0 0
  %736 = vmatpush1.bf16.msra.mxu0 0
  %737 = vmatprep.subr.bf16.mxu0 0
  %738 = vmatpush1.bf16.msra.mxu0 0
  %739 = vmatprep.mubr.bf16.mxu0 0
  %740 = vmatmul.mubr.bf16.gmra.mrb[0].mxu0 0
  %v741 = vpop.f32.mrb[0].mxu0
  %v742 = vadd.f32 0.0, %v741
  %v743 = vpop.f32.mrb[0].mxu0
  %v744 = vadd.f32 0.0, %v743
  %v745 = vpop.f32.mrb[0].mxu0
  %v746 = vadd.f32 0.0, %v745
  %v747 = vpop.f32.mrb[0].mxu0
  %v748 = vadd.f32 0.0, %v747
  %749 = vdwg.mxu0
  %v750 = vadd.f32 %v496, %v699
  %v751 = vadd.f32 %v497, %v701
  %v752 = vadd.f32 %v498, %v742
  %v753 = vadd.f32 %v499, %v744
  %v754 = vadd.f32 %v500, %v703
  %v755 = vadd.f32 %v501, %v705
  %v756 = vadd.f32 %v502, %v746
  %v757 = vadd.f32 %v503, %v748
  %v758 = vxor.u32 %v750, 2147483648
  %v759 = vxor.u32 %v751, 2147483648
  %v760 = vxor.u32 %v752, 2147483648
  %v761 = vxor.u32 %v754, 2147483648
  %v762 = vxor.u32 %v755, 2147483648
  %v763 = vxor.u32 %v756, 2147483648
  %v764 = vmul.f32 %v758, 1.442695
  %v765 = vpow.pop %v764
  %v766 = vmul.f32 %v759, 1.442695
  %v767 = vpow.pop %v766
  %v768 = vmul.f32 %v760, 1.442695
  %v769 = vpow.pop %v768
  %v770 = vmul.f32 %v761, 1.442695
  %v771 = vpow.pop %v770
  %v772 = vmul.f32 %v762, 1.442695
  %v773 = vpow.pop %v772
  %v774 = vmul.f32 %v763, 1.442695
  %v775 = vpow.pop %v774
  %v776 = vadd.f32 %v765, 1.0
  %v777 = vadd.f32 %v767, 1.0
  %v778 = vadd.f32 %v769, 1.0
  %v779 = vadd.f32 %v771, 1.0
  %v780 = vadd.f32 %v773, 1.0
  %v781 = vadd.f32 %v775, 1.0
  %v782 = vrcp.pop %v776
  %v783 = vmul.f32 1.0, %v782
  %v784 = vrcp.pop %v777
  %v785 = vmul.f32 1.0, %v784
  %v786 = vrcp.pop %v778
  %v787 = vmul.f32 1.0, %v786
  %v788 = vrcp.pop %v779
  %v789 = vmul.f32 1.0, %v788
  %v790 = vrcp.pop %v780
  %v791 = vmul.f32 1.0, %v790
  %v792 = vrcp.pop %v781
  %v793 = vmul.f32 1.0, %v792
  %v794 = vtanh.pop %v753
  %v795 = vtanh.pop %v757
  %v796 = vmul.f32 %v785, 0.0
  %v797 = vmul.f32 %v791, 0.0
  %v798 = vmul.f32 %v783, %v794
  %v799 = vmul.f32 %v789, %v795
  %v800 = vadd.f32 %v796, %v798
  %v801 = vadd.f32 %v797, %v799
  %v802 = vtanh.pop %v800
  %v803 = vtanh.pop %v801
  %v804 = vmul.f32 %v787, %v802
  %v805 = vmul.f32 %v793, %v803
  %vm806 = vcmp.gt.s32.totalorder %v30, 0
  %vm807 = vcmp.gt.s32.totalorder %v31, 0
  %v808 = vsel %vm806, 1, 0
  %v809 = vsel %vm807, 1, 0
  %810 = vset.pattern.permute.xlu0 0
  %811 = vperm.xlu0 %810, %v808
  %v812 = vpop.permute.xlu0 %811
  %813 = vset.pattern.permute.xlu0 0
  %814 = vperm.xlu0 %813, %v809
  %v815 = vpop.permute.xlu0 %814
  %vm816 = vcmp.eq.s32.totalorder %v812, 1
  %vm817 = vcmp.eq.s32.totalorder %v815, 1
  %v818 = vsel %vm816, %v804, 0.0
  %v819 = vsel %vm817, %v805, 0.0
  %v820 = vsel %vm816, %v800, 0.0
  %v821 = vsel %vm817, %v801, 0.0
  %v822 = vpack.c.bf16 %v819, %v818
  %823 = vst [vmem:[#allocation2] sm:$0xff] %v822
  %s824 = smul.u32 1, 4
  %s825 = smul.addr %s824, 8
  %s826 = scalar_lea.vmem [#allocation3], %s825
  %v827 = vld [vmem:[%s826] sm:$0xff]
  %v828 = vld [vmem:[%s826 + $0x8] sm:$0xff]
  %v829 = vld [vmem:[%s826 + $0x10] sm:$0xff]
  %v830 = vld [vmem:[%s826 + $0x18] sm:$0xff]
  %v831 = vunpack.c.l.bf16 %v827
  %v832 = vunpack.c.l.bf16 %v828
  %v833 = vunpack.c.l.bf16 %v829
  %v834 = vunpack.c.l.bf16 %v830
  %v835 = vunpack.c.h.bf16 %v827
  %v836 = vunpack.c.h.bf16 %v828
  %v837 = vunpack.c.h.bf16 %v829
  %v838 = vunpack.c.h.bf16 %v830
  %v839 = vadd.f32 %v831, %v479
  %v840 = vadd.f32 %v832, %v483
  %v841 = vadd.f32 %v833, %v487
  %v842 = vadd.f32 %v834, %v491
  %v843 = vadd.f32 %v835, %v479
  %v844 = vadd.f32 %v836, %v483
  %v845 = vadd.f32 %v837, %v487
  %v846 = vadd.f32 %v838, %v491
  %847 = vmatprep.subr.bf16.mxu0 %v601
  %848 = vmatpush1.bf16.msra.mxu0 %v600
  %849 = vmatprep.subr.bf16.mxu0 %v605
  %850 = vmatpush1.bf16.msra.mxu0 %v604
  %851 = vmatprep.subr.bf16.mxu0 %v609
  %852 = vmatpush1.bf16.msra.mxu0 %v608
  %853 = vmatprep.subr.bf16.mxu0 %v613
  %854 = vmatpush1.bf16.msra.mxu0 %v612
  %855 = vmatprep.subr.bf16.mxu0 %v617
  %856 = vmatpush1.bf16.msra.mxu0 %v616
  %857 = vmatprep.subr.bf16.mxu0 %v621
  %858 = vmatpush1.bf16.msra.mxu0 %v620
  %859 = vmatprep.subr.bf16.mxu0 %v625
  %860 = vmatpush1.bf16.msra.mxu0 %v624
  %861 = vmatprep.subr.bf16.mxu0 %v629
  %862 = vmatpush1.bf16.msra.mxu0 %v628
  %863 = vmatprep.subr.bf16.mxu0 0
  %864 = vmatpush1.bf16.msra.mxu0 0
  %865 = vmatprep.subr.bf16.mxu0 0
  %866 = vmatpush1.bf16.msra.mxu0 0
  %867 = vmatprep.subr.bf16.mxu0 0
  %868 = vmatpush1.bf16.msra.mxu0 0
  %869 = vmatprep.subr.bf16.mxu0 0
  %870 = vmatpush1.bf16.msra.mxu0 0
  %871 = vmatprep.subr.bf16.mxu0 0
  %872 = vmatpush1.bf16.msra.mxu0 0
  %873 = vmatprep.subr.bf16.mxu0 0
  %874 = vmatpush1.bf16.msra.mxu0 0
  %875 = vmatprep.subr.bf16.mxu0 0
  %876 = vmatpush1.bf16.msra.mxu0 0
  %877 = vmatprep.subr.bf16.mxu0 0
  %878 = vmatpush1.bf16.msra.mxu0 0
  %879 = vmatprep.mubr.bf16.mxu0 0
  %880 = vmatmul.mubr.bf16.gmra.mrb[0].mxu0 %v822
  %v881 = vpop.f32.mrb[0].mxu0
  %v882 = vadd.f32 0.0, %v881
  %v883 = vpop.f32.mrb[0].mxu0
  %v884 = vadd.f32 0.0, %v883
  %v885 = vpop.f32.mrb[0].mxu0
  %v886 = vadd.f32 0.0, %v885
  %v887 = vpop.f32.mrb[0].mxu0
  %v888 = vadd.f32 0.0, %v887
  %889 = vdwg.mxu0
  %890 = vmatprep.subr.bf16.mxu0 %v603
  %891 = vmatpush1.bf16.msra.mxu0 %v602
  %892 = vmatprep.subr.bf16.mxu0 %v607
  %893 = vmatpush1.bf16.msra.mxu0 %v606
  %894 = vmatprep.subr.bf16.mxu0 %v611
  %895 = vmatpush1.bf16.msra.mxu0 %v610
  %896 = vmatprep.subr.bf16.mxu0 %v615
  %897 = vmatpush1.bf16.msra.mxu0 %v614
  %898 = vmatprep.subr.bf16.mxu0 %v619
  %899 = vmatpush1.bf16.msra.mxu0 %v618
  %900 = vmatprep.subr.bf16.mxu0 %v623
  %901 = vmatpush1.bf16.msra.mxu0 %v622
  %902 = vmatprep.subr.bf16.mxu0 %v627
  %903 = vmatpush1.bf16.msra.mxu0 %v626
  %904 = vmatprep.subr.bf16.mxu0 %v631
  %905 = vmatpush1.bf16.msra.mxu0 %v630
  %906 = vmatprep.subr.bf16.mxu0 0
  %907 = vmatpush1.bf16.msra.mxu0 0
  %908 = vmatprep.subr.bf16.mxu0 0
  %909 = vmatpush1.bf16.msra.mxu0 0
  %910 = vmatprep.subr.bf16.mxu0 0
  %911 = vmatpush1.bf16.msra.mxu0 0
  %912 = vmatprep.subr.bf16.mxu0 0
  %913 = vmatpush1.bf16.msra.mxu0 0
  %914 = vmatprep.subr.bf16.mxu0 0
  %915 = vmatpush1.bf16.msra.mxu0 0
  %916 = vmatprep.subr.bf16.mxu0 0
  %917 = vmatpush1.bf16.msra.mxu0 0
  %918 = vmatprep.subr.bf16.mxu0 0
  %919 = vmatpush1.bf16.msra.mxu0 0
  %920 = vmatprep.subr.bf16.mxu0 0
  %921 = vmatpush1.bf16.msra.mxu0 0
  %922 = vmatprep.mubr.bf16.mxu0 0
  %923 = vmatmul.mubr.bf16.gmra.mrb[0].mxu0 %v822
  %v924 = vpop.f32.mrb[0].mxu0
  %v925 = vadd.f32 0.0, %v924
  %v926 = vpop.f32.mrb[0].mxu0
  %v927 = vadd.f32 0.0, %v926
  %v928 = vpop.f32.mrb[0].mxu0
  %v929 = vadd.f32 0.0, %v928
  %v930 = vpop.f32.mrb[0].mxu0
  %v931 = vadd.f32 0.0, %v930
  %932 = vdwg.mxu0
  %v933 = vadd.f32 %v839, %v882
  %v934 = vadd.f32 %v840, %v884
  %v935 = vadd.f32 %v841, %v925
  %v936 = vadd.f32 %v842, %v927
  %v937 = vadd.f32 %v843, %v886
  %v938 = vadd.f32 %v844, %v888
  %v939 = vadd.f32 %v845, %v929
  %v940 = vadd.f32 %v846, %v931
  %v941 = vxor.u32 %v933, 2147483648
  %v942 = vxor.u32 %v934, 2147483648
  %v943 = vxor.u32 %v935, 2147483648
  %v944 = vxor.u32 %v937, 2147483648
  %v945 = vxor.u32 %v938, 2147483648
  %v946 = vxor.u32 %v939, 2147483648
  %v947 = vmul.f32 %v941, 1.442695
  %v948 = vpow.pop %v947
  %v949 = vmul.f32 %v942, 1.442695
  %v950 = vpow.pop %v949
  %v951 = vmul.f32 %v943, 1.442695
  %v952 = vpow.pop %v951
  %v953 = vmul.f32 %v944, 1.442695
  %v954 = vpow.pop %v953
  %v955 = vmul.f32 %v945, 1.442695
  %v956 = vpow.pop %v955
  %v957 = vmul.f32 %v946, 1.442695
  %v958 = vpow.pop %v957
  %v959 = vadd.f32 %v948, 1.0
  %v960 = vadd.f32 %v950, 1.0
  %v961 = vadd.f32 %v952, 1.0
  %v962 = vadd.f32 %v954, 1.0
  %v963 = vadd.f32 %v956, 1.0
  %v964 = vadd.f32 %v958, 1.0
  %v965 = vrcp.pop %v959
  %v966 = vmul.f32 1.0, %v965
  %v967 = vrcp.pop %v960
  %v968 = vmul.f32 1.0, %v967
  %v969 = vrcp.pop %v961
  %v970 = vmul.f32 1.0, %v969
  %v971 = vrcp.pop %v962
  %v972 = vmul.f32 1.0, %v971
  %v973 = vrcp.pop %v963
  %v974 = vmul.f32 1.0, %v973
  %v975 = vrcp.pop %v964
  %v976 = vmul.f32 1.0, %v975
  %v977 = vtanh.pop %v936
  %v978 = vtanh.pop %v940
  %v979 = vmul.f32 %v968, %v820
  %v980 = vmul.f32 %v974, %v821
  %v981 = vmul.f32 %v966, %v977
  %v982 = vmul.f32 %v972, %v978
  %v983 = vadd.f32 %v979, %v981
  %v984 = vadd.f32 %v980, %v982
  %v985 = vtanh.pop %v983
  %v986 = vtanh.pop %v984
  %v987 = vmul.f32 %v970, %v985
  %v988 = vmul.f32 %v976, %v986
  %vm989 = vcmp.gt.s32.totalorder %v30, 1
  %vm990 = vcmp.gt.s32.totalorder %v31, 1
  %v991 = vsel %vm989, 1, 0
  %v992 = vsel %vm990, 1, 0
  %993 = vset.pattern.permute.xlu0 0
  %994 = vperm.xlu0 %993, %v991
  %v995 = vpop.permute.xlu0 %994
  %996 = vset.pattern.permute.xlu0 0
  %997 = vperm.xlu0 %996, %v992
  %v998 = vpop.permute.xlu0 %997
  %vm999 = vcmp.eq.s32.totalorder %v995, 1
  %vm1000 = vcmp.eq.s32.totalorder %v998, 1
  %v1001 = vsel %vm999, %v987, %v818
  %v1002 = vsel %vm1000, %v988, %v819
  %v1003 = vsel %vm999, %v983, %v820
  %v1004 = vsel %vm1000, %v984, %v821
  %v1005 = vpack.c.bf16 %v1002, %v1001
  %s1006 = scalar_lea.vmem [#allocation2], 8
  %1007 = vst [vmem:[%s1006] sm:$0xff] %v1005
  %s1008 = smul.u32 2, 4
  %s1009 = smul.addr %s1008, 8
  %s1010 = scalar_lea.vmem [#allocation3], %s1009
  %v1011 = vld [vmem:[%s1010] sm:$0xff]
  %v1012 = vld [vmem:[%s1010 + $0x8] sm:$0xff]
  %v1013 = vld [vmem:[%s1010 + $0x10] sm:$0xff]
  %v1014 = vld [vmem:[%s1010 + $0x18] sm:$0xff]
  %v1015 = vunpack.c.l.bf16 %v1011
  %v1016 = vunpack.c.l.bf16 %v1012
  %v1017 = vunpack.c.l.bf16 %v1013
  %v1018 = vunpack.c.l.bf16 %v1014
  %v1019 = vunpack.c.h.bf16 %v1011
  %v1020 = vunpack.c.h.bf16 %v1012
  %v1021 = vunpack.c.h.bf16 %v1013
  %v1022 = vunpack.c.h.bf16 %v1014
  %v1023 = vadd.f32 %v1015, %v479
  %v1024 = vadd.f32 %v1016, %v483
  %v1025 = vadd.f32 %v1017, %v487
  %v1026 = vadd.f32 %v1018, %v491
  %v1027 = vadd.f32 %v1019, %v479
  %v1028 = vadd.f32 %v1020, %v483
  %v1029 = vadd.f32 %v1021, %v487
  %v1030 = vadd.f32 %v1022, %v491
  %1031 = vmatprep.subr.bf16.mxu0 %v601
  %1032 = vmatpush1.bf16.msra.mxu0 %v600
  %1033 = vmatprep.subr.bf16.mxu0 %v605
  %1034 = vmatpush1.bf16.msra.mxu0 %v604
  %1035 = vmatprep.subr.bf16.mxu0 %v609
  %1036 = vmatpush1.bf16.msra.mxu0 %v608
  %1037 = vmatprep.subr.bf16.mxu0 %v613
  %1038 = vmatpush1.bf16.msra.mxu0 %v612
  %1039 = vmatprep.subr.bf16.mxu0 %v617
  %1040 = vmatpush1.bf16.msra.mxu0 %v616
  %1041 = vmatprep.subr.bf16.mxu0 %v621
  %1042 = vmatpush1.bf16.msra.mxu0 %v620
  %1043 = vmatprep.subr.bf16.mxu0 %v625
  %1044 = vmatpush1.bf16.msra.mxu0 %v624
  %1045 = vmatprep.subr.bf16.mxu0 %v629
  %1046 = vmatpush1.bf16.msra.mxu0 %v628
  %1047 = vmatprep.subr.bf16.mxu0 0
  %1048 = vmatpush1.bf16.msra.mxu0 0
  %1049 = vmatprep.subr.bf16.mxu0 0
  %1050 = vmatpush1.bf16.msra.mxu0 0
  %1051 = vmatprep.subr.bf16.mxu0 0
  %1052 = vmatpush1.bf16.msra.mxu0 0
  %1053 = vmatprep.subr.bf16.mxu0 0
  %1054 = vmatpush1.bf16.msra.mxu0 0
  %1055 = vmatprep.subr.bf16.mxu0 0
  %1056 = vmatpush1.bf16.msra.mxu0 0
  %1057 = vmatprep.subr.bf16.mxu0 0
  %1058 = vmatpush1.bf16.msra.mxu0 0
  %1059 = vmatprep.subr.bf16.mxu0 0
  %1060 = vmatpush1.bf16.msra.mxu0 0
  %1061 = vmatprep.subr.bf16.mxu0 0
  %1062 = vmatpush1.bf16.msra.mxu0 0
  %1063 = vmatprep.mubr.bf16.mxu0 0
  %1064 = vmatmul.mubr.bf16.gmra.mrb[0].mxu0 %v1005
  %v1065 = vpop.f32.mrb[0].mxu0
  %v1066 = vadd.f32 0.0, %v1065
  %v1067 = vpop.f32.mrb[0].mxu0
  %v1068 = vadd.f32 0.0, %v1067
  %v1069 = vpop.f32.mrb[0].mxu0
  %v1070 = vadd.f32 0.0, %v1069
  %v1071 = vpop.f32.mrb[0].mxu0
  %v1072 = vadd.f32 0.0, %v1071
  %1073 = vdwg.mxu0
  %1074 = vmatprep.subr.bf16.mxu0 %v603
  %1075 = vmatpush1.bf16.msra.mxu0 %v602
  %1076 = vmatprep.subr.bf16.mxu0 %v607
  %1077 = vmatpush1.bf16.msra.mxu0 %v606
  %1078 = vmatprep.subr.bf16.mxu0 %v611
  %1079 = vmatpush1.bf16.msra.mxu0 %v610
  %1080 = vmatprep.subr.bf16.mxu0 %v615
  %1081 = vmatpush1.bf16.msra.mxu0 %v614
  %1082 = vmatprep.subr.bf16.mxu0 %v619
  %1083 = vmatpush1.bf16.msra.mxu0 %v618
  %1084 = vmatprep.subr.bf16.mxu0 %v623
  %1085 = vmatpush1.bf16.msra.mxu0 %v622
  %1086 = vmatprep.subr.bf16.mxu0 %v627
  %1087 = vmatpush1.bf16.msra.mxu0 %v626
  %1088 = vmatprep.subr.bf16.mxu0 %v631
  %1089 = vmatpush1.bf16.msra.mxu0 %v630
  %1090 = vmatprep.subr.bf16.mxu0 0
  %1091 = vmatpush1.bf16.msra.mxu0 0
  %1092 = vmatprep.subr.bf16.mxu0 0
  %1093 = vmatpush1.bf16.msra.mxu0 0
  %1094 = vmatprep.subr.bf16.mxu0 0
  %1095 = vmatpush1.bf16.msra.mxu0 0
  %1096 = vmatprep.subr.bf16.mxu0 0
  %1097 = vmatpush1.bf16.msra.mxu0 0
  %1098 = vmatprep.subr.bf16.mxu0 0
  %1099 = vmatpush1.bf16.msra.mxu0 0
  %1100 = vmatprep.subr.bf16.mxu0 0
  %1101 = vmatpush1.bf16.msra.mxu0 0
  %1102 = vmatprep.subr.bf16.mxu0 0
  %1103 = vmatpush1.bf16.msra.mxu0 0
  %1104 = vmatprep.subr.bf16.mxu0 0
  %1105 = vmatpush1.bf16.msra.mxu0 0
  %1106 = vmatprep.mubr.bf16.mxu0 0
  %1107 = vmatmul.mubr.bf16.gmra.mrb[0].mxu0 %v1005
  %v1108 = vpop.f32.mrb[0].mxu0
  %v1109 = vadd.f32 0.0, %v1108
  %v1110 = vpop.f32.mrb[0].mxu0
  %v1111 = vadd.f32 0.0, %v1110
  %v1112 = vpop.f32.mrb[0].mxu0
  %v1113 = vadd.f32 0.0, %v1112
  %v1114 = vpop.f32.mrb[0].mxu0
  %v1115 = vadd.f32 0.0, %v1114
  %1116 = vdwg.mxu0
  %v1117 = vadd.f32 %v1023, %v1066
  %v1118 = vadd.f32 %v1024, %v1068
  %v1119 = vadd.f32 %v1025, %v1109
  %v1120 = vadd.f32 %v1026, %v1111
  %v1121 = vadd.f32 %v1027, %v1070
  %v1122 = vadd.f32 %v1028, %v1072
  %v1123 = vadd.f32 %v1029, %v1113
  %v1124 = vadd.f32 %v1030, %v1115
  %v1125 = vxor.u32 %v1117, 2147483648
  %v1126 = vxor.u32 %v1118, 2147483648
  %v1127 = vxor.u32 %v1119, 2147483648
  %v1128 = vxor.u32 %v1121, 2147483648
  %v1129 = vxor.u32 %v1122, 2147483648
  %v1130 = vxor.u32 %v1123, 2147483648
  %v1131 = vmul.f32 %v1125, 1.442695
  %v1132 = vpow.pop %v1131
  %v1133 = vmul.f32 %v1126, 1.442695
  %v1134 = vpow.pop %v1133
  %v1135 = vmul.f32 %v1127, 1.442695
  %v1136 = vpow.pop %v1135
  %v1137 = vmul.f32 %v1128, 1.442695
  %v1138 = vpow.pop %v1137
  %v1139 = vmul.f32 %v1129, 1.442695
  %v1140 = vpow.pop %v1139
  %v1141 = vmul.f32 %v1130, 1.442695
  %v1142 = vpow.pop %v1141
  %v1143 = vadd.f32 %v1132, 1.0
  %v1144 = vadd.f32 %v1134, 1.0
  %v1145 = vadd.f32 %v1136, 1.0
  %v1146 = vadd.f32 %v1138, 1.0
  %v1147 = vadd.f32 %v1140, 1.0
  %v1148 = vadd.f32 %v1142, 1.0
  %v1149 = vrcp.pop %v1143
  %v1150 = vmul.f32 1.0, %v1149
  %v1151 = vrcp.pop %v1144
  %v1152 = vmul.f32 1.0, %v1151
  %v1153 = vrcp.pop %v1145
  %v1154 = vmul.f32 1.0, %v1153
  %v1155 = vrcp.pop %v1146
  %v1156 = vmul.f32 1.0, %v1155
  %v1157 = vrcp.pop %v1147
  %v1158 = vmul.f32 1.0, %v1157
  %v1159 = vrcp.pop %v1148
  %v1160 = vmul.f32 1.0, %v1159
  %v1161 = vtanh.pop %v1120
  %v1162 = vtanh.pop %v1124
  %v1163 = vmul.f32 %v1152, %v1003
  %v1164 = vmul.f32 %v1158, %v1004
  %v1165 = vmul.f32 %v1150, %v1161
  %v1166 = vmul.f32 %v1156, %v1162
  %v1167 = vadd.f32 %v1163, %v1165
  %v1168 = vadd.f32 %v1164, %v1166
  %v1169 = vtanh.pop %v1167
  %v1170 = vtanh.pop %v1168
  %v1171 = vmul.f32 %v1154, %v1169
  %v1172 = vmul.f32 %v1160, %v1170
  %vm1173 = vcmp.gt.s32.totalorder %v30, 2
  %vm1174 = vcmp.gt.s32.totalorder %v31, 2
  %v1175 = vsel %vm1173, 1, 0
  %v1176 = vsel %vm1174, 1, 0
  %1177 = vset.pattern.permute.xlu0 0
  %1178 = vperm.xlu0 %1177, %v1175
  %v1179 = vpop.permute.xlu0 %1178
  %1180 = vset.pattern.permute.xlu0 0
  %1181 = vperm.xlu0 %1180, %v1176
  %v1182 = vpop.permute.xlu0 %1181
  %vm1183 = vcmp.eq.s32.totalorder %v1179, 1
  %vm1184 = vcmp.eq.s32.totalorder %v1182, 1
  %v1185 = vsel %vm1183, %v1171, %v1001
  %v1186 = vsel %vm1184, %v1172, %v1002
  %v1187 = vsel %vm1183, %v1167, %v1003
  %v1188 = vsel %vm1184, %v1168, %v1004
  %v1189 = vpack.c.bf16 %v1186, %v1185
  %s1190 = scalar_lea.vmem [#allocation2], 16
  %1191 = vst [vmem:[%s1190] sm:$0xff] %v1189
  %s1192 = smul.u32 3, 4
  %s1193 = smul.addr %s1192, 8
  %s1194 = scalar_lea.vmem [#allocation3], %s1193
  %v1195 = vld [vmem:[%s1194] sm:$0xff]
  %v1196 = vld [vmem:[%s1194 + $0x8] sm:$0xff]
  %v1197 = vld [vmem:[%s1194 + $0x10] sm:$0xff]
  %v1198 = vld [vmem:[%s1194 + $0x18] sm:$0xff]
  %v1199 = vunpack.c.l.bf16 %v1195
  %v1200 = vunpack.c.l.bf16 %v1196
  %v1201 = vunpack.c.l.bf16 %v1197
  %v1202 = vunpack.c.l.bf16 %v1198
  %v1203 = vunpack.c.h.bf16 %v1195
  %v1204 = vunpack.c.h.bf16 %v1196
  %v1205 = vunpack.c.h.bf16 %v1197
  %v1206 = vunpack.c.h.bf16 %v1198
  %v1207 = vadd.f32 %v1199, %v479
  %v1208 = vadd.f32 %v1200, %v483
  %v1209 = vadd.f32 %v1201, %v487
  %v1210 = vadd.f32 %v1202, %v491
  %v1211 = vadd.f32 %v1203, %v479
  %v1212 = vadd.f32 %v1204, %v483
  %v1213 = vadd.f32 %v1205, %v487
  %v1214 = vadd.f32 %v1206, %v491
  %1215 = vmatprep.subr.bf16.mxu0 %v601
  %1216 = vmatpush1.bf16.msra.mxu0 %v600
  %1217 = vmatprep.subr.bf16.mxu0 %v605
  %1218 = vmatpush1.bf16.msra.mxu0 %v604
  %1219 = vmatprep.subr.bf16.mxu0 %v609
  %1220 = vmatpush1.bf16.msra.mxu0 %v608
  %1221 = vmatprep.subr.bf16.mxu0 %v613
  %1222 = vmatpush1.bf16.msra.mxu0 %v612
  %1223 = vmatprep.subr.bf16.mxu0 %v617
  %1224 = vmatpush1.bf16.msra.mxu0 %v616
  %1225 = vmatprep.subr.bf16.mxu0 %v621
  %1226 = vmatpush1.bf16.msra.mxu0 %v620
  %1227 = vmatprep.subr.bf16.mxu0 %v625
  %1228 = vmatpush1.bf16.msra.mxu0 %v624
  %1229 = vmatprep.subr.bf16.mxu0 %v629
  %1230 = vmatpush1.bf16.msra.mxu0 %v628
  %1231 = vmatprep.subr.bf16.mxu0 0
  %1232 = vmatpush1.bf16.msra.mxu0 0
  %1233 = vmatprep.subr.bf16.mxu0 0
  %1234 = vmatpush1.bf16.msra.mxu0 0
  %1235 = vmatprep.subr.bf16.mxu0 0
  %1236 = vmatpush1.bf16.msra.mxu0 0
  %1237 = vmatprep.subr.bf16.mxu0 0
  %1238 = vmatpush1.bf16.msra.mxu0 0
  %1239 = vmatprep.subr.bf16.mxu0 0
  %1240 = vmatpush1.bf16.msra.mxu0 0
  %1241 = vmatprep.subr.bf16.mxu0 0
  %1242 = vmatpush1.bf16.msra.mxu0 0
  %1243 = vmatprep.subr.bf16.mxu0 0
  %1244 = vmatpush1.bf16.msra.mxu0 0
  %1245 = vmatprep.subr.bf16.mxu0 0
  %1246 = vmatpush1.bf16.msra.mxu0 0
  %1247 = vmatprep.mubr.bf16.mxu0 0
  %1248 = vmatmul.mubr.bf16.gmra.mrb[0].mxu0 %v1189
  %v1249 = vpop.f32.mrb[0].mxu0
  %v1250 = vadd.f32 0.0, %v1249
  %v1251 = vpop.f32.mrb[0].mxu0
  %v1252 = vadd.f32 0.0, %v1251
  %v1253 = vpop.f32.mrb[0].mxu0
  %v1254 = vadd.f32 0.0, %v1253
  %v1255 = vpop.f32.mrb[0].mxu0
  %v1256 = vadd.f32 0.0, %v1255
  %1257 = vdwg.mxu0
  %1258 = vmatprep.subr.bf16.mxu0 %v603
  %1259 = vmatpush1.bf16.msra.mxu0 %v602
  %1260 = vmatprep.subr.bf16.mxu0 %v607
  %1261 = vmatpush1.bf16.msra.mxu0 %v606
  %1262 = vmatprep.subr.bf16.mxu0 %v611
  %1263 = vmatpush1.bf16.msra.mxu0 %v610
  %1264 = vmatprep.subr.bf16.mxu0 %v615
  %1265 = vmatpush1.bf16.msra.mxu0 %v614
  %1266 = vmatprep.subr.bf16.mxu0 %v619
  %1267 = vmatpush1.bf16.msra.mxu0 %v618
  %1268 = vmatprep.subr.bf16.mxu0 %v623
  %1269 = vmatpush1.bf16.msra.mxu0 %v622
  %1270 = vmatprep.subr.bf16.mxu0 %v627
  %1271 = vmatpush1.bf16.msra.mxu0 %v626
  %1272 = vmatprep.subr.bf16.mxu0 %v631
  %1273 = vmatpush1.bf16.msra.mxu0 %v630
  %1274 = vmatprep.subr.bf16.mxu0 0
  %1275 = vmatpush1.bf16.msra.mxu0 0
  %1276 = vmatprep.subr.bf16.mxu0 0
  %1277 = vmatpush1.bf16.msra.mxu0 0
  %1278 = vmatprep.subr.bf16.mxu0 0
  %1279 = vmatpush1.bf16.msra.mxu0 0
  %1280 = vmatprep.subr.bf16.mxu0 0
  %1281 = vmatpush1.bf16.msra.mxu0 0
  %1282 = vmatprep.subr.bf16.mxu0 0
  %1283 = vmatpush1.bf16.msra.mxu0 0
  %1284 = vmatprep.subr.bf16.mxu0 0
  %1285 = vmatpush1.bf16.msra.mxu0 0
  %1286 = vmatprep.subr.bf16.mxu0 0
  %1287 = vmatpush1.bf16.msra.mxu0 0
  %1288 = vmatprep.subr.bf16.mxu0 0
  %1289 = vmatpush1.bf16.msra.mxu0 0
  %1290 = vmatprep.mubr.bf16.mxu0 0
  %1291 = vmatmul.mubr.bf16.gmra.mrb[0].mxu0 %v1189
  %v1292 = vpop.f32.mrb[0].mxu0
  %v1293 = vadd.f32 0.0, %v1292
  %v1294 = vpop.f32.mrb[0].mxu0
  %v1295 = vadd.f32 0.0, %v1294
  %v1296 = vpop.f32.mrb[0].mxu0
  %v1297 = vadd.f32 0.0, %v1296
  %v1298 = vpop.f32.mrb[0].mxu0
  %v1299 = vadd.f32 0.0, %v1298
  %1300 = vdwg.mxu0
  %v1301 = vadd.f32 %v1207, %v1250
  %v1302 = vadd.f32 %v1208, %v1252
  %v1303 = vadd.f32 %v1209, %v1293
  %v1304 = vadd.f32 %v1210, %v1295
  %v1305 = vadd.f32 %v1211, %v1254
  %v1306 = vadd.f32 %v1212, %v1256
  %v1307 = vadd.f32 %v1213, %v1297
  %v1308 = vadd.f32 %v1214, %v1299
  %v1309 = vxor.u32 %v1301, 2147483648
  %v1310 = vxor.u32 %v1302, 2147483648
  %v1311 = vxor.u32 %v1303, 2147483648
  %v1312 = vxor.u32 %v1305, 2147483648
  %v1313 = vxor.u32 %v1306, 2147483648
  %v1314 = vxor.u32 %v1307, 2147483648
  %v1315 = vmul.f32 %v1309, 1.442695
  %v1316 = vpow.pop %v1315
  %v1317 = vmul.f32 %v1310, 1.442695
  %v1318 = vpow.pop %v1317
  %v1319 = vmul.f32 %v1311, 1.442695
  %v1320 = vpow.pop %v1319
  %v1321 = vmul.f32 %v1312, 1.442695
  %v1322 = vpow.pop %v1321
  %v1323 = vmul.f32 %v1313, 1.442695
  %v1324 = vpow.pop %v1323
  %v1325 = vmul.f32 %v1314, 1.442695
  %v1326 = vpow.pop %v1325
  %v1327 = vadd.f32 %v1316, 1.0
  %v1328 = vadd.f32 %v1318, 1.0
  %v1329 = vadd.f32 %v1320, 1.0
  %v1330 = vadd.f32 %v1322, 1.0
  %v1331 = vadd.f32 %v1324, 1.0
  %v1332 = vadd.f32 %v1326, 1.0
  %v1333 = vrcp.pop %v1327
  %v1334 = vmul.f32 1.0, %v1333
  %v1335 = vrcp.pop %v1328
  %v1336 = vmul.f32 1.0, %v1335
  %v1337 = vrcp.pop %v1329
  %v1338 = vmul.f32 1.0, %v1337
  %v1339 = vrcp.pop %v1330
  %v1340 = vmul.f32 1.0, %v1339
  %v1341 = vrcp.pop %v1331
  %v1342 = vmul.f32 1.0, %v1341
  %v1343 = vrcp.pop %v1332
  %v1344 = vmul.f32 1.0, %v1343
  %v1345 = vtanh.pop %v1304
  %v1346 = vtanh.pop %v1308
  %v1347 = vmul.f32 %v1336, %v1187
  %v1348 = vmul.f32 %v1342, %v1188
  %v1349 = vmul.f32 %v1334, %v1345
  %v1350 = vmul.f32 %v1340, %v1346
  %v1351 = vadd.f32 %v1347, %v1349
  %v1352 = vadd.f32 %v1348, %v1350
  %v1353 = vtanh.pop %v1351
  %v1354 = vtanh.pop %v1352
  %v1355 = vmul.f32 %v1338, %v1353
  %v1356 = vmul.f32 %v1344, %v1354
  %vm1357 = vcmp.gt.s32.totalorder %v30, 3
  %vm1358 = vcmp.gt.s32.totalorder %v31, 3
  %v1359 = vsel %vm1357, 1, 0
  %v1360 = vsel %vm1358, 1, 0
  %1361 = vset.pattern.permute.xlu0 0
  %1362 = vperm.xlu0 %1361, %v1359
  %v1363 = vpop.permute.xlu0 %1362
  %1364 = vset.pattern.permute.xlu0 0
  %1365 = vperm.xlu0 %1364, %v1360
  %v1366 = vpop.permute.xlu0 %1365
  %vm1367 = vcmp.eq.s32.totalorder %v1363, 1
  %vm1368 = vcmp.eq.s32.totalorder %v1366, 1
  %v1369 = vsel %vm1367, %v1355, %v1185
  %v1370 = vsel %vm1368, %v1356, %v1186
  %v1371 = vsel %vm1367, %v1351, %v1187
  %v1372 = vsel %vm1368, %v1352, %v1188
  %v1373 = vpack.c.bf16 %v1370, %v1369
  %s1374 = scalar_lea.vmem [#allocation2], 24
  %1375 = vst [vmem:[%s1374] sm:$0xff] %v1373
  %s1376 = smul.u32 4, 4
  %s1377 = smul.addr %s1376, 8
  %s1378 = scalar_lea.vmem [#allocation3], %s1377
  %v1379 = vld [vmem:[%s1378] sm:$0xff]
  %v1380 = vld [vmem:[%s1378 + $0x8] sm:$0xff]
  %v1381 = vld [vmem:[%s1378 + $0x10] sm:$0xff]
  %v1382 = vld [vmem:[%s1378 + $0x18] sm:$0xff]
  %v1383 = vunpack.c.l.bf16 %v1379
  %v1384 = vunpack.c.l.bf16 %v1380
  %v1385 = vunpack.c.l.bf16 %v1381
  %v1386 = vunpack.c.l.bf16 %v1382
  %v1387 = vunpack.c.h.bf16 %v1379
  %v1388 = vunpack.c.h.bf16 %v1380
  %v1389 = vunpack.c.h.bf16 %v1381
  %v1390 = vunpack.c.h.bf16 %v1382
  %v1391 = vadd.f32 %v1383, %v479
  %v1392 = vadd.f32 %v1384, %v483
  %v1393 = vadd.f32 %v1385, %v487
  %v1394 = vadd.f32 %v1386, %v491
  %v1395 = vadd.f32 %v1387, %v479
  %v1396 = vadd.f32 %v1388, %v483
  %v1397 = vadd.f32 %v1389, %v487
  %v1398 = vadd.f32 %v1390, %v491
  %1399 = vmatprep.subr.bf16.mxu0 %v601
  %1400 = vmatpush1.bf16.msra.mxu0 %v600
  %1401 = vmatprep.subr.bf16.mxu0 %v605
  %1402 = vmatpush1.bf16.msra.mxu0 %v604
  %1403 = vmatprep.subr.bf16.mxu0 %v609
  %1404 = vmatpush1.bf16.msra.mxu0 %v608
  %1405 = vmatprep.subr.bf16.mxu0 %v613
  %1406 = vmatpush1.bf16.msra.mxu0 %v612
  %1407 = vmatprep.subr.bf16.mxu0 %v617
  %1408 = vmatpush1.bf16.msra.mxu0 %v616
  %1409 = vmatprep.subr.bf16.mxu0 %v621
  %1410 = vmatpush1.bf16.msra.mxu0 %v620
  %1411 = vmatprep.subr.bf16.mxu0 %v625
  %1412 = vmatpush1.bf16.msra.mxu0 %v624
  %1413 = vmatprep.subr.bf16.mxu0 %v629
  %1414 = vmatpush1.bf16.msra.mxu0 %v628
  %1415 = vmatprep.subr.bf16.mxu0 0
  %1416 = vmatpush1.bf16.msra.mxu0 0
  %1417 = vmatprep.subr.bf16.mxu0 0
  %1418 = vmatpush1.bf16.msra.mxu0 0
  %1419 = vmatprep.subr.bf16.mxu0 0
  %1420 = vmatpush1.bf16.msra.mxu0 0
  %1421 = vmatprep.subr.bf16.mxu0 0
  %1422 = vmatpush1.bf16.msra.mxu0 0
  %1423 = vmatprep.subr.bf16.mxu0 0
  %1424 = vmatpush1.bf16.msra.mxu0 0
  %1425 = vmatprep.subr.bf16.mxu0 0
  %1426 = vmatpush1.bf16.msra.mxu0 0
  %1427 = vmatprep.subr.bf16.mxu0 0
  %1428 = vmatpush1.bf16.msra.mxu0 0
  %1429 = vmatprep.subr.bf16.mxu0 0
  %1430 = vmatpush1.bf16.msra.mxu0 0
  %1431 = vmatprep.mubr.bf16.mxu0 0
  %1432 = vmatmul.mubr.bf16.gmra.mrb[0].mxu0 %v1373
  %v1433 = vpop.f32.mrb[0].mxu0
  %v1434 = vadd.f32 0.0, %v1433
  %v1435 = vpop.f32.mrb[0].mxu0
  %v1436 = vadd.f32 0.0, %v1435
  %v1437 = vpop.f32.mrb[0].mxu0
  %v1438 = vadd.f32 0.0, %v1437
  %v1439 = vpop.f32.mrb[0].mxu0
  %v1440 = vadd.f32 0.0, %v1439
  %1441 = vdwg.mxu0
  %1442 = vmatprep.subr.bf16.mxu0 %v603
  %1443 = vmatpush1.bf16.msra.mxu0 %v602
  %1444 = vmatprep.subr.bf16.mxu0 %v607
  %1445 = vmatpush1.bf16.msra.mxu0 %v606
  %1446 = vmatprep.subr.bf16.mxu0 %v611
  %1447 = vmatpush1.bf16.msra.mxu0 %v610
  %1448 = vmatprep.subr.bf16.mxu0 %v615
  %1449 = vmatpush1.bf16.msra.mxu0 %v614
  %1450 = vmatprep.subr.bf16.mxu0 %v619
  %1451 = vmatpush1.bf16.msra.mxu0 %v618
  %1452 = vmatprep.subr.bf16.mxu0 %v623
  %1453 = vmatpush1.bf16.msra.mxu0 %v622
  %1454 = vmatprep.subr.bf16.mxu0 %v627
  %1455 = vmatpush1.bf16.msra.mxu0 %v626
  %1456 = vmatprep.subr.bf16.mxu0 %v631
  %1457 = vmatpush1.bf16.msra.mxu0 %v630
  %1458 = vmatprep.subr.bf16.mxu0 0
  %1459 = vmatpush1.bf16.msra.mxu0 0
  %1460 = vmatprep.subr.bf16.mxu0 0
  %1461 = vmatpush1.bf16.msra.mxu0 0
  %1462 = vmatprep.subr.bf16.mxu0 0
  %1463 = vmatpush1.bf16.msra.mxu0 0
  %1464 = vmatprep.subr.bf16.mxu0 0
  %1465 = vmatpush1.bf16.msra.mxu0 0
  %1466 = vmatprep.subr.bf16.mxu0 0
  %1467 = vmatpush1.bf16.msra.mxu0 0
  %1468 = vmatprep.subr.bf16.mxu0 0
  %1469 = vmatpush1.bf16.msra.mxu0 0
  %1470 = vmatprep.subr.bf16.mxu0 0
  %1471 = vmatpush1.bf16.msra.mxu0 0
  %1472 = vmatprep.subr.bf16.mxu0 0
  %1473 = vmatpush1.bf16.msra.mxu0 0
  %1474 = vmatprep.mubr.bf16.mxu0 0
  %1475 = vmatmul.mubr.bf16.gmra.mrb[0].mxu0 %v1373
  %v1476 = vpop.f32.mrb[0].mxu0
  %v1477 = vadd.f32 0.0, %v1476
  %v1478 = vpop.f32.mrb[0].mxu0
  %v1479 = vadd.f32 0.0, %v1478
  %v1480 = vpop.f32.mrb[0].mxu0
  %v1481 = vadd.f32 0.0, %v1480
  %v1482 = vpop.f32.mrb[0].mxu0
  %v1483 = vadd.f32 0.0, %v1482
  %1484 = vdwg.mxu0
  %v1485 = vadd.f32 %v1391, %v1434
  %v1486 = vadd.f32 %v1392, %v1436
  %v1487 = vadd.f32 %v1393, %v1477
  %v1488 = vadd.f32 %v1394, %v1479
  %v1489 = vadd.f32 %v1395, %v1438
  %v1490 = vadd.f32 %v1396, %v1440
  %v1491 = vadd.f32 %v1397, %v1481
  %v1492 = vadd.f32 %v1398, %v1483
  %v1493 = vxor.u32 %v1485, 2147483648
  %v1494 = vxor.u32 %v1486, 2147483648
  %v1495 = vxor.u32 %v1487, 2147483648
  %v1496 = vxor.u32 %v1489, 2147483648
  %v1497 = vxor.u32 %v1490, 2147483648
  %v1498 = vxor.u32 %v1491, 2147483648
  %v1499 = vmul.f32 %v1493, 1.442695
  %v1500 = vpow.pop %v1499
  %v1501 = vmul.f32 %v1494, 1.442695
  %v1502 = vpow.pop %v1501
  %v1503 = vmul.f32 %v1495, 1.442695
  %v1504 = vpow.pop %v1503
  %v1505 = vmul.f32 %v1496, 1.442695
  %v1506 = vpow.pop %v1505
  %v1507 = vmul.f32 %v1497, 1.442695
  %v1508 = vpow.pop %v1507
  %v1509 = vmul.f32 %v1498, 1.442695
  %v1510 = vpow.pop %v1509
  %v1511 = vadd.f32 %v1500, 1.0
  %v1512 = vadd.f32 %v1502, 1.0
  %v1513 = vadd.f32 %v1504, 1.0
  %v1514 = vadd.f32 %v1506, 1.0
  %v1515 = vadd.f32 %v1508, 1.0
  %v1516 = vadd.f32 %v1510, 1.0
  %v1517 = vrcp.pop %v1511
  %v1518 = vmul.f32 1.0, %v1517
  %v1519 = vrcp.pop %v1512
  %v1520 = vmul.f32 1.0, %v1519
  %v1521 = vrcp.pop %v1513
  %v1522 = vmul.f32 1.0, %v1521
  %v1523 = vrcp.pop %v1514
  %v1524 = vmul.f32 1.0, %v1523
  %v1525 = vrcp.pop %v1515
  %v1526 = vmul.f32 1.0, %v1525
  %v1527 = vrcp.pop %v1516
  %v1528 = vmul.f32 1.0, %v1527
  %v1529 = vtanh.pop %v1488
  %v1530 = vtanh.pop %v1492
  %v1531 = vmul.f32 %v1520, %v1371
  %v1532 = vmul.f32 %v1526, %v1372
  %v1533 = vmul.f32 %v1518, %v1529
  %v1534 = vmul.f32 %v1524, %v1530
  %v1535 = vadd.f32 %v1531, %v1533
  %v1536 = vadd.f32 %v1532, %v1534
  %v1537 = vtanh.pop %v1535
  %v1538 = vtanh.pop %v1536
  %v1539 = vmul.f32 %v1522, %v1537
  %v1540 = vmul.f32 %v1528, %v1538
  %vm1541 = vcmp.gt.s32.totalorder %v30, 4
  %vm1542 = vcmp.gt.s32.totalorder %v31, 4
  %v1543 = vsel %vm1541, 1, 0
  %v1544 = vsel %vm1542, 1, 0
  %1545 = vset.pattern.permute.xlu0 0
  %1546 = vperm.xlu0 %1545, %v1543
  %v1547 = vpop.permute.xlu0 %1546
  %1548 = vset.pattern.permute.xlu0 0
  %1549 = vperm.xlu0 %1548, %v1544
  %v1550 = vpop.permute.xlu0 %1549
  %vm1551 = vcmp.eq.s32.totalorder %v1547, 1
  %vm1552 = vcmp.eq.s32.totalorder %v1550, 1
  %v1553 = vsel %vm1551, %v1539, %v1369
  %v1554 = vsel %vm1552, %v1540, %v1370
  %v1555 = vsel %vm1551, %v1535, %v1371
  %v1556 = vsel %vm1552, %v1536, %v1372
  %v1557 = vpack.c.bf16 %v1554, %v1553
  %s1558 = scalar_lea.vmem [#allocation2], 32
  %1559 = vst [vmem:[%s1558] sm:$0xff] %v1557
  %s1560 = smul.u32 5, 4
  %s1561 = smul.addr %s1560, 8
  %s1562 = scalar_lea.vmem [#allocation3], %s1561
  %v1563 = vld [vmem:[%s1562] sm:$0xff]
  %v1564 = vld [vmem:[%s1562 + $0x8] sm:$0xff]
  %v1565 = vld [vmem:[%s1562 + $0x10] sm:$0xff]
  %v1566 = vld [vmem:[%s1562 + $0x18] sm:$0xff]
  %v1567 = vunpack.c.l.bf16 %v1563
  %v1568 = vunpack.c.l.bf16 %v1564
  %v1569 = vunpack.c.l.bf16 %v1565
  %v1570 = vunpack.c.l.bf16 %v1566
  %v1571 = vunpack.c.h.bf16 %v1563
  %v1572 = vunpack.c.h.bf16 %v1564
  %v1573 = vunpack.c.h.bf16 %v1565
  %v1574 = vunpack.c.h.bf16 %v1566
  %v1575 = vadd.f32 %v1567, %v479
  %v1576 = vadd.f32 %v1568, %v483
  %v1577 = vadd.f32 %v1569, %v487
  %v1578 = vadd.f32 %v1570, %v491
  %v1579 = vadd.f32 %v1571, %v479
  %v1580 = vadd.f32 %v1572, %v483
  %v1581 = vadd.f32 %v1573, %v487
  %v1582 = vadd.f32 %v1574, %v491
  %1583 = vmatprep.subr.bf16.mxu0 %v601
  %1584 = vmatpush1.bf16.msra.mxu0 %v600
  %1585 = vmatprep.subr.bf16.mxu0 %v605
  %1586 = vmatpush1.bf16.msra.mxu0 %v604
  %1587 = vmatprep.subr.bf16.mxu0 %v609
  %1588 = vmatpush1.bf16.msra.mxu0 %v608
  %1589 = vmatprep.subr.bf16.mxu0 %v613
  %1590 = vmatpush1.bf16.msra.mxu0 %v612
  %1591 = vmatprep.subr.bf16.mxu0 %v617
  %1592 = vmatpush1.bf16.msra.mxu0 %v616
  %1593 = vmatprep.subr.bf16.mxu0 %v621
  %1594 = vmatpush1.bf16.msra.mxu0 %v620
  %1595 = vmatprep.subr.bf16.mxu0 %v625
  %1596 = vmatpush1.bf16.msra.mxu0 %v624
  %1597 = vmatprep.subr.bf16.mxu0 %v629
  %1598 = vmatpush1.bf16.msra.mxu0 %v628
  %1599 = vmatprep.subr.bf16.mxu0 0
  %1600 = vmatpush1.bf16.msra.mxu0 0
  %1601 = vmatprep.subr.bf16.mxu0 0
  %1602 = vmatpush1.bf16.msra.mxu0 0
  %1603 = vmatprep.subr.bf16.mxu0 0
  %1604 = vmatpush1.bf16.msra.mxu0 0
  %1605 = vmatprep.subr.bf16.mxu0 0
  %1606 = vmatpush1.bf16.msra.mxu0 0
  %1607 = vmatprep.subr.bf16.mxu0 0
  %1608 = vmatpush1.bf16.msra.mxu0 0
  %1609 = vmatprep.subr.bf16.mxu0 0
  %1610 = vmatpush1.bf16.msra.mxu0 0
  %1611 = vmatprep.subr.bf16.mxu0 0
  %1612 = vmatpush1.bf16.msra.mxu0 0
  %1613 = vmatprep.subr.bf16.mxu0 0
  %1614 = vmatpush1.bf16.msra.mxu0 0
  %1615 = vmatprep.mubr.bf16.mxu0 0
  %1616 = vmatmul.mubr.bf16.gmra.mrb[0].mxu0 %v1557
  %v1617 = vpop.f32.mrb[0].mxu0
  %v1618 = vadd.f32 0.0, %v1617
  %v1619 = vpop.f32.mrb[0].mxu0
  %v1620 = vadd.f32 0.0, %v1619
  %v1621 = vpop.f32.mrb[0].mxu0
  %v1622 = vadd.f32 0.0, %v1621
  %v1623 = vpop.f32.mrb[0].mxu0
  %v1624 = vadd.f32 0.0, %v1623
  %1625 = vdwg.mxu0
  %1626 = vmatprep.subr.bf16.mxu0 %v603
  %1627 = vmatpush1.bf16.msra.mxu0 %v602
  %1628 = vmatprep.subr.bf16.mxu0 %v607
  %1629 = vmatpush1.bf16.msra.mxu0 %v606
  %1630 = vmatprep.subr.bf16.mxu0 %v611
  %1631 = vmatpush1.bf16.msra.mxu0 %v610
  %1632 = vmatprep.subr.bf16.mxu0 %v615
  %1633 = vmatpush1.bf16.msra.mxu0 %v614
  %1634 = vmatprep.subr.bf16.mxu0 %v619
  %1635 = vmatpush1.bf16.msra.mxu0 %v618
  %1636 = vmatprep.subr.bf16.mxu0 %v623
  %1637 = vmatpush1.bf16.msra.mxu0 %v622
  %1638 = vmatprep.subr.bf16.mxu0 %v627
  %1639 = vmatpush1.bf16.msra.mxu0 %v626
  %1640 = vmatprep.subr.bf16.mxu0 %v631
  %1641 = vmatpush1.bf16.msra.mxu0 %v630
  %1642 = vmatprep.subr.bf16.mxu0 0
  %1643 = vmatpush1.bf16.msra.mxu0 0
  %1644 = vmatprep.subr.bf16.mxu0 0
  %1645 = vmatpush1.bf16.msra.mxu0 0
  %1646 = vmatprep.subr.bf16.mxu0 0
  %1647 = vmatpush1.bf16.msra.mxu0 0
  %1648 = vmatprep.subr.bf16.mxu0 0
  %1649 = vmatpush1.bf16.msra.mxu0 0
  %1650 = vmatprep.subr.bf16.mxu0 0
  %1651 = vmatpush1.bf16.msra.mxu0 0
  %1652 = vmatprep.subr.bf16.mxu0 0
  %1653 = vmatpush1.bf16.msra.mxu0 0
  %1654 = vmatprep.subr.bf16.mxu0 0
  %1655 = vmatpush1.bf16.msra.mxu0 0
  %1656 = vmatprep.subr.bf16.mxu0 0
  %1657 = vmatpush1.bf16.msra.mxu0 0
  %1658 = vmatprep.mubr.bf16.mxu0 0
  %1659 = vmatmul.mubr.bf16.gmra.mrb[0].mxu0 %v1557
  %v1660 = vpop.f32.mrb[0].mxu0
  %v1661 = vadd.f32 0.0, %v1660
  %v1662 = vpop.f32.mrb[0].mxu0
  %v1663 = vadd.f32 0.0, %v1662
  %v1664 = vpop.f32.mrb[0].mxu0
  %v1665 = vadd.f32 0.0, %v1664
  %v1666 = vpop.f32.mrb[0].mxu0
  %v1667 = vadd.f32 0.0, %v1666
  %1668 = vdwg.mxu0
  %v1669 = vadd.f32 %v1575, %v1618
  %v1670 = vadd.f32 %v1576, %v1620
  %v1671 = vadd.f32 %v1577, %v1661
  %v1672 = vadd.f32 %v1578, %v1663
  %v1673 = vadd.f32 %v1579, %v1622
  %v1674 = vadd.f32 %v1580, %v1624
  %v1675 = vadd.f32 %v1581, %v1665
  %v1676 = vadd.f32 %v1582, %v1667
  %v1677 = vxor.u32 %v1669, 2147483648
  %v1678 = vxor.u32 %v1670, 2147483648
  %v1679 = vxor.u32 %v1671, 2147483648
  %v1680 = vxor.u32 %v1673, 2147483648
  %v1681 = vxor.u32 %v1674, 2147483648
  %v1682 = vxor.u32 %v1675, 2147483648
  %v1683 = vmul.f32 %v1677, 1.442695
  %v1684 = vpow.pop %v1683
  %v1685 = vmul.f32 %v1678, 1.442695
  %v1686 = vpow.pop %v1685
  %v1687 = vmul.f32 %v1679, 1.442695
  %v1688 = vpow.pop %v1687
  %v1689 = vmul.f32 %v1680, 1.442695
  %v1690 = vpow.pop %v1689
  %v1691 = vmul.f32 %v1681, 1.442695
  %v1692 = vpow.pop %v1691
  %v1693 = vmul.f32 %v1682, 1.442695
  %v1694 = vpow.pop %v1693
  %v1695 = vadd.f32 %v1684, 1.0
  %v1696 = vadd.f32 %v1686, 1.0
  %v1697 = vadd.f32 %v1688, 1.0
  %v1698 = vadd.f32 %v1690, 1.0
  %v1699 = vadd.f32 %v1692, 1.0
  %v1700 = vadd.f32 %v1694, 1.0
  %v1701 = vrcp.pop %v1695
  %v1702 = vmul.f32 1.0, %v1701
  %v1703 = vrcp.pop %v1696
  %v1704 = vmul.f32 1.0, %v1703
  %v1705 = vrcp.pop %v1697
  %v1706 = vmul.f32 1.0, %v1705
  %v1707 = vrcp.pop %v1698
  %v1708 = vmul.f32 1.0, %v1707
  %v1709 = vrcp.pop %v1699
  %v1710 = vmul.f32 1.0, %v1709
  %v1711 = vrcp.pop %v1700
  %v1712 = vmul.f32 1.0, %v1711
  %v1713 = vtanh.pop %v1672
  %v1714 = vtanh.pop %v1676
  %v1715 = vmul.f32 %v1704, %v1555
  %v1716 = vmul.f32 %v1710, %v1556
  %v1717 = vmul.f32 %v1702, %v1713
  %v1718 = vmul.f32 %v1708, %v1714
  %v1719 = vadd.f32 %v1715, %v1717
  %v1720 = vadd.f32 %v1716, %v1718
  %v1721 = vtanh.pop %v1719
  %v1722 = vtanh.pop %v1720
  %v1723 = vmul.f32 %v1706, %v1721
  %v1724 = vmul.f32 %v1712, %v1722
  %vm1725 = vcmp.gt.s32.totalorder %v30, 5
  %vm1726 = vcmp.gt.s32.totalorder %v31, 5
  %v1727 = vsel %vm1725, 1, 0
  %v1728 = vsel %vm1726, 1, 0
  %1729 = vset.pattern.permute.xlu0 0
  %1730 = vperm.xlu0 %1729, %v1727
  %v1731 = vpop.permute.xlu0 %1730
  %1732 = vset.pattern.permute.xlu0 0
  %1733 = vperm.xlu0 %1732, %v1728
  %v1734 = vpop.permute.xlu0 %1733
  %vm1735 = vcmp.eq.s32.totalorder %v1731, 1
  %vm1736 = vcmp.eq.s32.totalorder %v1734, 1
  %v1737 = vsel %vm1735, %v1723, %v1553
  %v1738 = vsel %vm1736, %v1724, %v1554
  %v1739 = vsel %vm1735, %v1719, %v1555
  %v1740 = vsel %vm1736, %v1720, %v1556
  %v1741 = vpack.c.bf16 %v1738, %v1737
  %s1742 = scalar_lea.vmem [#allocation2], 40
  %1743 = vst [vmem:[%s1742] sm:$0xff] %v1741
  %s1744 = smul.u32 6, 4
  %s1745 = smul.addr %s1744, 8
  %s1746 = scalar_lea.vmem [#allocation3], %s1745
  %v1747 = vld [vmem:[%s1746] sm:$0xff]
  %v1748 = vld [vmem:[%s1746 + $0x8] sm:$0xff]
  %v1749 = vld [vmem:[%s1746 + $0x10] sm:$0xff]
  %v1750 = vld [vmem:[%s1746 + $0x18] sm:$0xff]
  %v1751 = vunpack.c.l.bf16 %v1747
  %v1752 = vunpack.c.l.bf16 %v1748
  %v1753 = vunpack.c.l.bf16 %v1749
  %v1754 = vunpack.c.l.bf16 %v1750
  %v1755 = vunpack.c.h.bf16 %v1747
  %v1756 = vunpack.c.h.bf16 %v1748
  %v1757 = vunpack.c.h.bf16 %v1749
  %v1758 = vunpack.c.h.bf16 %v1750
  %v1759 = vadd.f32 %v1751, %v479
  %v1760 = vadd.f32 %v1752, %v483
  %v1761 = vadd.f32 %v1753, %v487
  %v1762 = vadd.f32 %v1754, %v491
  %v1763 = vadd.f32 %v1755, %v479
  %v1764 = vadd.f32 %v1756, %v483
  %v1765 = vadd.f32 %v1757, %v487
  %v1766 = vadd.f32 %v1758, %v491
  %1767 = vmatprep.subr.bf16.mxu0 %v601
  %1768 = vmatpush1.bf16.msra.mxu0 %v600
  %1769 = vmatprep.subr.bf16.mxu0 %v605
  %1770 = vmatpush1.bf16.msra.mxu0 %v604
  %1771 = vmatprep.subr.bf16.mxu0 %v609
  %1772 = vmatpush1.bf16.msra.mxu0 %v608
  %1773 = vmatprep.subr.bf16.mxu0 %v613
  %1774 = vmatpush1.bf16.msra.mxu0 %v612
  %1775 = vmatprep.subr.bf16.mxu0 %v617
  %1776 = vmatpush1.bf16.msra.mxu0 %v616
  %1777 = vmatprep.subr.bf16.mxu0 %v621
  %1778 = vmatpush1.bf16.msra.mxu0 %v620
  %1779 = vmatprep.subr.bf16.mxu0 %v625
  %1780 = vmatpush1.bf16.msra.mxu0 %v624
  %1781 = vmatprep.subr.bf16.mxu0 %v629
  %1782 = vmatpush1.bf16.msra.mxu0 %v628
  %1783 = vmatprep.subr.bf16.mxu0 0
  %1784 = vmatpush1.bf16.msra.mxu0 0
  %1785 = vmatprep.subr.bf16.mxu0 0
  %1786 = vmatpush1.bf16.msra.mxu0 0
  %1787 = vmatprep.subr.bf16.mxu0 0
  %1788 = vmatpush1.bf16.msra.mxu0 0
  %1789 = vmatprep.subr.bf16.mxu0 0
  %1790 = vmatpush1.bf16.msra.mxu0 0
  %1791 = vmatprep.subr.bf16.mxu0 0
  %1792 = vmatpush1.bf16.msra.mxu0 0
  %1793 = vmatprep.subr.bf16.mxu0 0
  %1794 = vmatpush1.bf16.msra.mxu0 0
  %1795 = vmatprep.subr.bf16.mxu0 0
  %1796 = vmatpush1.bf16.msra.mxu0 0
  %1797 = vmatprep.subr.bf16.mxu0 0
  %1798 = vmatpush1.bf16.msra.mxu0 0
  %1799 = vmatprep.mubr.bf16.mxu0 0
  %1800 = vmatmul.mubr.bf16.gmra.mrb[0].mxu0 %v1741
  %v1801 = vpop.f32.mrb[0].mxu0
  %v1802 = vadd.f32 0.0, %v1801
  %v1803 = vpop.f32.mrb[0].mxu0
  %v1804 = vadd.f32 0.0, %v1803
  %v1805 = vpop.f32.mrb[0].mxu0
  %v1806 = vadd.f32 0.0, %v1805
  %v1807 = vpop.f32.mrb[0].mxu0
  %v1808 = vadd.f32 0.0, %v1807
  %1809 = vdwg.mxu0
  %1810 = vmatprep.subr.bf16.mxu0 %v603
  %1811 = vmatpush1.bf16.msra.mxu0 %v602
  %1812 = vmatprep.subr.bf16.mxu0 %v607
  %1813 = vmatpush1.bf16.msra.mxu0 %v606
  %1814 = vmatprep.subr.bf16.mxu0 %v611
  %1815 = vmatpush1.bf16.msra.mxu0 %v610
  %1816 = vmatprep.subr.bf16.mxu0 %v615
  %1817 = vmatpush1.bf16.msra.mxu0 %v614
  %1818 = vmatprep.subr.bf16.mxu0 %v619
  %1819 = vmatpush1.bf16.msra.mxu0 %v618
  %1820 = vmatprep.subr.bf16.mxu0 %v623
  %1821 = vmatpush1.bf16.msra.mxu0 %v622
  %1822 = vmatprep.subr.bf16.mxu0 %v627
  %1823 = vmatpush1.bf16.msra.mxu0 %v626
  %1824 = vmatprep.subr.bf16.mxu0 %v631
  %1825 = vmatpush1.bf16.msra.mxu0 %v630
  %1826 = vmatprep.subr.bf16.mxu0 0
  %1827 = vmatpush1.bf16.msra.mxu0 0
  %1828 = vmatprep.subr.bf16.mxu0 0
  %1829 = vmatpush1.bf16.msra.mxu0 0
  %1830 = vmatprep.subr.bf16.mxu0 0
  %1831 = vmatpush1.bf16.msra.mxu0 0
  %1832 = vmatprep.subr.bf16.mxu0 0
  %1833 = vmatpush1.bf16.msra.mxu0 0
  %1834 = vmatprep.subr.bf16.mxu0 0
  %1835 = vmatpush1.bf16.msra.mxu0 0
  %1836 = vmatprep.subr.bf16.mxu0 0
  %1837 = vmatpush1.bf16.msra.mxu0 0
  %1838 = vmatprep.subr.bf16.mxu0 0
  %1839 = vmatpush1.bf16.msra.mxu0 0
  %1840 = vmatprep.subr.bf16.mxu0 0
  %1841 = vmatpush1.bf16.msra.mxu0 0
  %1842 = vmatprep.mubr.bf16.mxu0 0
  %1843 = vmatmul.mubr.bf16.gmra.mrb[0].mxu0 %v1741
  %v1844 = vpop.f32.mrb[0].mxu0
  %v1845 = vadd.f32 0.0, %v1844
  %v1846 = vpop.f32.mrb[0].mxu0
  %v1847 = vadd.f32 0.0, %v1846
  %v1848 = vpop.f32.mrb[0].mxu0
  %v1849 = vadd.f32 0.0, %v1848
  %v1850 = vpop.f32.mrb[0].mxu0
  %v1851 = vadd.f32 0.0, %v1850
  %1852 = vdwg.mxu0
  %v1853 = vadd.f32 %v1759, %v1802
  %v1854 = vadd.f32 %v1760, %v1804
  %v1855 = vadd.f32 %v1761, %v1845
  %v1856 = vadd.f32 %v1762, %v1847
  %v1857 = vadd.f32 %v1763, %v1806
  %v1858 = vadd.f32 %v1764, %v1808
  %v1859 = vadd.f32 %v1765, %v1849
  %v1860 = vadd.f32 %v1766, %v1851
  %v1861 = vxor.u32 %v1853, 2147483648
  %v1862 = vxor.u32 %v1854, 2147483648
  %v1863 = vxor.u32 %v1855, 2147483648
  %v1864 = vxor.u32 %v1857, 2147483648
  %v1865 = vxor.u32 %v1858, 2147483648
  %v1866 = vxor.u32 %v1859, 2147483648
  %v1867 = vmul.f32 %v1861, 1.442695
  %v1868 = vpow.pop %v1867
  %v1869 = vmul.f32 %v1862, 1.442695
  %v1870 = vpow.pop %v1869
  %v1871 = vmul.f32 %v1863, 1.442695
  %v1872 = vpow.pop %v1871
  %v1873 = vmul.f32 %v1864, 1.442695
  %v1874 = vpow.pop %v1873
  %v1875 = vmul.f32 %v1865, 1.442695
  %v1876 = vpow.pop %v1875
  %v1877 = vmul.f32 %v1866, 1.442695
  %v1878 = vpow.pop %v1877
  %v1879 = vadd.f32 %v1868, 1.0
  %v1880 = vadd.f32 %v1870, 1.0
  %v1881 = vadd.f32 %v1872, 1.0
  %v1882 = vadd.f32 %v1874, 1.0
  %v1883 = vadd.f32 %v1876, 1.0
  %v1884 = vadd.f32 %v1878, 1.0
  %v1885 = vrcp.pop %v1879
  %v1886 = vmul.f32 1.0, %v1885
  %v1887 = vrcp.pop %v1880
  %v1888 = vmul.f32 1.0, %v1887
  %v1889 = vrcp.pop %v1881
  %v1890 = vmul.f32 1.0, %v1889
  %v1891 = vrcp.pop %v1882
  %v1892 = vmul.f32 1.0, %v1891
  %v1893 = vrcp.pop %v1883
  %v1894 = vmul.f32 1.0, %v1893
  %v1895 = vrcp.pop %v1884
  %v1896 = vmul.f32 1.0, %v1895
  %v1897 = vtanh.pop %v1856
  %v1898 = vtanh.pop %v1860
  %v1899 = vmul.f32 %v1888, %v1739
  %v1900 = vmul.f32 %v1894, %v1740
  %v1901 = vmul.f32 %v1886, %v1897
  %v1902 = vmul.f32 %v1892, %v1898
  %v1903 = vadd.f32 %v1899, %v1901
  %v1904 = vadd.f32 %v1900, %v1902
  %v1905 = vtanh.pop %v1903
  %v1906 = vtanh.pop %v1904
  %v1907 = vmul.f32 %v1890, %v1905
  %v1908 = vmul.f32 %v1896, %v1906
  %vm1909 = vcmp.gt.s32.totalorder %v30, 6
  %vm1910 = vcmp.gt.s32.totalorder %v31, 6
  %v1911 = vsel %vm1909, 1, 0
  %v1912 = vsel %vm1910, 1, 0
  %1913 = vset.pattern.permute.xlu0 0
  %1914 = vperm.xlu0 %1913, %v1911
  %v1915 = vpop.permute.xlu0 %1914
  %1916 = vset.pattern.permute.xlu0 0
  %1917 = vperm.xlu0 %1916, %v1912
  %v1918 = vpop.permute.xlu0 %1917
  %vm1919 = vcmp.eq.s32.totalorder %v1915, 1
  %vm1920 = vcmp.eq.s32.totalorder %v1918, 1
  %v1921 = vsel %vm1919, %v1907, %v1737
  %v1922 = vsel %vm1920, %v1908, %v1738
  %v1923 = vsel %vm1919, %v1903, %v1739
  %v1924 = vsel %vm1920, %v1904, %v1740
  %v1925 = vpack.c.bf16 %v1922, %v1921
  %s1926 = scalar_lea.vmem [#allocation2], 48
  %1927 = vst [vmem:[%s1926] sm:$0xff] %v1925
  %s1928 = smul.u32 7, 4
  %s1929 = smul.addr %s1928, 8
  %s1930 = scalar_lea.vmem [#allocation3], %s1929
  %v1931 = vld [vmem:[%s1930] sm:$0xff]
  %v1932 = vld [vmem:[%s1930 + $0x8] sm:$0xff]
  %v1933 = vld [vmem:[%s1930 + $0x10] sm:$0xff]
  %v1934 = vld [vmem:[%s1930 + $0x18] sm:$0xff]
  %v1935 = vunpack.c.l.bf16 %v1931
  %v1936 = vunpack.c.l.bf16 %v1932
  %v1937 = vunpack.c.l.bf16 %v1933
  %v1938 = vunpack.c.l.bf16 %v1934
  %v1939 = vunpack.c.h.bf16 %v1931
  %v1940 = vunpack.c.h.bf16 %v1932
  %v1941 = vunpack.c.h.bf16 %v1933
  %v1942 = vunpack.c.h.bf16 %v1934
  %v1943 = vadd.f32 %v1935, %v479
  %v1944 = vadd.f32 %v1936, %v483
  %v1945 = vadd.f32 %v1937, %v487
  %v1946 = vadd.f32 %v1938, %v491
  %v1947 = vadd.f32 %v1939, %v479
  %v1948 = vadd.f32 %v1940, %v483
  %v1949 = vadd.f32 %v1941, %v487
  %v1950 = vadd.f32 %v1942, %v491
  %1951 = vmatprep.subr.bf16.mxu0 %v601
  %1952 = vmatpush1.bf16.msra.mxu0 %v600
  %1953 = vmatprep.subr.bf16.mxu0 %v605
  %1954 = vmatpush1.bf16.msra.mxu0 %v604
  %1955 = vmatprep.subr.bf16.mxu0 %v609
  %1956 = vmatpush1.bf16.msra.mxu0 %v608
  %1957 = vmatprep.subr.bf16.mxu0 %v613
  %1958 = vmatpush1.bf16.msra.mxu0 %v612
  %1959 = vmatprep.subr.bf16.mxu0 %v617
  %1960 = vmatpush1.bf16.msra.mxu0 %v616
  %1961 = vmatprep.subr.bf16.mxu0 %v621
  %1962 = vmatpush1.bf16.msra.mxu0 %v620
  %1963 = vmatprep.subr.bf16.mxu0 %v625
  %1964 = vmatpush1.bf16.msra.mxu0 %v624
  %1965 = vmatprep.subr.bf16.mxu0 %v629
  %1966 = vmatpush1.bf16.msra.mxu0 %v628
  %1967 = vmatprep.subr.bf16.mxu0 0
  %1968 = vmatpush1.bf16.msra.mxu0 0
  %1969 = vmatprep.subr.bf16.mxu0 0
  %1970 = vmatpush1.bf16.msra.mxu0 0
  %1971 = vmatprep.subr.bf16.mxu0 0
  %1972 = vmatpush1.bf16.msra.mxu0 0
  %1973 = vmatprep.subr.bf16.mxu0 0
  %1974 = vmatpush1.bf16.msra.mxu0 0
  %1975 = vmatprep.subr.bf16.mxu0 0
  %1976 = vmatpush1.bf16.msra.mxu0 0
  %1977 = vmatprep.subr.bf16.mxu0 0
  %1978 = vmatpush1.bf16.msra.mxu0 0
  %1979 = vmatprep.subr.bf16.mxu0 0
  %1980 = vmatpush1.bf16.msra.mxu0 0
  %1981 = vmatprep.subr.bf16.mxu0 0
  %1982 = vmatpush1.bf16.msra.mxu0 0
  %1983 = vmatprep.mubr.bf16.mxu0 0
  %1984 = vmatmul.mubr.bf16.gmra.mrb[0].mxu0 %v1925
  %v1985 = vpop.f32.mrb[0].mxu0
  %v1986 = vadd.f32 0.0, %v1985
  %v1987 = vpop.f32.mrb[0].mxu0
  %v1988 = vadd.f32 0.0, %v1987
  %v1989 = vpop.f32.mrb[0].mxu0
  %v1990 = vadd.f32 0.0, %v1989
  %v1991 = vpop.f32.mrb[0].mxu0
  %v1992 = vadd.f32 0.0, %v1991
  %1993 = vdwg.mxu0
  %1994 = vmatprep.subr.bf16.mxu0 %v603
  %1995 = vmatpush1.bf16.msra.mxu0 %v602
  %1996 = vmatprep.subr.bf16.mxu0 %v607
  %1997 = vmatpush1.bf16.msra.mxu0 %v606
  %1998 = vmatprep.subr.bf16.mxu0 %v611
  %1999 = vmatpush1.bf16.msra.mxu0 %v610
  %2000 = vmatprep.subr.bf16.mxu0 %v615
  %2001 = vmatpush1.bf16.msra.mxu0 %v614
  %2002 = vmatprep.subr.bf16.mxu0 %v619
  %2003 = vmatpush1.bf16.msra.mxu0 %v618
  %2004 = vmatprep.subr.bf16.mxu0 %v623
  %2005 = vmatpush1.bf16.msra.mxu0 %v622
  %2006 = vmatprep.subr.bf16.mxu0 %v627
  %2007 = vmatpush1.bf16.msra.mxu0 %v626
  %2008 = vmatprep.subr.bf16.mxu0 %v631
  %2009 = vmatpush1.bf16.msra.mxu0 %v630
  %2010 = vmatprep.subr.bf16.mxu0 0
  %2011 = vmatpush1.bf16.msra.mxu0 0
  %2012 = vmatprep.subr.bf16.mxu0 0
  %2013 = vmatpush1.bf16.msra.mxu0 0
  %2014 = vmatprep.subr.bf16.mxu0 0
  %2015 = vmatpush1.bf16.msra.mxu0 0
  %2016 = vmatprep.subr.bf16.mxu0 0
  %2017 = vmatpush1.bf16.msra.mxu0 0
  %2018 = vmatprep.subr.bf16.mxu0 0
  %2019 = vmatpush1.bf16.msra.mxu0 0
  %2020 = vmatprep.subr.bf16.mxu0 0
  %2021 = vmatpush1.bf16.msra.mxu0 0
  %2022 = vmatprep.subr.bf16.mxu0 0
  %2023 = vmatpush1.bf16.msra.mxu0 0
  %2024 = vmatprep.subr.bf16.mxu0 0
  %2025 = vmatpush1.bf16.msra.mxu0 0
  %2026 = vmatprep.mubr.bf16.mxu0 0
  %2027 = vmatmul.mubr.bf16.gmra.mrb[0].mxu0 %v1925
  %v2028 = vpop.f32.mrb[0].mxu0
  %v2029 = vadd.f32 0.0, %v2028
  %v2030 = vpop.f32.mrb[0].mxu0
  %v2031 = vadd.f32 0.0, %v2030
  %v2032 = vpop.f32.mrb[0].mxu0
  %v2033 = vadd.f32 0.0, %v2032
  %v2034 = vpop.f32.mrb[0].mxu0
  %v2035 = vadd.f32 0.0, %v2034
  %2036 = vdwg.mxu0
  %v2037 = vadd.f32 %v1943, %v1986
  %v2038 = vadd.f32 %v1944, %v1988
  %v2039 = vadd.f32 %v1945, %v2029
  %v2040 = vadd.f32 %v1946, %v2031
  %v2041 = vadd.f32 %v1947, %v1990
  %v2042 = vadd.f32 %v1948, %v1992
  %v2043 = vadd.f32 %v1949, %v2033
  %v2044 = vadd.f32 %v1950, %v2035
  %v2045 = vxor.u32 %v2037, 2147483648
  %v2046 = vxor.u32 %v2038, 2147483648
  %v2047 = vxor.u32 %v2039, 2147483648
  %v2048 = vxor.u32 %v2041, 2147483648
  %v2049 = vxor.u32 %v2042, 2147483648
  %v2050 = vxor.u32 %v2043, 2147483648
  %v2051 = vmul.f32 %v2045, 1.442695
  %v2052 = vpow.pop %v2051
  %v2053 = vmul.f32 %v2046, 1.442695
  %v2054 = vpow.pop %v2053
  %v2055 = vmul.f32 %v2047, 1.442695
  %v2056 = vpow.pop %v2055
  %v2057 = vmul.f32 %v2048, 1.442695
  %v2058 = vpow.pop %v2057
  %v2059 = vmul.f32 %v2049, 1.442695
  %v2060 = vpow.pop %v2059
  %v2061 = vmul.f32 %v2050, 1.442695
  %v2062 = vpow.pop %v2061
  %v2063 = vadd.f32 %v2052, 1.0
  %v2064 = vadd.f32 %v2054, 1.0
  %v2065 = vadd.f32 %v2056, 1.0
  %v2066 = vadd.f32 %v2058, 1.0
  %v2067 = vadd.f32 %v2060, 1.0
  %v2068 = vadd.f32 %v2062, 1.0
  %v2069 = vrcp.pop %v2063
  %v2070 = vmul.f32 1.0, %v2069
  %v2071 = vrcp.pop %v2064
  %v2072 = vmul.f32 1.0, %v2071
  %v2073 = vrcp.pop %v2065
  %v2074 = vmul.f32 1.0, %v2073
  %v2075 = vrcp.pop %v2066
  %v2076 = vmul.f32 1.0, %v2075
  %v2077 = vrcp.pop %v2067
  %v2078 = vmul.f32 1.0, %v2077
  %v2079 = vrcp.pop %v2068
  %v2080 = vmul.f32 1.0, %v2079
  %v2081 = vtanh.pop %v2040
  %v2082 = vtanh.pop %v2044
  %v2083 = vmul.f32 %v2072, %v1923
  %v2084 = vmul.f32 %v2078, %v1924
  %v2085 = vmul.f32 %v2070, %v2081
  %v2086 = vmul.f32 %v2076, %v2082
  %v2087 = vadd.f32 %v2083, %v2085
  %v2088 = vadd.f32 %v2084, %v2086
  %v2089 = vtanh.pop %v2087
  %v2090 = vtanh.pop %v2088
  %v2091 = vmul.f32 %v2074, %v2089
  %v2092 = vmul.f32 %v2080, %v2090
  %vm2093 = vcmp.gt.s32.totalorder %v30, 7
  %vm2094 = vcmp.gt.s32.totalorder %v31, 7
  %v2095 = vsel %vm2093, 1, 0
  %v2096 = vsel %vm2094, 1, 0
  %2097 = vset.pattern.permute.xlu0 0
  %2098 = vperm.xlu0 %2097, %v2095
  %v2099 = vpop.permute.xlu0 %2098
  %2100 = vset.pattern.permute.xlu0 0
  %2101 = vperm.xlu0 %2100, %v2096
  %v2102 = vpop.permute.xlu0 %2101
  %vm2103 = vcmp.eq.s32.totalorder %v2099, 1
  %vm2104 = vcmp.eq.s32.totalorder %v2102, 1
  %v2105 = vsel %vm2103, %v2091, %v1921
  %v2106 = vsel %vm2104, %v2092, %v1922
  %v2107 = vpack.c.bf16 %v2106, %v2105
  %s2108 = scalar_lea.vmem [#allocation2], 56
  %2109 = vst [vmem:[%s2108] sm:$0xff] %v2107
  %v2110 = vld [vmem:[#allocation2] sm:$0xff]
  %v2111 = vld [vmem:[#allocation2 + $0x8] sm:$0xff]
  %v2112 = vld [vmem:[#allocation2 + $0x10] sm:$0xff]
  %v2113 = vld [vmem:[#allocation2 + $0x18] sm:$0xff]
  %v2114 = vld [vmem:[#allocation2 + $0x20] sm:$0xff]
  %v2115 = vld [vmem:[#allocation2 + $0x28] sm:$0xff]
  %v2116 = vld [vmem:[#allocation2 + $0x30] sm:$0xff]
  %v2117 = vld [vmem:[#allocation2 + $0x38] sm:$0xff]
  %v2118 = vld [vmem:[%s3] sm:$0xff]
  %v2119 = vld [vmem:[%s3 + $0x8] sm:$0xff]
  %v2120 = vld [vmem:[%s3 + $0x10] sm:$0xff]
  %v2121 = vld [vmem:[%s3 + $0x18] sm:$0xff]
  %v2122 = vld [vmem:[%s3 + $0x20] sm:$0xff]
  %v2123 = vld [vmem:[%s3 + $0x28] sm:$0xff]
  %v2124 = vld [vmem:[%s3 + $0x30] sm:$0xff]
  %v2125 = vld [vmem:[%s3 + $0x38] sm:$0xff]
  %v2126 = vld [vmem:[%s3 + $0x40] sm:$0xff]
  %v2127 = vld [vmem:[%s3 + $0x48] sm:$0xff]
  %v2128 = vld [vmem:[%s3 + $0x50] sm:$0xff]
  %v2129 = vld [vmem:[%s3 + $0x58] sm:$0xff]
  %v2130 = vld [vmem:[%s3 + $0x60] sm:$0xff]
  %v2131 = vld [vmem:[%s3 + $0x68] sm:$0xff]
  %v2132 = vld [vmem:[%s3 + $0x70] sm:$0xff]
  %v2133 = vld [vmem:[%s3 + $0x78] sm:$0xff]
  %v2134 = vld [vmem:[%s3 + $0x80] sm:$0xff]
  %v2135 = vld [vmem:[%s3 + $0x88] sm:$0xff]
  %v2136 = vld [vmem:[%s3 + $0x90] sm:$0xff]
  %v2137 = vld [vmem:[%s3 + $0x98] sm:$0xff]
  %v2138 = vld [vmem:[%s3 + $0xa0] sm:$0xff]
  %v2139 = vld [vmem:[%s3 + $0xa8] sm:$0xff]
  %v2140 = vld [vmem:[%s3 + $0xb0] sm:$0xff]
  %v2141 = vld [vmem:[%s3 + $0xb8] sm:$0xff]
  %v2142 = vld [vmem:[%s3 + $0xc0] sm:$0xff]
  %v2143 = vld [vmem:[%s3 + $0xc8] sm:$0xff]
  %v2144 = vld [vmem:[%s3 + $0xd0] sm:$0xff]
  %v2145 = vld [vmem:[%s3 + $0xd8] sm:$0xff]
  %v2146 = vld [vmem:[%s3 + $0xe0] sm:$0xff]
  %v2147 = vld [vmem:[%s3 + $0xe8] sm:$0xff]
  %v2148 = vld [vmem:[%s3 + $0xf0] sm:$0xff]
  %v2149 = vld [vmem:[%s3 + $0xf8] sm:$0xff]
  %v2182 = vunpack.c.l.b16 %v2118
  %v2183 = vunpack.c.h.b16 %v2118
  %v2184 = vunpack.c.l.b16 %v2119
  %v2185 = vunpack.c.h.b16 %v2119
  %v2186 = vunpack.c.l.b16 %v2120
  %v2187 = vunpack.c.h.b16 %v2120
  %v2188 = vunpack.c.l.b16 %v2121
  %v2189 = vunpack.c.h.b16 %v2121
  %v2190 = vunpack.c.l.b16 %v2122
  %v2191 = vunpack.c.h.b16 %v2122
  %v2192 = vunpack.c.l.b16 %v2123
  %v2193 = vunpack.c.h.b16 %v2123
  %v2194 = vunpack.c.l.b16 %v2124
  %v2195 = vunpack.c.h.b16 %v2124
  %v2196 = vunpack.c.l.b16 %v2125
  %v2197 = vunpack.c.h.b16 %v2125
  %v2198 = vunpack.c.l.b16 %v2126
  %v2199 = vunpack.c.h.b16 %v2126
  %v2200 = vunpack.c.l.b16 %v2127
  %v2201 = vunpack.c.h.b16 %v2127
  %v2202 = vunpack.c.l.b16 %v2128
  %v2203 = vunpack.c.h.b16 %v2128
  %v2204 = vunpack.c.l.b16 %v2129
  %v2205 = vunpack.c.h.b16 %v2129
  %v2206 = vunpack.c.l.b16 %v2130
  %v2207 = vunpack.c.h.b16 %v2130
  %v2208 = vunpack.c.l.b16 %v2131
  %v2209 = vunpack.c.h.b16 %v2131
  %v2210 = vunpack.c.l.b16 %v2132
  %v2211 = vunpack.c.h.b16 %v2132
  %v2212 = vunpack.c.l.b16 %v2133
  %v2213 = vunpack.c.h.b16 %v2133
  %v2214 = vunpack.c.l.b16 %v2134
  %v2215 = vunpack.c.h.b16 %v2134
  %v2216 = vunpack.c.l.b16 %v2135
  %v2217 = vunpack.c.h.b16 %v2135
  %v2218 = vunpack.c.l.b16 %v2136
  %v2219 = vunpack.c.h.b16 %v2136
  %v2220 = vunpack.c.l.b16 %v2137
  %v2221 = vunpack.c.h.b16 %v2137
  %v2222 = vunpack.c.l.b16 %v2138
  %v2223 = vunpack.c.h.b16 %v2138
  %v2224 = vunpack.c.l.b16 %v2139
  %v2225 = vunpack.c.h.b16 %v2139
  %v2226 = vunpack.c.l.b16 %v2140
  %v2227 = vunpack.c.h.b16 %v2140
  %v2228 = vunpack.c.l.b16 %v2141
  %v2229 = vunpack.c.h.b16 %v2141
  %v2230 = vunpack.c.l.b16 %v2142
  %v2231 = vunpack.c.h.b16 %v2142
  %v2232 = vunpack.c.l.b16 %v2143
  %v2233 = vunpack.c.h.b16 %v2143
  %v2234 = vunpack.c.l.b16 %v2144
  %v2235 = vunpack.c.h.b16 %v2144
  %v2236 = vunpack.c.l.b16 %v2145
  %v2237 = vunpack.c.h.b16 %v2145
  %v2238 = vunpack.c.l.b16 %v2146
  %v2239 = vunpack.c.h.b16 %v2146
  %v2240 = vunpack.c.l.b16 %v2147
  %v2241 = vunpack.c.h.b16 %v2147
  %v2242 = vunpack.c.l.b16 %v2148
  %v2243 = vunpack.c.h.b16 %v2148
  %v2244 = vunpack.c.l.b16 %v2149
  %v2245 = vunpack.c.h.b16 %v2149
  %v2246 = vpack.c.b16 %v2186, %v2182
  %v2247 = vpack.c.b16 %v2187, %v2183
  %v2248 = vpack.c.b16 %v2188, %v2184
  %v2249 = vpack.c.b16 %v2189, %v2185
  %v2250 = vpack.c.b16 %v2194, %v2190
  %v2251 = vpack.c.b16 %v2195, %v2191
  %v2252 = vpack.c.b16 %v2196, %v2192
  %v2253 = vpack.c.b16 %v2197, %v2193
  %v2254 = vpack.c.b16 %v2202, %v2198
  %v2255 = vpack.c.b16 %v2203, %v2199
  %v2256 = vpack.c.b16 %v2204, %v2200
  %v2257 = vpack.c.b16 %v2205, %v2201
  %v2258 = vpack.c.b16 %v2210, %v2206
  %v2259 = vpack.c.b16 %v2211, %v2207
  %v2260 = vpack.c.b16 %v2212, %v2208
  %v2261 = vpack.c.b16 %v2213, %v2209
  %v2262 = vpack.c.b16 %v2218, %v2214
  %v2263 = vpack.c.b16 %v2219, %v2215
  %v2264 = vpack.c.b16 %v2220, %v2216
  %v2265 = vpack.c.b16 %v2221, %v2217
  %v2266 = vpack.c.b16 %v2226, %v2222
  %v2267 = vpack.c.b16 %v2227, %v2223
  %v2268 = vpack.c.b16 %v2228, %v2224
  %v2269 = vpack.c.b16 %v2229, %v2225
  %v2270 = vpack.c.b16 %v2234, %v2230
  %v2271 = vpack.c.b16 %v2235, %v2231
  %v2272 = vpack.c.b16 %v2236, %v2232
  %v2273 = vpack.c.b16 %v2237, %v2233
  %v2274 = vpack.c.b16 %v2242, %v2238
  %v2275 = vpack.c.b16 %v2243, %v2239
  %v2276 = vpack.c.b16 %v2244, %v2240
  %v2277 = vpack.c.b16 %v2245, %v2241
  %2310 = vmatprep.subr.bf16.mxu0 %v2247
  %2311 = vmatpush1.bf16.msra.mxu0 %v2246
  %2312 = vmatprep.subr.bf16.mxu0 %v2251
  %2313 = vmatpush1.bf16.msra.mxu0 %v2250
  %2314 = vmatprep.subr.bf16.mxu0 %v2255
  %2315 = vmatpush1.bf16.msra.mxu0 %v2254
  %2316 = vmatprep.subr.bf16.mxu0 %v2259
  %2317 = vmatpush1.bf16.msra.mxu0 %v2258
  %2318 = vmatprep.subr.bf16.mxu0 %v2263
  %2319 = vmatpush1.bf16.msra.mxu0 %v2262
  %2320 = vmatprep.subr.bf16.mxu0 %v2267
  %2321 = vmatpush1.bf16.msra.mxu0 %v2266
  %2322 = vmatprep.subr.bf16.mxu0 %v2271
  %2323 = vmatpush1.bf16.msra.mxu0 %v2270
  %2324 = vmatprep.subr.bf16.mxu0 %v2275
  %2325 = vmatpush1.bf16.msra.mxu0 %v2274
  %2326 = vmatprep.subr.bf16.mxu0 0
  %2327 = vmatpush1.bf16.msra.mxu0 0
  %2328 = vmatprep.subr.bf16.mxu0 0
  %2329 = vmatpush1.bf16.msra.mxu0 0
  %2330 = vmatprep.subr.bf16.mxu0 0
  %2331 = vmatpush1.bf16.msra.mxu0 0
  %2332 = vmatprep.subr.bf16.mxu0 0
  %2333 = vmatpush1.bf16.msra.mxu0 0
  %2334 = vmatprep.subr.bf16.mxu0 0
  %2335 = vmatpush1.bf16.msra.mxu0 0
  %2336 = vmatprep.subr.bf16.mxu0 0
  %2337 = vmatpush1.bf16.msra.mxu0 0
  %2338 = vmatprep.subr.bf16.mxu0 0
  %2339 = vmatpush1.bf16.msra.mxu0 0
  %2340 = vmatprep.subr.bf16.mxu0 0
  %2341 = vmatpush1.bf16.msra.mxu0 0
  %2342 = vmatprep.mubr.bf16.mxu0 0
  %2343 = vmatmul.mubr.bf16.gmra.mrb[0].mxu0 %v2110
  %v2344 = vpop.f32.mrb[0].mxu0
  %v2345 = vadd.f32 0.0, %v2344
  %v2346 = vpop.f32.mrb[0].mxu0
  %v2347 = vadd.f32 0.0, %v2346
  %v2348 = vpop.f32.mrb[0].mxu0
  %v2349 = vadd.f32 0.0, %v2348
  %v2350 = vpop.f32.mrb[0].mxu0
  %v2351 = vadd.f32 0.0, %v2350
  %2352 = vmatprep.mubr.bf16.mxu0 0
  %2353 = vmatmul.mubr.bf16.gmra.mrb[0].mxu0 %v2111
  %v2354 = vpop.f32.mrb[0].mxu0
  %v2355 = vadd.f32 0.0, %v2354
  %v2356 = vpop.f32.mrb[0].mxu0
  %v2357 = vadd.f32 0.0, %v2356
  %v2358 = vpop.f32.mrb[0].mxu0
  %v2359 = vadd.f32 0.0, %v2358
  %v2360 = vpop.f32.mrb[0].mxu0
  %v2361 = vadd.f32 0.0, %v2360
  %2362 = vmatprep.mubr.bf16.mxu0 0
  %2363 = vmatmul.mubr.bf16.gmra.mrb[0].mxu0 %v2112
  %v2364 = vpop.f32.mrb[0].mxu0
  %v2365 = vadd.f32 0.0, %v2364
  %v2366 = vpop.f32.mrb[0].mxu0
  %v2367 = vadd.f32 0.0, %v2366
  %v2368 = vpop.f32.mrb[0].mxu0
  %v2369 = vadd.f32 0.0, %v2368
  %v2370 = vpop.f32.mrb[0].mxu0
  %v2371 = vadd.f32 0.0, %v2370
  %2372 = vmatprep.mubr.bf16.mxu0 0
  %2373 = vmatmul.mubr.bf16.gmra.mrb[0].mxu0 %v2113
  %v2374 = vpop.f32.mrb[0].mxu0
  %v2375 = vadd.f32 0.0, %v2374
  %v2376 = vpop.f32.mrb[0].mxu0
  %v2377 = vadd.f32 0.0, %v2376
  %v2378 = vpop.f32.mrb[0].mxu0
  %v2379 = vadd.f32 0.0, %v2378
  %v2380 = vpop.f32.mrb[0].mxu0
  %v2381 = vadd.f32 0.0, %v2380
  %2382 = vmatprep.mubr.bf16.mxu0 0
  %2383 = vmatmul.mubr.bf16.gmra.mrb[0].mxu0 %v2114
  %v2384 = vpop.f32.mrb[0].mxu0
  %v2385 = vadd.f32 0.0, %v2384
  %v2386 = vpop.f32.mrb[0].mxu0
  %v2387 = vadd.f32 0.0, %v2386
  %v2388 = vpop.f32.mrb[0].mxu0
  %v2389 = vadd.f32 0.0, %v2388
  %v2390 = vpop.f32.mrb[0].mxu0
  %v2391 = vadd.f32 0.0, %v2390
  %2392 = vmatprep.mubr.bf16.mxu0 0
  %2393 = vmatmul.mubr.bf16.gmra.mrb[0].mxu0 %v2115
  %v2394 = vpop.f32.mrb[0].mxu0
  %v2395 = vadd.f32 0.0, %v2394
  %v2396 = vpop.f32.mrb[0].mxu0
  %v2397 = vadd.f32 0.0, %v2396
  %v2398 = vpop.f32.mrb[0].mxu0
  %v2399 = vadd.f32 0.0, %v2398
  %v2400 = vpop.f32.mrb[0].mxu0
  %v2401 = vadd.f32 0.0, %v2400
  %2402 = vmatprep.mubr.bf16.mxu0 0
  %2403 = vmatmul.mubr.bf16.gmra.mrb[0].mxu0 %v2116
  %v2404 = vpop.f32.mrb[0].mxu0
  %v2405 = vadd.f32 0.0, %v2404
  %v2406 = vpop.f32.mrb[0].mxu0
  %v2407 = vadd.f32 0.0, %v2406
  %v2408 = vpop.f32.mrb[0].mxu0
  %v2409 = vadd.f32 0.0, %v2408
  %v2410 = vpop.f32.mrb[0].mxu0
  %v2411 = vadd.f32 0.0, %v2410
  %2412 = vmatprep.mubr.bf16.mxu0 0
  %2413 = vmatmul.mubr.bf16.gmra.mrb[0].mxu0 %v2117
  %v2414 = vpop.f32.mrb[0].mxu0
  %v2415 = vadd.f32 0.0, %v2414
  %v2416 = vpop.f32.mrb[0].mxu0
  %v2417 = vadd.f32 0.0, %v2416
  %v2418 = vpop.f32.mrb[0].mxu0
  %v2419 = vadd.f32 0.0, %v2418
  %v2420 = vpop.f32.mrb[0].mxu0
  %v2421 = vadd.f32 0.0, %v2420
  %2422 = vdwg.mxu0
  %2423 = vmatprep.subr.bf16.mxu0 %v2249
  %2424 = vmatpush1.bf16.msra.mxu0 %v2248
  %2425 = vmatprep.subr.bf16.mxu0 %v2253
  %2426 = vmatpush1.bf16.msra.mxu0 %v2252
  %2427 = vmatprep.subr.bf16.mxu0 %v2257
  %2428 = vmatpush1.bf16.msra.mxu0 %v2256
  %2429 = vmatprep.subr.bf16.mxu0 %v2261
  %2430 = vmatpush1.bf16.msra.mxu0 %v2260
  %2431 = vmatprep.subr.bf16.mxu0 %v2265
  %2432 = vmatpush1.bf16.msra.mxu0 %v2264
  %2433 = vmatprep.subr.bf16.mxu0 %v2269
  %2434 = vmatpush1.bf16.msra.mxu0 %v2268
  %2435 = vmatprep.subr.bf16.mxu0 %v2273
  %2436 = vmatpush1.bf16.msra.mxu0 %v2272
  %2437 = vmatprep.subr.bf16.mxu0 %v2277
  %2438 = vmatpush1.bf16.msra.mxu0 %v2276
  %2439 = vmatprep.subr.bf16.mxu0 0
  %2440 = vmatpush1.bf16.msra.mxu0 0
  %2441 = vmatprep.subr.bf16.mxu0 0
  %2442 = vmatpush1.bf16.msra.mxu0 0
  %2443 = vmatprep.subr.bf16.mxu0 0
  %2444 = vmatpush1.bf16.msra.mxu0 0
  %2445 = vmatprep.subr.bf16.mxu0 0
  %2446 = vmatpush1.bf16.msra.mxu0 0
  %2447 = vmatprep.subr.bf16.mxu0 0
  %2448 = vmatpush1.bf16.msra.mxu0 0
  %2449 = vmatprep.subr.bf16.mxu0 0
  %2450 = vmatpush1.bf16.msra.mxu0 0
  %2451 = vmatprep.subr.bf16.mxu0 0
  %2452 = vmatpush1.bf16.msra.mxu0 0
  %2453 = vmatprep.subr.bf16.mxu0 0
  %2454 = vmatpush1.bf16.msra.mxu0 0
  %2455 = vmatprep.mubr.bf16.mxu0 0
  %2456 = vmatmul.mubr.bf16.gmra.mrb[0].mxu0 %v2110
  %v2457 = vpop.f32.mrb[0].mxu0
  %v2458 = vadd.f32 0.0, %v2457
  %v2459 = vpop.f32.mrb[0].mxu0
  %v2460 = vadd.f32 0.0, %v2459
  %v2461 = vpop.f32.mrb[0].mxu0
  %v2462 = vadd.f32 0.0, %v2461
  %v2463 = vpop.f32.mrb[0].mxu0
  %v2464 = vadd.f32 0.0, %v2463
  %2465 = vmatprep.mubr.bf16.mxu0 0
  %2466 = vmatmul.mubr.bf16.gmra.mrb[0].mxu0 %v2111
  %v2467 = vpop.f32.mrb[0].mxu0
  %v2468 = vadd.f32 0.0, %v2467
  %v2469 = vpop.f32.mrb[0].mxu0
  %v2470 = vadd.f32 0.0, %v2469
  %v2471 = vpop.f32.mrb[0].mxu0
  %v2472 = vadd.f32 0.0, %v2471
  %v2473 = vpop.f32.mrb[0].mxu0
  %v2474 = vadd.f32 0.0, %v2473
  %2475 = vmatprep.mubr.bf16.mxu0 0
  %2476 = vmatmul.mubr.bf16.gmra.mrb[0].mxu0 %v2112
  %v2477 = vpop.f32.mrb[0].mxu0
  %v2478 = vadd.f32 0.0, %v2477
  %v2479 = vpop.f32.mrb[0].mxu0
  %v2480 = vadd.f32 0.0, %v2479
  %v2481 = vpop.f32.mrb[0].mxu0
  %v2482 = vadd.f32 0.0, %v2481
  %v2483 = vpop.f32.mrb[0].mxu0
  %v2484 = vadd.f32 0.0, %v2483
  %2485 = vmatprep.mubr.bf16.mxu0 0
  %2486 = vmatmul.mubr.bf16.gmra.mrb[0].mxu0 %v2113
  %v2487 = vpop.f32.mrb[0].mxu0
  %v2488 = vadd.f32 0.0, %v2487
  %v2489 = vpop.f32.mrb[0].mxu0
  %v2490 = vadd.f32 0.0, %v2489
  %v2491 = vpop.f32.mrb[0].mxu0
  %v2492 = vadd.f32 0.0, %v2491
  %v2493 = vpop.f32.mrb[0].mxu0
  %v2494 = vadd.f32 0.0, %v2493
  %2495 = vmatprep.mubr.bf16.mxu0 0
  %2496 = vmatmul.mubr.bf16.gmra.mrb[0].mxu0 %v2114
  %v2497 = vpop.f32.mrb[0].mxu0
  %v2498 = vadd.f32 0.0, %v2497
  %v2499 = vpop.f32.mrb[0].mxu0
  %v2500 = vadd.f32 0.0, %v2499
  %v2501 = vpop.f32.mrb[0].mxu0
  %v2502 = vadd.f32 0.0, %v2501
  %v2503 = vpop.f32.mrb[0].mxu0
  %v2504 = vadd.f32 0.0, %v2503
  %2505 = vmatprep.mubr.bf16.mxu0 0
  %2506 = vmatmul.mubr.bf16.gmra.mrb[0].mxu0 %v2115
  %v2507 = vpop.f32.mrb[0].mxu0
  %v2508 = vadd.f32 0.0, %v2507
  %v2509 = vpop.f32.mrb[0].mxu0
  %v2510 = vadd.f32 0.0, %v2509
  %v2511 = vpop.f32.mrb[0].mxu0
  %v2512 = vadd.f32 0.0, %v2511
  %v2513 = vpop.f32.mrb[0].mxu0
  %v2514 = vadd.f32 0.0, %v2513
  %2515 = vmatprep.mubr.bf16.mxu0 0
  %2516 = vmatmul.mubr.bf16.gmra.mrb[0].mxu0 %v2116
  %v2517 = vpop.f32.mrb[0].mxu0
  %v2518 = vadd.f32 0.0, %v2517
  %v2519 = vpop.f32.mrb[0].mxu0
  %v2520 = vadd.f32 0.0, %v2519
  %v2521 = vpop.f32.mrb[0].mxu0
  %v2522 = vadd.f32 0.0, %v2521
  %v2523 = vpop.f32.mrb[0].mxu0
  %v2524 = vadd.f32 0.0, %v2523
  %2525 = vmatprep.mubr.bf16.mxu0 0
  %2526 = vmatmul.mubr.bf16.gmra.mrb[0].mxu0 %v2117
  %v2527 = vpop.f32.mrb[0].mxu0
  %v2528 = vadd.f32 0.0, %v2527
  %v2529 = vpop.f32.mrb[0].mxu0
  %v2530 = vadd.f32 0.0, %v2529
  %v2531 = vpop.f32.mrb[0].mxu0
  %v2532 = vadd.f32 0.0, %v2531
  %v2533 = vpop.f32.mrb[0].mxu0
  %v2534 = vadd.f32 0.0, %v2533
  %2535 = vdwg.mxu0
  %v2536 = vpack.c.bf16 %v2349, %v2345
  %v2537 = vpack.c.bf16 %v2351, %v2347
  %v2538 = vpack.c.bf16 %v2462, %v2458
  %v2539 = vpack.c.bf16 %v2464, %v2460
  %v2540 = vpack.c.bf16 %v2359, %v2355
  %v2541 = vpack.c.bf16 %v2361, %v2357
  %v2542 = vpack.c.bf16 %v2472, %v2468
  %v2543 = vpack.c.bf16 %v2474, %v2470
  %v2544 = vpack.c.bf16 %v2369, %v2365
  %v2545 = vpack.c.bf16 %v2371, %v2367
  %v2546 = vpack.c.bf16 %v2482, %v2478
  %v2547 = vpack.c.bf16 %v2484, %v2480
  %v2548 = vpack.c.bf16 %v2379, %v2375
  %v2549 = vpack.c.bf16 %v2381, %v2377
  %v2550 = vpack.c.bf16 %v2492, %v2488
  %v2551 = vpack.c.bf16 %v2494, %v2490
  %v2552 = vpack.c.bf16 %v2389, %v2385
  %v2553 = vpack.c.bf16 %v2391, %v2387
  %v2554 = vpack.c.bf16 %v2502, %v2498
  %v2555 = vpack.c.bf16 %v2504, %v2500
  %v2556 = vpack.c.bf16 %v2399, %v2395
  %v2557 = vpack.c.bf16 %v2401, %v2397
  %v2558 = vpack.c.bf16 %v2512, %v2508
  %v2559 = vpack.c.bf16 %v2514, %v2510
  %v2560 = vpack.c.bf16 %v2409, %v2405
  %v2561 = vpack.c.bf16 %v2411, %v2407
  %v2562 = vpack.c.bf16 %v2522, %v2518
  %v2563 = vpack.c.bf16 %v2524, %v2520
  %v2564 = vpack.c.bf16 %v2419, %v2415
  %v2565 = vpack.c.bf16 %v2421, %v2417
  %v2566 = vpack.c.bf16 %v2532, %v2528
  %v2567 = vpack.c.bf16 %v2534, %v2530
  %2568 = vst [vmem:[#allocation3] sm:$0xff] %v2536
  %2569 = vst [vmem:[#allocation3 + $0x8] sm:$0xff] %v2537
  %2570 = vst [vmem:[#allocation3 + $0x10] sm:$0xff] %v2538
  %2571 = vst [vmem:[#allocation3 + $0x18] sm:$0xff] %v2539
  %2572 = vst [vmem:[#allocation3 + $0x20] sm:$0xff] %v2540
  %2573 = vst [vmem:[#allocation3 + $0x28] sm:$0xff] %v2541
  %2574 = vst [vmem:[#allocation3 + $0x30] sm:$0xff] %v2542
  %2575 = vst [vmem:[#allocation3 + $0x38] sm:$0xff] %v2543
  %2576 = vst [vmem:[#allocation3 + $0x40] sm:$0xff] %v2544
  %2577 = vst [vmem:[#allocation3 + $0x48] sm:$0xff] %v2545
  %2578 = vst [vmem:[#allocation3 + $0x50] sm:$0xff] %v2546
  %2579 = vst [vmem:[#allocation3 + $0x58] sm:$0xff] %v2547
  %2580 = vst [vmem:[#allocation3 + $0x60] sm:$0xff] %v2548
  %2581 = vst [vmem:[#allocation3 + $0x68] sm:$0xff] %v2549
  %2582 = vst [vmem:[#allocation3 + $0x70] sm:$0xff] %v2550
  %2583 = vst [vmem:[#allocation3 + $0x78] sm:$0xff] %v2551
  %2584 = vst [vmem:[#allocation3 + $0x80] sm:$0xff] %v2552
  %2585 = vst [vmem:[#allocation3 + $0x88] sm:$0xff] %v2553
  %2586 = vst [vmem:[#allocation3 + $0x90] sm:$0xff] %v2554
  %2587 = vst [vmem:[#allocation3 + $0x98] sm:$0xff] %v2555
  %2588 = vst [vmem:[#allocation3 + $0xa0] sm:$0xff] %v2556
  %2589 = vst [vmem:[#allocation3 + $0xa8] sm:$0xff] %v2557
  %2590 = vst [vmem:[#allocation3 + $0xb0] sm:$0xff] %v2558
  %2591 = vst [vmem:[#allocation3 + $0xb8] sm:$0xff] %v2559
  %2592 = vst [vmem:[#allocation3 + $0xc0] sm:$0xff] %v2560
  %2593 = vst [vmem:[#allocation3 + $0xc8] sm:$0xff] %v2561
  %2594 = vst [vmem:[#allocation3 + $0xd0] sm:$0xff] %v2562
  %2595 = vst [vmem:[#allocation3 + $0xd8] sm:$0xff] %v2563
  %2596 = vst [vmem:[#allocation3 + $0xe0] sm:$0xff] %v2564
  %2597 = vst [vmem:[#allocation3 + $0xe8] sm:$0xff] %v2565
  %2598 = vst [vmem:[#allocation3 + $0xf0] sm:$0xff] %v2566
  %2599 = vst [vmem:[#allocation3 + $0xf8] sm:$0xff] %v2567
  %s2600 = scalar_lea.vmem %s4, 256
  %v2601 = vld [vmem:[%s2600] sm:$0xff]
  %v2602 = vld [vmem:[%s2600 + $0x8] sm:$0xff]
  %v2603 = vld [vmem:[%s2600 + $0x10] sm:$0xff]
  %v2604 = vld [vmem:[%s2600 + $0x18] sm:$0xff]
  %v2605 = vld [vmem:[%s2600 + $0x20] sm:$0xff]
  %v2606 = vld [vmem:[%s2600 + $0x28] sm:$0xff]
  %v2607 = vld [vmem:[%s2600 + $0x30] sm:$0xff]
  %v2608 = vld [vmem:[%s2600 + $0x38] sm:$0xff]
  %v2609 = vld [vmem:[%s2600 + $0x40] sm:$0xff]
  %v2610 = vld [vmem:[%s2600 + $0x48] sm:$0xff]
  %v2611 = vld [vmem:[%s2600 + $0x50] sm:$0xff]
  %v2612 = vld [vmem:[%s2600 + $0x58] sm:$0xff]
  %v2613 = vld [vmem:[%s2600 + $0x60] sm:$0xff]
  %v2614 = vld [vmem:[%s2600 + $0x68] sm:$0xff]
  %v2615 = vld [vmem:[%s2600 + $0x70] sm:$0xff]
  %v2616 = vld [vmem:[%s2600 + $0x78] sm:$0xff]
  %v2617 = vld [vmem:[%s2600 + $0x80] sm:$0xff]
  %v2618 = vld [vmem:[%s2600 + $0x88] sm:$0xff]
  %v2619 = vld [vmem:[%s2600 + $0x90] sm:$0xff]
  %v2620 = vld [vmem:[%s2600 + $0x98] sm:$0xff]
  %v2621 = vld [vmem:[%s2600 + $0xa0] sm:$0xff]
  %v2622 = vld [vmem:[%s2600 + $0xa8] sm:$0xff]
  %v2623 = vld [vmem:[%s2600 + $0xb0] sm:$0xff]
  %v2624 = vld [vmem:[%s2600 + $0xb8] sm:$0xff]
  %v2625 = vld [vmem:[%s2600 + $0xc0] sm:$0xff]
  %v2626 = vld [vmem:[%s2600 + $0xc8] sm:$0xff]
  %v2627 = vld [vmem:[%s2600 + $0xd0] sm:$0xff]
  %v2628 = vld [vmem:[%s2600 + $0xd8] sm:$0xff]
  %v2629 = vld [vmem:[%s2600 + $0xe0] sm:$0xff]
  %v2630 = vld [vmem:[%s2600 + $0xe8] sm:$0xff]
  %v2631 = vld [vmem:[%s2600 + $0xf0] sm:$0xff]
  %v2632 = vld [vmem:[%s2600 + $0xf8] sm:$0xff]
  %s2633 = scalar_lea.vmem %s5, 4
  %v2634 = vld [vmem:[%s2633] sm:$0xf]
  %v2635 = vld [vmem:[%s462] sm:$0xff]
  %v2636 = vld [vmem:[%s462 + $0x8] sm:$0xff]
  %v2637 = vld [vmem:[%s462 + $0x10] sm:$0xff]
  %v2638 = vld [vmem:[%s462 + $0x18] sm:$0xff]
  %v2639 = vunpack.c.l.bf16 %v2635
  %v2640 = vunpack.c.l.bf16 %v2636
  %v2641 = vunpack.c.l.bf16 %v2637
  %v2642 = vunpack.c.l.bf16 %v2638
  %v2643 = vunpack.c.h.bf16 %v2635
  %v2644 = vunpack.c.h.bf16 %v2636
  %v2645 = vunpack.c.h.bf16 %v2637
  %v2646 = vunpack.c.h.bf16 %v2638
  %v2648 = vlaneseq
  %v2649 = vshrl.u32 %v2648, 7
  %v2650 = vsub.s32 0, %v2649
  %v2651 = vrot.slane %v2634, %v2650
  %v2652 = vlaneseq
  %v2653 = vshrl.u32 %v2652, 7
  %v2654 = vsub.s32 1, %v2653
  %v2655 = vrot.slane %v2634, %v2654
  %v2656 = vlaneseq
  %v2657 = vshrl.u32 %v2656, 7
  %v2658 = vsub.s32 2, %v2657
  %v2659 = vrot.slane %v2634, %v2658
  %v2660 = vlaneseq
  %v2661 = vshrl.u32 %v2660, 7
  %v2662 = vsub.s32 3, %v2661
  %v2663 = vrot.slane %v2634, %v2662
  %v2668 = vadd.f32 %v2639, %v2651
  %v2669 = vadd.f32 %v2640, %v2655
  %v2670 = vadd.f32 %v2641, %v2659
  %v2671 = vadd.f32 %v2642, %v2663
  %v2672 = vadd.f32 %v2643, %v2651
  %v2673 = vadd.f32 %v2644, %v2655
  %v2674 = vadd.f32 %v2645, %v2659
  %v2675 = vadd.f32 %v2646, %v2663
  %v2708 = vunpack.c.l.b16 %v2601
  %v2709 = vunpack.c.h.b16 %v2601
  %v2710 = vunpack.c.l.b16 %v2602
  %v2711 = vunpack.c.h.b16 %v2602
  %v2712 = vunpack.c.l.b16 %v2603
  %v2713 = vunpack.c.h.b16 %v2603
  %v2714 = vunpack.c.l.b16 %v2604
  %v2715 = vunpack.c.h.b16 %v2604
  %v2716 = vunpack.c.l.b16 %v2605
  %v2717 = vunpack.c.h.b16 %v2605
  %v2718 = vunpack.c.l.b16 %v2606
  %v2719 = vunpack.c.h.b16 %v2606
  %v2720 = vunpack.c.l.b16 %v2607
  %v2721 = vunpack.c.h.b16 %v2607
  %v2722 = vunpack.c.l.b16 %v2608
  %v2723 = vunpack.c.h.b16 %v2608
  %v2724 = vunpack.c.l.b16 %v2609
  %v2725 = vunpack.c.h.b16 %v2609
  %v2726 = vunpack.c.l.b16 %v2610
  %v2727 = vunpack.c.h.b16 %v2610
  %v2728 = vunpack.c.l.b16 %v2611
  %v2729 = vunpack.c.h.b16 %v2611
  %v2730 = vunpack.c.l.b16 %v2612
  %v2731 = vunpack.c.h.b16 %v2612
  %v2732 = vunpack.c.l.b16 %v2613
  %v2733 = vunpack.c.h.b16 %v2613
  %v2734 = vunpack.c.l.b16 %v2614
  %v2735 = vunpack.c.h.b16 %v2614
  %v2736 = vunpack.c.l.b16 %v2615
  %v2737 = vunpack.c.h.b16 %v2615
  %v2738 = vunpack.c.l.b16 %v2616
  %v2739 = vunpack.c.h.b16 %v2616
  %v2740 = vunpack.c.l.b16 %v2617
  %v2741 = vunpack.c.h.b16 %v2617
  %v2742 = vunpack.c.l.b16 %v2618
  %v2743 = vunpack.c.h.b16 %v2618
  %v2744 = vunpack.c.l.b16 %v2619
  %v2745 = vunpack.c.h.b16 %v2619
  %v2746 = vunpack.c.l.b16 %v2620
  %v2747 = vunpack.c.h.b16 %v2620
  %v2748 = vunpack.c.l.b16 %v2621
  %v2749 = vunpack.c.h.b16 %v2621
  %v2750 = vunpack.c.l.b16 %v2622
  %v2751 = vunpack.c.h.b16 %v2622
  %v2752 = vunpack.c.l.b16 %v2623
  %v2753 = vunpack.c.h.b16 %v2623
  %v2754 = vunpack.c.l.b16 %v2624
  %v2755 = vunpack.c.h.b16 %v2624
  %v2756 = vunpack.c.l.b16 %v2625
  %v2757 = vunpack.c.h.b16 %v2625
  %v2758 = vunpack.c.l.b16 %v2626
  %v2759 = vunpack.c.h.b16 %v2626
  %v2760 = vunpack.c.l.b16 %v2627
  %v2761 = vunpack.c.h.b16 %v2627
  %v2762 = vunpack.c.l.b16 %v2628
  %v2763 = vunpack.c.h.b16 %v2628
  %v2764 = vunpack.c.l.b16 %v2629
  %v2765 = vunpack.c.h.b16 %v2629
  %v2766 = vunpack.c.l.b16 %v2630
  %v2767 = vunpack.c.h.b16 %v2630
  %v2768 = vunpack.c.l.b16 %v2631
  %v2769 = vunpack.c.h.b16 %v2631
  %v2770 = vunpack.c.l.b16 %v2632
  %v2771 = vunpack.c.h.b16 %v2632
  %v2772 = vpack.c.b16 %v2712, %v2708
  %v2773 = vpack.c.b16 %v2713, %v2709
  %v2774 = vpack.c.b16 %v2714, %v2710
  %v2775 = vpack.c.b16 %v2715, %v2711
  %v2776 = vpack.c.b16 %v2720, %v2716
  %v2777 = vpack.c.b16 %v2721, %v2717
  %v2778 = vpack.c.b16 %v2722, %v2718
  %v2779 = vpack.c.b16 %v2723, %v2719
  %v2780 = vpack.c.b16 %v2728, %v2724
  %v2781 = vpack.c.b16 %v2729, %v2725
  %v2782 = vpack.c.b16 %v2730, %v2726
  %v2783 = vpack.c.b16 %v2731, %v2727
  %v2784 = vpack.c.b16 %v2736, %v2732
  %v2785 = vpack.c.b16 %v2737, %v2733
  %v2786 = vpack.c.b16 %v2738, %v2734
  %v2787 = vpack.c.b16 %v2739, %v2735
  %v2788 = vpack.c.b16 %v2744, %v2740
  %v2789 = vpack.c.b16 %v2745, %v2741
  %v2790 = vpack.c.b16 %v2746, %v2742
  %v2791 = vpack.c.b16 %v2747, %v2743
  %v2792 = vpack.c.b16 %v2752, %v2748
  %v2793 = vpack.c.b16 %v2753, %v2749
  %v2794 = vpack.c.b16 %v2754, %v2750
  %v2795 = vpack.c.b16 %v2755, %v2751
  %v2796 = vpack.c.b16 %v2760, %v2756
  %v2797 = vpack.c.b16 %v2761, %v2757
  %v2798 = vpack.c.b16 %v2762, %v2758
  %v2799 = vpack.c.b16 %v2763, %v2759
  %v2800 = vpack.c.b16 %v2768, %v2764
  %v2801 = vpack.c.b16 %v2769, %v2765
  %v2802 = vpack.c.b16 %v2770, %v2766
  %v2803 = vpack.c.b16 %v2771, %v2767
  %2836 = vmatprep.subr.bf16.mxu0 %v2773
  %2837 = vmatpush1.bf16.msra.mxu0 %v2772
  %2838 = vmatprep.subr.bf16.mxu0 %v2777
  %2839 = vmatpush1.bf16.msra.mxu0 %v2776
  %2840 = vmatprep.subr.bf16.mxu0 %v2781
  %2841 = vmatpush1.bf16.msra.mxu0 %v2780
  %2842 = vmatprep.subr.bf16.mxu0 %v2785
  %2843 = vmatpush1.bf16.msra.mxu0 %v2784
  %2844 = vmatprep.subr.bf16.mxu0 %v2789
  %2845 = vmatpush1.bf16.msra.mxu0 %v2788
  %2846 = vmatprep.subr.bf16.mxu0 %v2793
  %2847 = vmatpush1.bf16.msra.mxu0 %v2792
  %2848 = vmatprep.subr.bf16.mxu0 %v2797
  %2849 = vmatpush1.bf16.msra.mxu0 %v2796
  %2850 = vmatprep.subr.bf16.mxu0 %v2801
  %2851 = vmatpush1.bf16.msra.mxu0 %v2800
  %2852 = vmatprep.subr.bf16.mxu0 0
  %2853 = vmatpush1.bf16.msra.mxu0 0
  %2854 = vmatprep.subr.bf16.mxu0 0
  %2855 = vmatpush1.bf16.msra.mxu0 0
  %2856 = vmatprep.subr.bf16.mxu0 0
  %2857 = vmatpush1.bf16.msra.mxu0 0
  %2858 = vmatprep.subr.bf16.mxu0 0
  %2859 = vmatpush1.bf16.msra.mxu0 0
  %2860 = vmatprep.subr.bf16.mxu0 0
  %2861 = vmatpush1.bf16.msra.mxu0 0
  %2862 = vmatprep.subr.bf16.mxu0 0
  %2863 = vmatpush1.bf16.msra.mxu0 0
  %2864 = vmatprep.subr.bf16.mxu0 0
  %2865 = vmatpush1.bf16.msra.mxu0 0
  %2866 = vmatprep.subr.bf16.mxu0 0
  %2867 = vmatpush1.bf16.msra.mxu0 0
  %2868 = vmatprep.mubr.bf16.mxu0 0
  %2869 = vmatmul.mubr.bf16.gmra.mrb[0].mxu0 0
  %v2870 = vpop.f32.mrb[0].mxu0
  %v2871 = vadd.f32 0.0, %v2870
  %v2872 = vpop.f32.mrb[0].mxu0
  %v2873 = vadd.f32 0.0, %v2872
  %v2874 = vpop.f32.mrb[0].mxu0
  %v2875 = vadd.f32 0.0, %v2874
  %v2876 = vpop.f32.mrb[0].mxu0
  %v2877 = vadd.f32 0.0, %v2876
  %2878 = vdwg.mxu0
  %2879 = vmatprep.subr.bf16.mxu0 %v2775
  %2880 = vmatpush1.bf16.msra.mxu0 %v2774
  %2881 = vmatprep.subr.bf16.mxu0 %v2779
  %2882 = vmatpush1.bf16.msra.mxu0 %v2778
  %2883 = vmatprep.subr.bf16.mxu0 %v2783
  %2884 = vmatpush1.bf16.msra.mxu0 %v2782
  %2885 = vmatprep.subr.bf16.mxu0 %v2787
  %2886 = vmatpush1.bf16.msra.mxu0 %v2786
  %2887 = vmatprep.subr.bf16.mxu0 %v2791
  %2888 = vmatpush1.bf16.msra.mxu0 %v2790
  %2889 = vmatprep.subr.bf16.mxu0 %v2795
  %2890 = vmatpush1.bf16.msra.mxu0 %v2794
  %2891 = vmatprep.subr.bf16.mxu0 %v2799
  %2892 = vmatpush1.bf16.msra.mxu0 %v2798
  %2893 = vmatprep.subr.bf16.mxu0 %v2803
  %2894 = vmatpush1.bf16.msra.mxu0 %v2802
  %2895 = vmatprep.subr.bf16.mxu0 0
  %2896 = vmatpush1.bf16.msra.mxu0 0
  %2897 = vmatprep.subr.bf16.mxu0 0
  %2898 = vmatpush1.bf16.msra.mxu0 0
  %2899 = vmatprep.subr.bf16.mxu0 0
  %2900 = vmatpush1.bf16.msra.mxu0 0
  %2901 = vmatprep.subr.bf16.mxu0 0
  %2902 = vmatpush1.bf16.msra.mxu0 0
  %2903 = vmatprep.subr.bf16.mxu0 0
  %2904 = vmatpush1.bf16.msra.mxu0 0
  %2905 = vmatprep.subr.bf16.mxu0 0
  %2906 = vmatpush1.bf16.msra.mxu0 0
  %2907 = vmatprep.subr.bf16.mxu0 0
  %2908 = vmatpush1.bf16.msra.mxu0 0
  %2909 = vmatprep.subr.bf16.mxu0 0
  %2910 = vmatpush1.bf16.msra.mxu0 0
  %2911 = vmatprep.mubr.bf16.mxu0 0
  %2912 = vmatmul.mubr.bf16.gmra.mrb[0].mxu0 0
  %v2913 = vpop.f32.mrb[0].mxu0
  %v2914 = vadd.f32 0.0, %v2913
  %v2915 = vpop.f32.mrb[0].mxu0
  %v2916 = vadd.f32 0.0, %v2915
  %v2917 = vpop.f32.mrb[0].mxu0
  %v2918 = vadd.f32 0.0, %v2917
  %v2919 = vpop.f32.mrb[0].mxu0
  %v2920 = vadd.f32 0.0, %v2919
  %2921 = vdwg.mxu0
  %v2922 = vadd.f32 %v2668, %v2871
  %v2923 = vadd.f32 %v2669, %v2873
  %v2924 = vadd.f32 %v2670, %v2914
  %v2925 = vadd.f32 %v2671, %v2916
  %v2926 = vadd.f32 %v2672, %v2875
  %v2927 = vadd.f32 %v2673, %v2877
  %v2928 = vadd.f32 %v2674, %v2918
  %v2929 = vadd.f32 %v2675, %v2920
  %v2930 = vxor.u32 %v2922, 2147483648
  %v2931 = vxor.u32 %v2923, 2147483648
  %v2932 = vxor.u32 %v2924, 2147483648
  %v2933 = vxor.u32 %v2926, 2147483648
  %v2934 = vxor.u32 %v2927, 2147483648
  %v2935 = vxor.u32 %v2928, 2147483648
  %v2936 = vmul.f32 %v2930, 1.442695
  %v2937 = vpow.pop %v2936
  %v2938 = vmul.f32 %v2931, 1.442695
  %v2939 = vpow.pop %v2938
  %v2940 = vmul.f32 %v2932, 1.442695
  %v2941 = vpow.pop %v2940
  %v2942 = vmul.f32 %v2933, 1.442695
  %v2943 = vpow.pop %v2942
  %v2944 = vmul.f32 %v2934, 1.442695
  %v2945 = vpow.pop %v2944
  %v2946 = vmul.f32 %v2935, 1.442695
  %v2947 = vpow.pop %v2946
  %v2948 = vadd.f32 %v2937, 1.0
  %v2949 = vadd.f32 %v2939, 1.0
  %v2950 = vadd.f32 %v2941, 1.0
  %v2951 = vadd.f32 %v2943, 1.0
  %v2952 = vadd.f32 %v2945, 1.0
  %v2953 = vadd.f32 %v2947, 1.0
  %v2954 = vrcp.pop %v2948
  %v2955 = vmul.f32 1.0, %v2954
  %v2956 = vrcp.pop %v2949
  %v2957 = vmul.f32 1.0, %v2956
  %v2958 = vrcp.pop %v2950
  %v2959 = vmul.f32 1.0, %v2958
  %v2960 = vrcp.pop %v2951
  %v2961 = vmul.f32 1.0, %v2960
  %v2962 = vrcp.pop %v2952
  %v2963 = vmul.f32 1.0, %v2962
  %v2964 = vrcp.pop %v2953
  %v2965 = vmul.f32 1.0, %v2964
  %v2966 = vtanh.pop %v2925
  %v2967 = vtanh.pop %v2929
  %v2968 = vmul.f32 %v2957, 0.0
  %v2969 = vmul.f32 %v2963, 0.0
  %v2970 = vmul.f32 %v2955, %v2966
  %v2971 = vmul.f32 %v2961, %v2967
  %v2972 = vadd.f32 %v2968, %v2970
  %v2973 = vadd.f32 %v2969, %v2971
  %v2974 = vtanh.pop %v2972
  %v2975 = vtanh.pop %v2973
  %v2976 = vmul.f32 %v2959, %v2974
  %v2977 = vmul.f32 %v2965, %v2975
  %v2978 = vsel %vm816, %v2976, 0.0
  %v2979 = vsel %vm817, %v2977, 0.0
  %v2980 = vsel %vm816, %v2972, 0.0
  %v2981 = vsel %vm817, %v2973, 0.0
  %v2982 = vld [vmem:[%s826] sm:$0xff]
  %v2983 = vld [vmem:[%s826 + $0x8] sm:$0xff]
  %v2984 = vld [vmem:[%s826 + $0x10] sm:$0xff]
  %v2985 = vld [vmem:[%s826 + $0x18] sm:$0xff]
  %v2986 = vunpack.c.l.bf16 %v2982
  %v2987 = vunpack.c.l.bf16 %v2983
  %v2988 = vunpack.c.l.bf16 %v2984
  %v2989 = vunpack.c.l.bf16 %v2985
  %v2990 = vunpack.c.h.bf16 %v2982
  %v2991 = vunpack.c.h.bf16 %v2983
  %v2992 = vunpack.c.h.bf16 %v2984
  %v2993 = vunpack.c.h.bf16 %v2985
  %v2994 = vadd.f32 %v2986, %v2651
  %v2995 = vadd.f32 %v2987, %v2655
  %v2996 = vadd.f32 %v2988, %v2659
  %v2997 = vadd.f32 %v2989, %v2663
  %v2998 = vadd.f32 %v2990, %v2651
  %v2999 = vadd.f32 %v2991, %v2655
  %v3000 = vadd.f32 %v2992, %v2659
  %v3001 = vadd.f32 %v2993, %v2663
  %v3002 = vpack.c.bf16 %v2979, %v2978
  %3003 = vmatprep.subr.bf16.mxu0 %v2773
  %3004 = vmatpush1.bf16.msra.mxu0 %v2772
  %3005 = vmatprep.subr.bf16.mxu0 %v2777
  %3006 = vmatpush1.bf16.msra.mxu0 %v2776
  %3007 = vmatprep.subr.bf16.mxu0 %v2781
  %3008 = vmatpush1.bf16.msra.mxu0 %v2780
  %3009 = vmatprep.subr.bf16.mxu0 %v2785
  %3010 = vmatpush1.bf16.msra.mxu0 %v2784
  %3011 = vmatprep.subr.bf16.mxu0 %v2789
  %3012 = vmatpush1.bf16.msra.mxu0 %v2788
  %3013 = vmatprep.subr.bf16.mxu0 %v2793
  %3014 = vmatpush1.bf16.msra.mxu0 %v2792
  %3015 = vmatprep.subr.bf16.mxu0 %v2797
  %3016 = vmatpush1.bf16.msra.mxu0 %v2796
  %3017 = vmatprep.subr.bf16.mxu0 %v2801
  %3018 = vmatpush1.bf16.msra.mxu0 %v2800
  %3019 = vmatprep.subr.bf16.mxu0 0
  %3020 = vmatpush1.bf16.msra.mxu0 0
  %3021 = vmatprep.subr.bf16.mxu0 0
  %3022 = vmatpush1.bf16.msra.mxu0 0
  %3023 = vmatprep.subr.bf16.mxu0 0
  %3024 = vmatpush1.bf16.msra.mxu0 0
  %3025 = vmatprep.subr.bf16.mxu0 0
  %3026 = vmatpush1.bf16.msra.mxu0 0
  %3027 = vmatprep.subr.bf16.mxu0 0
  %3028 = vmatpush1.bf16.msra.mxu0 0
  %3029 = vmatprep.subr.bf16.mxu0 0
  %3030 = vmatpush1.bf16.msra.mxu0 0
  %3031 = vmatprep.subr.bf16.mxu0 0
  %3032 = vmatpush1.bf16.msra.mxu0 0
  %3033 = vmatprep.subr.bf16.mxu0 0
  %3034 = vmatpush1.bf16.msra.mxu0 0
  %3035 = vmatprep.mubr.bf16.mxu0 0
  %3036 = vmatmul.mubr.bf16.gmra.mrb[0].mxu0 %v3002
  %v3037 = vpop.f32.mrb[0].mxu0
  %v3038 = vadd.f32 0.0, %v3037
  %v3039 = vpop.f32.mrb[0].mxu0
  %v3040 = vadd.f32 0.0, %v3039
  %v3041 = vpop.f32.mrb[0].mxu0
  %v3042 = vadd.f32 0.0, %v3041
  %v3043 = vpop.f32.mrb[0].mxu0
  %v3044 = vadd.f32 0.0, %v3043
  %3045 = vdwg.mxu0
  %3046 = vmatprep.subr.bf16.mxu0 %v2775
  %3047 = vmatpush1.bf16.msra.mxu0 %v2774
  %3048 = vmatprep.subr.bf16.mxu0 %v2779
  %3049 = vmatpush1.bf16.msra.mxu0 %v2778
  %3050 = vmatprep.subr.bf16.mxu0 %v2783
  %3051 = vmatpush1.bf16.msra.mxu0 %v2782
  %3052 = vmatprep.subr.bf16.mxu0 %v2787
  %3053 = vmatpush1.bf16.msra.mxu0 %v2786
  %3054 = vmatprep.subr.bf16.mxu0 %v2791
  %3055 = vmatpush1.bf16.msra.mxu0 %v2790
  %3056 = vmatprep.subr.bf16.mxu0 %v2795
  %3057 = vmatpush1.bf16.msra.mxu0 %v2794
  %3058 = vmatprep.subr.bf16.mxu0 %v2799
  %3059 = vmatpush1.bf16.msra.mxu0 %v2798
  %3060 = vmatprep.subr.bf16.mxu0 %v2803
  %3061 = vmatpush1.bf16.msra.mxu0 %v2802
  %3062 = vmatprep.subr.bf16.mxu0 0
  %3063 = vmatpush1.bf16.msra.mxu0 0
  %3064 = vmatprep.subr.bf16.mxu0 0
  %3065 = vmatpush1.bf16.msra.mxu0 0
  %3066 = vmatprep.subr.bf16.mxu0 0
  %3067 = vmatpush1.bf16.msra.mxu0 0
  %3068 = vmatprep.subr.bf16.mxu0 0
  %3069 = vmatpush1.bf16.msra.mxu0 0
  %3070 = vmatprep.subr.bf16.mxu0 0
  %3071 = vmatpush1.bf16.msra.mxu0 0
  %3072 = vmatprep.subr.bf16.mxu0 0
  %3073 = vmatpush1.bf16.msra.mxu0 0
  %3074 = vmatprep.subr.bf16.mxu0 0
  %3075 = vmatpush1.bf16.msra.mxu0 0
  %3076 = vmatprep.subr.bf16.mxu0 0
  %3077 = vmatpush1.bf16.msra.mxu0 0
  %3078 = vmatprep.mubr.bf16.mxu0 0
  %3079 = vmatmul.mubr.bf16.gmra.mrb[0].mxu0 %v3002
  %v3080 = vpop.f32.mrb[0].mxu0
  %v3081 = vadd.f32 0.0, %v3080
  %v3082 = vpop.f32.mrb[0].mxu0
  %v3083 = vadd.f32 0.0, %v3082
  %v3084 = vpop.f32.mrb[0].mxu0
  %v3085 = vadd.f32 0.0, %v3084
  %v3086 = vpop.f32.mrb[0].mxu0
  %v3087 = vadd.f32 0.0, %v3086
  %3088 = vdwg.mxu0
  %v3089 = vadd.f32 %v2994, %v3038
  %v3090 = vadd.f32 %v2995, %v3040
  %v3091 = vadd.f32 %v2996, %v3081
  %v3092 = vadd.f32 %v2997, %v3083
  %v3093 = vadd.f32 %v2998, %v3042
  %v3094 = vadd.f32 %v2999, %v3044
  %v3095 = vadd.f32 %v3000, %v3085
  %v3096 = vadd.f32 %v3001, %v3087
  %v3097 = vxor.u32 %v3089, 2147483648
  %v3098 = vxor.u32 %v3090, 2147483648
  %v3099 = vxor.u32 %v3091, 2147483648
  %v3100 = vxor.u32 %v3093, 2147483648
  %v3101 = vxor.u32 %v3094, 2147483648
  %v3102 = vxor.u32 %v3095, 2147483648
  %v3103 = vmul.f32 %v3097, 1.442695
  %v3104 = vpow.pop %v3103
  %v3105 = vmul.f32 %v3098, 1.442695
  %v3106 = vpow.pop %v3105
  %v3107 = vmul.f32 %v3099, 1.442695
  %v3108 = vpow.pop %v3107
  %v3109 = vmul.f32 %v3100, 1.442695
  %v3110 = vpow.pop %v3109
  %v3111 = vmul.f32 %v3101, 1.442695
  %v3112 = vpow.pop %v3111
  %v3113 = vmul.f32 %v3102, 1.442695
  %v3114 = vpow.pop %v3113
  %v3115 = vadd.f32 %v3104, 1.0
  %v3116 = vadd.f32 %v3106, 1.0
  %v3117 = vadd.f32 %v3108, 1.0
  %v3118 = vadd.f32 %v3110, 1.0
  %v3119 = vadd.f32 %v3112, 1.0
  %v3120 = vadd.f32 %v3114, 1.0
  %v3121 = vrcp.pop %v3115
  %v3122 = vmul.f32 1.0, %v3121
  %v3123 = vrcp.pop %v3116
  %v3124 = vmul.f32 1.0, %v3123
  %v3125 = vrcp.pop %v3117
  %v3126 = vmul.f32 1.0, %v3125
  %v3127 = vrcp.pop %v3118
  %v3128 = vmul.f32 1.0, %v3127
  %v3129 = vrcp.pop %v3119
  %v3130 = vmul.f32 1.0, %v3129
  %v3131 = vrcp.pop %v3120
  %v3132 = vmul.f32 1.0, %v3131
  %v3133 = vtanh.pop %v3092
  %v3134 = vtanh.pop %v3096
  %v3135 = vmul.f32 %v3124, %v2980
  %v3136 = vmul.f32 %v3130, %v2981
  %v3137 = vmul.f32 %v3122, %v3133
  %v3138 = vmul.f32 %v3128, %v3134
  %v3139 = vadd.f32 %v3135, %v3137
  %v3140 = vadd.f32 %v3136, %v3138
  %v3141 = vtanh.pop %v3139
  %v3142 = vtanh.pop %v3140
  %v3143 = vmul.f32 %v3126, %v3141
  %v3144 = vmul.f32 %v3132, %v3142
  %v3145 = vsel %vm999, %v3143, %v2978
  %v3146 = vsel %vm1000, %v3144, %v2979
  %v3147 = vsel %vm999, %v3139, %v2980
  %v3148 = vsel %vm1000, %v3140, %v2981
  %v3149 = vld [vmem:[%s1010] sm:$0xff]
  %v3150 = vld [vmem:[%s1010 + $0x8] sm:$0xff]
  %v3151 = vld [vmem:[%s1010 + $0x10] sm:$0xff]
  %v3152 = vld [vmem:[%s1010 + $0x18] sm:$0xff]
  %v3153 = vunpack.c.l.bf16 %v3149
  %v3154 = vunpack.c.l.bf16 %v3150
  %v3155 = vunpack.c.l.bf16 %v3151
  %v3156 = vunpack.c.l.bf16 %v3152
  %v3157 = vunpack.c.h.bf16 %v3149
  %v3158 = vunpack.c.h.bf16 %v3150
  %v3159 = vunpack.c.h.bf16 %v3151
  %v3160 = vunpack.c.h.bf16 %v3152
  %v3161 = vadd.f32 %v3153, %v2651
  %v3162 = vadd.f32 %v3154, %v2655
  %v3163 = vadd.f32 %v3155, %v2659
  %v3164 = vadd.f32 %v3156, %v2663
  %v3165 = vadd.f32 %v3157, %v2651
  %v3166 = vadd.f32 %v3158, %v2655
  %v3167 = vadd.f32 %v3159, %v2659
  %v3168 = vadd.f32 %v3160, %v2663
  %v3169 = vpack.c.bf16 %v3146, %v3145
  %3170 = vmatprep.subr.bf16.mxu0 %v2773
  %3171 = vmatpush1.bf16.msra.mxu0 %v2772
  %3172 = vmatprep.subr.bf16.mxu0 %v2777
  %3173 = vmatpush1.bf16.msra.mxu0 %v2776
  %3174 = vmatprep.subr.bf16.mxu0 %v2781
  %3175 = vmatpush1.bf16.msra.mxu0 %v2780
  %3176 = vmatprep.subr.bf16.mxu0 %v2785
  %3177 = vmatpush1.bf16.msra.mxu0 %v2784
  %3178 = vmatprep.subr.bf16.mxu0 %v2789
  %3179 = vmatpush1.bf16.msra.mxu0 %v2788
  %3180 = vmatprep.subr.bf16.mxu0 %v2793
  %3181 = vmatpush1.bf16.msra.mxu0 %v2792
  %3182 = vmatprep.subr.bf16.mxu0 %v2797
  %3183 = vmatpush1.bf16.msra.mxu0 %v2796
  %3184 = vmatprep.subr.bf16.mxu0 %v2801
  %3185 = vmatpush1.bf16.msra.mxu0 %v2800
  %3186 = vmatprep.subr.bf16.mxu0 0
  %3187 = vmatpush1.bf16.msra.mxu0 0
  %3188 = vmatprep.subr.bf16.mxu0 0
  %3189 = vmatpush1.bf16.msra.mxu0 0
  %3190 = vmatprep.subr.bf16.mxu0 0
  %3191 = vmatpush1.bf16.msra.mxu0 0
  %3192 = vmatprep.subr.bf16.mxu0 0
  %3193 = vmatpush1.bf16.msra.mxu0 0
  %3194 = vmatprep.subr.bf16.mxu0 0
  %3195 = vmatpush1.bf16.msra.mxu0 0
  %3196 = vmatprep.subr.bf16.mxu0 0
  %3197 = vmatpush1.bf16.msra.mxu0 0
  %3198 = vmatprep.subr.bf16.mxu0 0
  %3199 = vmatpush1.bf16.msra.mxu0 0
  %3200 = vmatprep.subr.bf16.mxu0 0
  %3201 = vmatpush1.bf16.msra.mxu0 0
  %3202 = vmatprep.mubr.bf16.mxu0 0
  %3203 = vmatmul.mubr.bf16.gmra.mrb[0].mxu0 %v3169
  %v3204 = vpop.f32.mrb[0].mxu0
  %v3205 = vadd.f32 0.0, %v3204
  %v3206 = vpop.f32.mrb[0].mxu0
  %v3207 = vadd.f32 0.0, %v3206
  %v3208 = vpop.f32.mrb[0].mxu0
  %v3209 = vadd.f32 0.0, %v3208
  %v3210 = vpop.f32.mrb[0].mxu0
  %v3211 = vadd.f32 0.0, %v3210
  %3212 = vdwg.mxu0
  %3213 = vmatprep.subr.bf16.mxu0 %v2775
  %3214 = vmatpush1.bf16.msra.mxu0 %v2774
  %3215 = vmatprep.subr.bf16.mxu0 %v2779
  %3216 = vmatpush1.bf16.msra.mxu0 %v2778
  %3217 = vmatprep.subr.bf16.mxu0 %v2783
  %3218 = vmatpush1.bf16.msra.mxu0 %v2782
  %3219 = vmatprep.subr.bf16.mxu0 %v2787
  %3220 = vmatpush1.bf16.msra.mxu0 %v2786
  %3221 = vmatprep.subr.bf16.mxu0 %v2791
  %3222 = vmatpush1.bf16.msra.mxu0 %v2790
  %3223 = vmatprep.subr.bf16.mxu0 %v2795
  %3224 = vmatpush1.bf16.msra.mxu0 %v2794
  %3225 = vmatprep.subr.bf16.mxu0 %v2799
  %3226 = vmatpush1.bf16.msra.mxu0 %v2798
  %3227 = vmatprep.subr.bf16.mxu0 %v2803
  %3228 = vmatpush1.bf16.msra.mxu0 %v2802
  %3229 = vmatprep.subr.bf16.mxu0 0
  %3230 = vmatpush1.bf16.msra.mxu0 0
  %3231 = vmatprep.subr.bf16.mxu0 0
  %3232 = vmatpush1.bf16.msra.mxu0 0
  %3233 = vmatprep.subr.bf16.mxu0 0
  %3234 = vmatpush1.bf16.msra.mxu0 0
  %3235 = vmatprep.subr.bf16.mxu0 0
  %3236 = vmatpush1.bf16.msra.mxu0 0
  %3237 = vmatprep.subr.bf16.mxu0 0
  %3238 = vmatpush1.bf16.msra.mxu0 0
  %3239 = vmatprep.subr.bf16.mxu0 0
  %3240 = vmatpush1.bf16.msra.mxu0 0
  %3241 = vmatprep.subr.bf16.mxu0 0
  %3242 = vmatpush1.bf16.msra.mxu0 0
  %3243 = vmatprep.subr.bf16.mxu0 0
  %3244 = vmatpush1.bf16.msra.mxu0 0
  %3245 = vmatprep.mubr.bf16.mxu0 0
  %3246 = vmatmul.mubr.bf16.gmra.mrb[0].mxu0 %v3169
  %v3247 = vpop.f32.mrb[0].mxu0
  %v3248 = vadd.f32 0.0, %v3247
  %v3249 = vpop.f32.mrb[0].mxu0
  %v3250 = vadd.f32 0.0, %v3249
  %v3251 = vpop.f32.mrb[0].mxu0
  %v3252 = vadd.f32 0.0, %v3251
  %v3253 = vpop.f32.mrb[0].mxu0
  %v3254 = vadd.f32 0.0, %v3253
  %3255 = vdwg.mxu0
  %v3256 = vadd.f32 %v3161, %v3205
  %v3257 = vadd.f32 %v3162, %v3207
  %v3258 = vadd.f32 %v3163, %v3248
  %v3259 = vadd.f32 %v3164, %v3250
  %v3260 = vadd.f32 %v3165, %v3209
  %v3261 = vadd.f32 %v3166, %v3211
  %v3262 = vadd.f32 %v3167, %v3252
  %v3263 = vadd.f32 %v3168, %v3254
  %v3264 = vxor.u32 %v3256, 2147483648
  %v3265 = vxor.u32 %v3257, 2147483648
  %v3266 = vxor.u32 %v3258, 2147483648
  %v3267 = vxor.u32 %v3260, 2147483648
  %v3268 = vxor.u32 %v3261, 2147483648
  %v3269 = vxor.u32 %v3262, 2147483648
  %v3270 = vmul.f32 %v3264, 1.442695
  %v3271 = vpow.pop %v3270
  %v3272 = vmul.f32 %v3265, 1.442695
  %v3273 = vpow.pop %v3272
  %v3274 = vmul.f32 %v3266, 1.442695
  %v3275 = vpow.pop %v3274
  %v3276 = vmul.f32 %v3267, 1.442695
  %v3277 = vpow.pop %v3276
  %v3278 = vmul.f32 %v3268, 1.442695
  %v3279 = vpow.pop %v3278
  %v3280 = vmul.f32 %v3269, 1.442695
  %v3281 = vpow.pop %v3280
  %v3282 = vadd.f32 %v3271, 1.0
  %v3283 = vadd.f32 %v3273, 1.0
  %v3284 = vadd.f32 %v3275, 1.0
  %v3285 = vadd.f32 %v3277, 1.0
  %v3286 = vadd.f32 %v3279, 1.0
  %v3287 = vadd.f32 %v3281, 1.0
  %v3288 = vrcp.pop %v3282
  %v3289 = vmul.f32 1.0, %v3288
  %v3290 = vrcp.pop %v3283
  %v3291 = vmul.f32 1.0, %v3290
  %v3292 = vrcp.pop %v3284
  %v3293 = vmul.f32 1.0, %v3292
  %v3294 = vrcp.pop %v3285
  %v3295 = vmul.f32 1.0, %v3294
  %v3296 = vrcp.pop %v3286
  %v3297 = vmul.f32 1.0, %v3296
  %v3298 = vrcp.pop %v3287
  %v3299 = vmul.f32 1.0, %v3298
  %v3300 = vtanh.pop %v3259
  %v3301 = vtanh.pop %v3263
  %v3302 = vmul.f32 %v3291, %v3147
  %v3303 = vmul.f32 %v3297, %v3148
  %v3304 = vmul.f32 %v3289, %v3300
  %v3305 = vmul.f32 %v3295, %v3301
  %v3306 = vadd.f32 %v3302, %v3304
  %v3307 = vadd.f32 %v3303, %v3305
  %v3308 = vtanh.pop %v3306
  %v3309 = vtanh.pop %v3307
  %v3310 = vmul.f32 %v3293, %v3308
  %v3311 = vmul.f32 %v3299, %v3309
  %v3312 = vsel %vm1183, %v3310, %v3145
  %v3313 = vsel %vm1184, %v3311, %v3146
  %v3314 = vsel %vm1183, %v3306, %v3147
  %v3315 = vsel %vm1184, %v3307, %v3148
  %v3316 = vld [vmem:[%s1194] sm:$0xff]
  %v3317 = vld [vmem:[%s1194 + $0x8] sm:$0xff]
  %v3318 = vld [vmem:[%s1194 + $0x10] sm:$0xff]
  %v3319 = vld [vmem:[%s1194 + $0x18] sm:$0xff]
  %v3320 = vunpack.c.l.bf16 %v3316
  %v3321 = vunpack.c.l.bf16 %v3317
  %v3322 = vunpack.c.l.bf16 %v3318
  %v3323 = vunpack.c.l.bf16 %v3319
  %v3324 = vunpack.c.h.bf16 %v3316
  %v3325 = vunpack.c.h.bf16 %v3317
  %v3326 = vunpack.c.h.bf16 %v3318
  %v3327 = vunpack.c.h.bf16 %v3319
  %v3328 = vadd.f32 %v3320, %v2651
  %v3329 = vadd.f32 %v3321, %v2655
  %v3330 = vadd.f32 %v3322, %v2659
  %v3331 = vadd.f32 %v3323, %v2663
  %v3332 = vadd.f32 %v3324, %v2651
  %v3333 = vadd.f32 %v3325, %v2655
  %v3334 = vadd.f32 %v3326, %v2659
  %v3335 = vadd.f32 %v3327, %v2663
  %v3336 = vpack.c.bf16 %v3313, %v3312
  %3337 = vmatprep.subr.bf16.mxu0 %v2773
  %3338 = vmatpush1.bf16.msra.mxu0 %v2772
  %3339 = vmatprep.subr.bf16.mxu0 %v2777
  %3340 = vmatpush1.bf16.msra.mxu0 %v2776
  %3341 = vmatprep.subr.bf16.mxu0 %v2781
  %3342 = vmatpush1.bf16.msra.mxu0 %v2780
  %3343 = vmatprep.subr.bf16.mxu0 %v2785
  %3344 = vmatpush1.bf16.msra.mxu0 %v2784
  %3345 = vmatprep.subr.bf16.mxu0 %v2789
  %3346 = vmatpush1.bf16.msra.mxu0 %v2788
  %3347 = vmatprep.subr.bf16.mxu0 %v2793
  %3348 = vmatpush1.bf16.msra.mxu0 %v2792
  %3349 = vmatprep.subr.bf16.mxu0 %v2797
  %3350 = vmatpush1.bf16.msra.mxu0 %v2796
  %3351 = vmatprep.subr.bf16.mxu0 %v2801
  %3352 = vmatpush1.bf16.msra.mxu0 %v2800
  %3353 = vmatprep.subr.bf16.mxu0 0
  %3354 = vmatpush1.bf16.msra.mxu0 0
  %3355 = vmatprep.subr.bf16.mxu0 0
  %3356 = vmatpush1.bf16.msra.mxu0 0
  %3357 = vmatprep.subr.bf16.mxu0 0
  %3358 = vmatpush1.bf16.msra.mxu0 0
  %3359 = vmatprep.subr.bf16.mxu0 0
  %3360 = vmatpush1.bf16.msra.mxu0 0
  %3361 = vmatprep.subr.bf16.mxu0 0
  %3362 = vmatpush1.bf16.msra.mxu0 0
  %3363 = vmatprep.subr.bf16.mxu0 0
  %3364 = vmatpush1.bf16.msra.mxu0 0
  %3365 = vmatprep.subr.bf16.mxu0 0
  %3366 = vmatpush1.bf16.msra.mxu0 0
  %3367 = vmatprep.subr.bf16.mxu0 0
  %3368 = vmatpush1.bf16.msra.mxu0 0
  %3369 = vmatprep.mubr.bf16.mxu0 0
  %3370 = vmatmul.mubr.bf16.gmra.mrb[0].mxu0 %v3336
  %v3371 = vpop.f32.mrb[0].mxu0
  %v3372 = vadd.f32 0.0, %v3371
  %v3373 = vpop.f32.mrb[0].mxu0
  %v3374 = vadd.f32 0.0, %v3373
  %v3375 = vpop.f32.mrb[0].mxu0
  %v3376 = vadd.f32 0.0, %v3375
  %v3377 = vpop.f32.mrb[0].mxu0
  %v3378 = vadd.f32 0.0, %v3377
  %3379 = vdwg.mxu0
  %3380 = vmatprep.subr.bf16.mxu0 %v2775
  %3381 = vmatpush1.bf16.msra.mxu0 %v2774
  %3382 = vmatprep.subr.bf16.mxu0 %v2779
  %3383 = vmatpush1.bf16.msra.mxu0 %v2778
  %3384 = vmatprep.subr.bf16.mxu0 %v2783
  %3385 = vmatpush1.bf16.msra.mxu0 %v2782
  %3386 = vmatprep.subr.bf16.mxu0 %v2787
  %3387 = vmatpush1.bf16.msra.mxu0 %v2786
  %3388 = vmatprep.subr.bf16.mxu0 %v2791
  %3389 = vmatpush1.bf16.msra.mxu0 %v2790
  %3390 = vmatprep.subr.bf16.mxu0 %v2795
  %3391 = vmatpush1.bf16.msra.mxu0 %v2794
  %3392 = vmatprep.subr.bf16.mxu0 %v2799
  %3393 = vmatpush1.bf16.msra.mxu0 %v2798
  %3394 = vmatprep.subr.bf16.mxu0 %v2803
  %3395 = vmatpush1.bf16.msra.mxu0 %v2802
  %3396 = vmatprep.subr.bf16.mxu0 0
  %3397 = vmatpush1.bf16.msra.mxu0 0
  %3398 = vmatprep.subr.bf16.mxu0 0
  %3399 = vmatpush1.bf16.msra.mxu0 0
  %3400 = vmatprep.subr.bf16.mxu0 0
  %3401 = vmatpush1.bf16.msra.mxu0 0
  %3402 = vmatprep.subr.bf16.mxu0 0
  %3403 = vmatpush1.bf16.msra.mxu0 0
  %3404 = vmatprep.subr.bf16.mxu0 0
  %3405 = vmatpush1.bf16.msra.mxu0 0
  %3406 = vmatprep.subr.bf16.mxu0 0
  %3407 = vmatpush1.bf16.msra.mxu0 0
  %3408 = vmatprep.subr.bf16.mxu0 0
  %3409 = vmatpush1.bf16.msra.mxu0 0
  %3410 = vmatprep.subr.bf16.mxu0 0
  %3411 = vmatpush1.bf16.msra.mxu0 0
  %3412 = vmatprep.mubr.bf16.mxu0 0
  %3413 = vmatmul.mubr.bf16.gmra.mrb[0].mxu0 %v3336
  %v3414 = vpop.f32.mrb[0].mxu0
  %v3415 = vadd.f32 0.0, %v3414
  %v3416 = vpop.f32.mrb[0].mxu0
  %v3417 = vadd.f32 0.0, %v3416
  %v3418 = vpop.f32.mrb[0].mxu0
  %v3419 = vadd.f32 0.0, %v3418
  %v3420 = vpop.f32.mrb[0].mxu0
  %v3421 = vadd.f32 0.0, %v3420
  %3422 = vdwg.mxu0
  %v3423 = vadd.f32 %v3328, %v3372
  %v3424 = vadd.f32 %v3329, %v3374
  %v3425 = vadd.f32 %v3330, %v3415
  %v3426 = vadd.f32 %v3331, %v3417
  %v3427 = vadd.f32 %v3332, %v3376
  %v3428 = vadd.f32 %v3333, %v3378
  %v3429 = vadd.f32 %v3334, %v3419
  %v3430 = vadd.f32 %v3335, %v3421
  %v3431 = vxor.u32 %v3423, 2147483648
  %v3432 = vxor.u32 %v3424, 2147483648
  %v3433 = vxor.u32 %v3425, 2147483648
  %v3434 = vxor.u32 %v3427, 2147483648
  %v3435 = vxor.u32 %v3428, 2147483648
  %v3436 = vxor.u32 %v3429, 2147483648
  %v3437 = vmul.f32 %v3431, 1.442695
  %v3438 = vpow.pop %v3437
  %v3439 = vmul.f32 %v3432, 1.442695
  %v3440 = vpow.pop %v3439
  %v3441 = vmul.f32 %v3433, 1.442695
  %v3442 = vpow.pop %v3441
  %v3443 = vmul.f32 %v3434, 1.442695
  %v3444 = vpow.pop %v3443
  %v3445 = vmul.f32 %v3435, 1.442695
  %v3446 = vpow.pop %v3445
  %v3447 = vmul.f32 %v3436, 1.442695
  %v3448 = vpow.pop %v3447
  %v3449 = vadd.f32 %v3438, 1.0
  %v3450 = vadd.f32 %v3440, 1.0
  %v3451 = vadd.f32 %v3442, 1.0
  %v3452 = vadd.f32 %v3444, 1.0
  %v3453 = vadd.f32 %v3446, 1.0
  %v3454 = vadd.f32 %v3448, 1.0
  %v3455 = vrcp.pop %v3449
  %v3456 = vmul.f32 1.0, %v3455
  %v3457 = vrcp.pop %v3450
  %v3458 = vmul.f32 1.0, %v3457
  %v3459 = vrcp.pop %v3451
  %v3460 = vmul.f32 1.0, %v3459
  %v3461 = vrcp.pop %v3452
  %v3462 = vmul.f32 1.0, %v3461
  %v3463 = vrcp.pop %v3453
  %v3464 = vmul.f32 1.0, %v3463
  %v3465 = vrcp.pop %v3454
  %v3466 = vmul.f32 1.0, %v3465
  %v3467 = vtanh.pop %v3426
  %v3468 = vtanh.pop %v3430
  %v3469 = vmul.f32 %v3458, %v3314
  %v3470 = vmul.f32 %v3464, %v3315
  %v3471 = vmul.f32 %v3456, %v3467
  %v3472 = vmul.f32 %v3462, %v3468
  %v3473 = vadd.f32 %v3469, %v3471
  %v3474 = vadd.f32 %v3470, %v3472
  %v3475 = vtanh.pop %v3473
  %v3476 = vtanh.pop %v3474
  %v3477 = vmul.f32 %v3460, %v3475
  %v3478 = vmul.f32 %v3466, %v3476
  %v3479 = vsel %vm1367, %v3477, %v3312
  %v3480 = vsel %vm1368, %v3478, %v3313
  %v3481 = vsel %vm1367, %v3473, %v3314
  %v3482 = vsel %vm1368, %v3474, %v3315
  %v3483 = vld [vmem:[%s1378] sm:$0xff]
  %v3484 = vld [vmem:[%s1378 + $0x8] sm:$0xff]
  %v3485 = vld [vmem:[%s1378 + $0x10] sm:$0xff]
  %v3486 = vld [vmem:[%s1378 + $0x18] sm:$0xff]
  %v3487 = vunpack.c.l.bf16 %v3483
  %v3488 = vunpack.c.l.bf16 %v3484
  %v3489 = vunpack.c.l.bf16 %v3485
  %v3490 = vunpack.c.l.bf16 %v3486
  %v3491 = vunpack.c.h.bf16 %v3483
  %v3492 = vunpack.c.h.bf16 %v3484
  %v3493 = vunpack.c.h.bf16 %v3485
  %v3494 = vunpack.c.h.bf16 %v3486
  %v3495 = vadd.f32 %v3487, %v2651
  %v3496 = vadd.f32 %v3488, %v2655
  %v3497 = vadd.f32 %v3489, %v2659
  %v3498 = vadd.f32 %v3490, %v2663
  %v3499 = vadd.f32 %v3491, %v2651
  %v3500 = vadd.f32 %v3492, %v2655
  %v3501 = vadd.f32 %v3493, %v2659
  %v3502 = vadd.f32 %v3494, %v2663
  %v3503 = vpack.c.bf16 %v3480, %v3479
  %3504 = vmatprep.subr.bf16.mxu0 %v2773
  %3505 = vmatpush1.bf16.msra.mxu0 %v2772
  %3506 = vmatprep.subr.bf16.mxu0 %v2777
  %3507 = vmatpush1.bf16.msra.mxu0 %v2776
  %3508 = vmatprep.subr.bf16.mxu0 %v2781
  %3509 = vmatpush1.bf16.msra.mxu0 %v2780
  %3510 = vmatprep.subr.bf16.mxu0 %v2785
  %3511 = vmatpush1.bf16.msra.mxu0 %v2784
  %3512 = vmatprep.subr.bf16.mxu0 %v2789
  %3513 = vmatpush1.bf16.msra.mxu0 %v2788
  %3514 = vmatprep.subr.bf16.mxu0 %v2793
  %3515 = vmatpush1.bf16.msra.mxu0 %v2792
  %3516 = vmatprep.subr.bf16.mxu0 %v2797
  %3517 = vmatpush1.bf16.msra.mxu0 %v2796
  %3518 = vmatprep.subr.bf16.mxu0 %v2801
  %3519 = vmatpush1.bf16.msra.mxu0 %v2800
  %3520 = vmatprep.subr.bf16.mxu0 0
  %3521 = vmatpush1.bf16.msra.mxu0 0
  %3522 = vmatprep.subr.bf16.mxu0 0
  %3523 = vmatpush1.bf16.msra.mxu0 0
  %3524 = vmatprep.subr.bf16.mxu0 0
  %3525 = vmatpush1.bf16.msra.mxu0 0
  %3526 = vmatprep.subr.bf16.mxu0 0
  %3527 = vmatpush1.bf16.msra.mxu0 0
  %3528 = vmatprep.subr.bf16.mxu0 0
  %3529 = vmatpush1.bf16.msra.mxu0 0
  %3530 = vmatprep.subr.bf16.mxu0 0
  %3531 = vmatpush1.bf16.msra.mxu0 0
  %3532 = vmatprep.subr.bf16.mxu0 0
  %3533 = vmatpush1.bf16.msra.mxu0 0
  %3534 = vmatprep.subr.bf16.mxu0 0
  %3535 = vmatpush1.bf16.msra.mxu0 0
  %3536 = vmatprep.mubr.bf16.mxu0 0
  %3537 = vmatmul.mubr.bf16.gmra.mrb[0].mxu0 %v3503
  %v3538 = vpop.f32.mrb[0].mxu0
  %v3539 = vadd.f32 0.0, %v3538
  %v3540 = vpop.f32.mrb[0].mxu0
  %v3541 = vadd.f32 0.0, %v3540
  %v3542 = vpop.f32.mrb[0].mxu0
  %v3543 = vadd.f32 0.0, %v3542
  %v3544 = vpop.f32.mrb[0].mxu0
  %v3545 = vadd.f32 0.0, %v3544
  %3546 = vdwg.mxu0
  %3547 = vmatprep.subr.bf16.mxu0 %v2775
  %3548 = vmatpush1.bf16.msra.mxu0 %v2774
  %3549 = vmatprep.subr.bf16.mxu0 %v2779
  %3550 = vmatpush1.bf16.msra.mxu0 %v2778
  %3551 = vmatprep.subr.bf16.mxu0 %v2783
  %3552 = vmatpush1.bf16.msra.mxu0 %v2782
  %3553 = vmatprep.subr.bf16.mxu0 %v2787
  %3554 = vmatpush1.bf16.msra.mxu0 %v2786
  %3555 = vmatprep.subr.bf16.mxu0 %v2791
  %3556 = vmatpush1.bf16.msra.mxu0 %v2790
  %3557 = vmatprep.subr.bf16.mxu0 %v2795
  %3558 = vmatpush1.bf16.msra.mxu0 %v2794
  %3559 = vmatprep.subr.bf16.mxu0 %v2799
  %3560 = vmatpush1.bf16.msra.mxu0 %v2798
  %3561 = vmatprep.subr.bf16.mxu0 %v2803
  %3562 = vmatpush1.bf16.msra.mxu0 %v2802
  %3563 = vmatprep.subr.bf16.mxu0 0
  %3564 = vmatpush1.bf16.msra.mxu0 0
  %3565 = vmatprep.subr.bf16.mxu0 0
  %3566 = vmatpush1.bf16.msra.mxu0 0
  %3567 = vmatprep.subr.bf16.mxu0 0
  %3568 = vmatpush1.bf16.msra.mxu0 0
  %3569 = vmatprep.subr.bf16.mxu0 0
  %3570 = vmatpush1.bf16.msra.mxu0 0
  %3571 = vmatprep.subr.bf16.mxu0 0
  %3572 = vmatpush1.bf16.msra.mxu0 0
  %3573 = vmatprep.subr.bf16.mxu0 0
  %3574 = vmatpush1.bf16.msra.mxu0 0
  %3575 = vmatprep.subr.bf16.mxu0 0
  %3576 = vmatpush1.bf16.msra.mxu0 0
  %3577 = vmatprep.subr.bf16.mxu0 0
  %3578 = vmatpush1.bf16.msra.mxu0 0
  %3579 = vmatprep.mubr.bf16.mxu0 0
  %3580 = vmatmul.mubr.bf16.gmra.mrb[0].mxu0 %v3503
  %v3581 = vpop.f32.mrb[0].mxu0
  %v3582 = vadd.f32 0.0, %v3581
  %v3583 = vpop.f32.mrb[0].mxu0
  %v3584 = vadd.f32 0.0, %v3583
  %v3585 = vpop.f32.mrb[0].mxu0
  %v3586 = vadd.f32 0.0, %v3585
  %v3587 = vpop.f32.mrb[0].mxu0
  %v3588 = vadd.f32 0.0, %v3587
  %3589 = vdwg.mxu0
  %v3590 = vadd.f32 %v3495, %v3539
  %v3591 = vadd.f32 %v3496, %v3541
  %v3592 = vadd.f32 %v3497, %v3582
  %v3593 = vadd.f32 %v3498, %v3584
  %v3594 = vadd.f32 %v3499, %v3543
  %v3595 = vadd.f32 %v3500, %v3545
  %v3596 = vadd.f32 %v3501, %v3586
  %v3597 = vadd.f32 %v3502, %v3588
  %v3598 = vxor.u32 %v3590, 2147483648
  %v3599 = vxor.u32 %v3591, 2147483648
  %v3600 = vxor.u32 %v3592, 2147483648
  %v3601 = vxor.u32 %v3594, 2147483648
  %v3602 = vxor.u32 %v3595, 2147483648
  %v3603 = vxor.u32 %v3596, 2147483648
  %v3604 = vmul.f32 %v3598, 1.442695
  %v3605 = vpow.pop %v3604
  %v3606 = vmul.f32 %v3599, 1.442695
  %v3607 = vpow.pop %v3606
  %v3608 = vmul.f32 %v3600, 1.442695
  %v3609 = vpow.pop %v3608
  %v3610 = vmul.f32 %v3601, 1.442695
  %v3611 = vpow.pop %v3610
  %v3612 = vmul.f32 %v3602, 1.442695
  %v3613 = vpow.pop %v3612
  %v3614 = vmul.f32 %v3603, 1.442695
  %v3615 = vpow.pop %v3614
  %v3616 = vadd.f32 %v3605, 1.0
  %v3617 = vadd.f32 %v3607, 1.0
  %v3618 = vadd.f32 %v3609, 1.0
  %v3619 = vadd.f32 %v3611, 1.0
  %v3620 = vadd.f32 %v3613, 1.0
  %v3621 = vadd.f32 %v3615, 1.0
  %v3622 = vrcp.pop %v3616
  %v3623 = vmul.f32 1.0, %v3622
  %v3624 = vrcp.pop %v3617
  %v3625 = vmul.f32 1.0, %v3624
  %v3626 = vrcp.pop %v3618
  %v3627 = vmul.f32 1.0, %v3626
  %v3628 = vrcp.pop %v3619
  %v3629 = vmul.f32 1.0, %v3628
  %v3630 = vrcp.pop %v3620
  %v3631 = vmul.f32 1.0, %v3630
  %v3632 = vrcp.pop %v3621
  %v3633 = vmul.f32 1.0, %v3632
  %v3634 = vtanh.pop %v3593
  %v3635 = vtanh.pop %v3597
  %v3636 = vmul.f32 %v3625, %v3481
  %v3637 = vmul.f32 %v3631, %v3482
  %v3638 = vmul.f32 %v3623, %v3634
  %v3639 = vmul.f32 %v3629, %v3635
  %v3640 = vadd.f32 %v3636, %v3638
  %v3641 = vadd.f32 %v3637, %v3639
  %v3642 = vtanh.pop %v3640
  %v3643 = vtanh.pop %v3641
  %v3644 = vmul.f32 %v3627, %v3642
  %v3645 = vmul.f32 %v3633, %v3643
  %v3646 = vsel %vm1551, %v3644, %v3479
  %v3647 = vsel %vm1552, %v3645, %v3480
  %v3648 = vsel %vm1551, %v3640, %v3481
  %v3649 = vsel %vm1552, %v3641, %v3482
  %v3650 = vld [vmem:[%s1562] sm:$0xff]
  %v3651 = vld [vmem:[%s1562 + $0x8] sm:$0xff]
  %v3652 = vld [vmem:[%s1562 + $0x10] sm:$0xff]
  %v3653 = vld [vmem:[%s1562 + $0x18] sm:$0xff]
  %v3654 = vunpack.c.l.bf16 %v3650
  %v3655 = vunpack.c.l.bf16 %v3651
  %v3656 = vunpack.c.l.bf16 %v3652
  %v3657 = vunpack.c.l.bf16 %v3653
  %v3658 = vunpack.c.h.bf16 %v3650
  %v3659 = vunpack.c.h.bf16 %v3651
  %v3660 = vunpack.c.h.bf16 %v3652
  %v3661 = vunpack.c.h.bf16 %v3653
  %v3662 = vadd.f32 %v3654, %v2651
  %v3663 = vadd.f32 %v3655, %v2655
  %v3664 = vadd.f32 %v3656, %v2659
  %v3665 = vadd.f32 %v3657, %v2663
  %v3666 = vadd.f32 %v3658, %v2651
  %v3667 = vadd.f32 %v3659, %v2655
  %v3668 = vadd.f32 %v3660, %v2659
  %v3669 = vadd.f32 %v3661, %v2663
  %v3670 = vpack.c.bf16 %v3647, %v3646
  %3671 = vmatprep.subr.bf16.mxu0 %v2773
  %3672 = vmatpush1.bf16.msra.mxu0 %v2772
  %3673 = vmatprep.subr.bf16.mxu0 %v2777
  %3674 = vmatpush1.bf16.msra.mxu0 %v2776
  %3675 = vmatprep.subr.bf16.mxu0 %v2781
  %3676 = vmatpush1.bf16.msra.mxu0 %v2780
  %3677 = vmatprep.subr.bf16.mxu0 %v2785
  %3678 = vmatpush1.bf16.msra.mxu0 %v2784
  %3679 = vmatprep.subr.bf16.mxu0 %v2789
  %3680 = vmatpush1.bf16.msra.mxu0 %v2788
  %3681 = vmatprep.subr.bf16.mxu0 %v2793
  %3682 = vmatpush1.bf16.msra.mxu0 %v2792
  %3683 = vmatprep.subr.bf16.mxu0 %v2797
  %3684 = vmatpush1.bf16.msra.mxu0 %v2796
  %3685 = vmatprep.subr.bf16.mxu0 %v2801
  %3686 = vmatpush1.bf16.msra.mxu0 %v2800
  %3687 = vmatprep.subr.bf16.mxu0 0
  %3688 = vmatpush1.bf16.msra.mxu0 0
  %3689 = vmatprep.subr.bf16.mxu0 0
  %3690 = vmatpush1.bf16.msra.mxu0 0
  %3691 = vmatprep.subr.bf16.mxu0 0
  %3692 = vmatpush1.bf16.msra.mxu0 0
  %3693 = vmatprep.subr.bf16.mxu0 0
  %3694 = vmatpush1.bf16.msra.mxu0 0
  %3695 = vmatprep.subr.bf16.mxu0 0
  %3696 = vmatpush1.bf16.msra.mxu0 0
  %3697 = vmatprep.subr.bf16.mxu0 0
  %3698 = vmatpush1.bf16.msra.mxu0 0
  %3699 = vmatprep.subr.bf16.mxu0 0
  %3700 = vmatpush1.bf16.msra.mxu0 0
  %3701 = vmatprep.subr.bf16.mxu0 0
  %3702 = vmatpush1.bf16.msra.mxu0 0
  %3703 = vmatprep.mubr.bf16.mxu0 0
  %3704 = vmatmul.mubr.bf16.gmra.mrb[0].mxu0 %v3670
  %v3705 = vpop.f32.mrb[0].mxu0
  %v3706 = vadd.f32 0.0, %v3705
  %v3707 = vpop.f32.mrb[0].mxu0
  %v3708 = vadd.f32 0.0, %v3707
  %v3709 = vpop.f32.mrb[0].mxu0
  %v3710 = vadd.f32 0.0, %v3709
  %v3711 = vpop.f32.mrb[0].mxu0
  %v3712 = vadd.f32 0.0, %v3711
  %3713 = vdwg.mxu0
  %3714 = vmatprep.subr.bf16.mxu0 %v2775
  %3715 = vmatpush1.bf16.msra.mxu0 %v2774
  %3716 = vmatprep.subr.bf16.mxu0 %v2779
  %3717 = vmatpush1.bf16.msra.mxu0 %v2778
  %3718 = vmatprep.subr.bf16.mxu0 %v2783
  %3719 = vmatpush1.bf16.msra.mxu0 %v2782
  %3720 = vmatprep.subr.bf16.mxu0 %v2787
  %3721 = vmatpush1.bf16.msra.mxu0 %v2786
  %3722 = vmatprep.subr.bf16.mxu0 %v2791
  %3723 = vmatpush1.bf16.msra.mxu0 %v2790
  %3724 = vmatprep.subr.bf16.mxu0 %v2795
  %3725 = vmatpush1.bf16.msra.mxu0 %v2794
  %3726 = vmatprep.subr.bf16.mxu0 %v2799
  %3727 = vmatpush1.bf16.msra.mxu0 %v2798
  %3728 = vmatprep.subr.bf16.mxu0 %v2803
  %3729 = vmatpush1.bf16.msra.mxu0 %v2802
  %3730 = vmatprep.subr.bf16.mxu0 0
  %3731 = vmatpush1.bf16.msra.mxu0 0
  %3732 = vmatprep.subr.bf16.mxu0 0
  %3733 = vmatpush1.bf16.msra.mxu0 0
  %3734 = vmatprep.subr.bf16.mxu0 0
  %3735 = vmatpush1.bf16.msra.mxu0 0
  %3736 = vmatprep.subr.bf16.mxu0 0
  %3737 = vmatpush1.bf16.msra.mxu0 0
  %3738 = vmatprep.subr.bf16.mxu0 0
  %3739 = vmatpush1.bf16.msra.mxu0 0
  %3740 = vmatprep.subr.bf16.mxu0 0
  %3741 = vmatpush1.bf16.msra.mxu0 0
  %3742 = vmatprep.subr.bf16.mxu0 0
  %3743 = vmatpush1.bf16.msra.mxu0 0
  %3744 = vmatprep.subr.bf16.mxu0 0
  %3745 = vmatpush1.bf16.msra.mxu0 0
  %3746 = vmatprep.mubr.bf16.mxu0 0
  %3747 = vmatmul.mubr.bf16.gmra.mrb[0].mxu0 %v3670
  %v3748 = vpop.f32.mrb[0].mxu0
  %v3749 = vadd.f32 0.0, %v3748
  %v3750 = vpop.f32.mrb[0].mxu0
  %v3751 = vadd.f32 0.0, %v3750
  %v3752 = vpop.f32.mrb[0].mxu0
  %v3753 = vadd.f32 0.0, %v3752
  %v3754 = vpop.f32.mrb[0].mxu0
  %v3755 = vadd.f32 0.0, %v3754
  %3756 = vdwg.mxu0
  %v3757 = vadd.f32 %v3662, %v3706
  %v3758 = vadd.f32 %v3663, %v3708
  %v3759 = vadd.f32 %v3664, %v3749
  %v3760 = vadd.f32 %v3665, %v3751
  %v3761 = vadd.f32 %v3666, %v3710
  %v3762 = vadd.f32 %v3667, %v3712
  %v3763 = vadd.f32 %v3668, %v3753
  %v3764 = vadd.f32 %v3669, %v3755
  %v3765 = vxor.u32 %v3757, 2147483648
  %v3766 = vxor.u32 %v3758, 2147483648
  %v3767 = vxor.u32 %v3759, 2147483648
  %v3768 = vxor.u32 %v3761, 2147483648
  %v3769 = vxor.u32 %v3762, 2147483648
  %v3770 = vxor.u32 %v3763, 2147483648
  %v3771 = vmul.f32 %v3765, 1.442695
  %v3772 = vpow.pop %v3771
  %v3773 = vmul.f32 %v3766, 1.442695
  %v3774 = vpow.pop %v3773
  %v3775 = vmul.f32 %v3767, 1.442695
  %v3776 = vpow.pop %v3775
  %v3777 = vmul.f32 %v3768, 1.442695
  %v3778 = vpow.pop %v3777
  %v3779 = vmul.f32 %v3769, 1.442695
  %v3780 = vpow.pop %v3779
  %v3781 = vmul.f32 %v3770, 1.442695
  %v3782 = vpow.pop %v3781
  %v3783 = vadd.f32 %v3772, 1.0
  %v3784 = vadd.f32 %v3774, 1.0
  %v3785 = vadd.f32 %v3776, 1.0
  %v3786 = vadd.f32 %v3778, 1.0
  %v3787 = vadd.f32 %v3780, 1.0
  %v3788 = vadd.f32 %v3782, 1.0
  %v3789 = vrcp.pop %v3783
  %v3790 = vmul.f32 1.0, %v3789
  %v3791 = vrcp.pop %v3784
  %v3792 = vmul.f32 1.0, %v3791
  %v3793 = vrcp.pop %v3785
  %v3794 = vmul.f32 1.0, %v3793
  %v3795 = vrcp.pop %v3786
  %v3796 = vmul.f32 1.0, %v3795
  %v3797 = vrcp.pop %v3787
  %v3798 = vmul.f32 1.0, %v3797
  %v3799 = vrcp.pop %v3788
  %v3800 = vmul.f32 1.0, %v3799
  %v3801 = vtanh.pop %v3760
  %v3802 = vtanh.pop %v3764
  %v3803 = vmul.f32 %v3792, %v3648
  %v3804 = vmul.f32 %v3798, %v3649
  %v3805 = vmul.f32 %v3790, %v3801
  %v3806 = vmul.f32 %v3796, %v3802
  %v3807 = vadd.f32 %v3803, %v3805
  %v3808 = vadd.f32 %v3804, %v3806
  %v3809 = vtanh.pop %v3807
  %v3810 = vtanh.pop %v3808
  %v3811 = vmul.f32 %v3794, %v3809
  %v3812 = vmul.f32 %v3800, %v3810
  %v3813 = vsel %vm1735, %v3811, %v3646
  %v3814 = vsel %vm1736, %v3812, %v3647
  %v3815 = vsel %vm1735, %v3807, %v3648
  %v3816 = vsel %vm1736, %v3808, %v3649
  %v3817 = vld [vmem:[%s1746] sm:$0xff]
  %v3818 = vld [vmem:[%s1746 + $0x8] sm:$0xff]
  %v3819 = vld [vmem:[%s1746 + $0x10] sm:$0xff]
  %v3820 = vld [vmem:[%s1746 + $0x18] sm:$0xff]
  %v3821 = vunpack.c.l.bf16 %v3817
  %v3822 = vunpack.c.l.bf16 %v3818
  %v3823 = vunpack.c.l.bf16 %v3819
  %v3824 = vunpack.c.l.bf16 %v3820
  %v3825 = vunpack.c.h.bf16 %v3817
  %v3826 = vunpack.c.h.bf16 %v3818
  %v3827 = vunpack.c.h.bf16 %v3819
  %v3828 = vunpack.c.h.bf16 %v3820
  %v3829 = vadd.f32 %v3821, %v2651
  %v3830 = vadd.f32 %v3822, %v2655
  %v3831 = vadd.f32 %v3823, %v2659
  %v3832 = vadd.f32 %v3824, %v2663
  %v3833 = vadd.f32 %v3825, %v2651
  %v3834 = vadd.f32 %v3826, %v2655
  %v3835 = vadd.f32 %v3827, %v2659
  %v3836 = vadd.f32 %v3828, %v2663
  %v3837 = vpack.c.bf16 %v3814, %v3813
  %3838 = vmatprep.subr.bf16.mxu0 %v2773
  %3839 = vmatpush1.bf16.msra.mxu0 %v2772
  %3840 = vmatprep.subr.bf16.mxu0 %v2777
  %3841 = vmatpush1.bf16.msra.mxu0 %v2776
  %3842 = vmatprep.subr.bf16.mxu0 %v2781
  %3843 = vmatpush1.bf16.msra.mxu0 %v2780
  %3844 = vmatprep.subr.bf16.mxu0 %v2785
  %3845 = vmatpush1.bf16.msra.mxu0 %v2784
  %3846 = vmatprep.subr.bf16.mxu0 %v2789
  %3847 = vmatpush1.bf16.msra.mxu0 %v2788
  %3848 = vmatprep.subr.bf16.mxu0 %v2793
  %3849 = vmatpush1.bf16.msra.mxu0 %v2792
  %3850 = vmatprep.subr.bf16.mxu0 %v2797
  %3851 = vmatpush1.bf16.msra.mxu0 %v2796
  %3852 = vmatprep.subr.bf16.mxu0 %v2801
  %3853 = vmatpush1.bf16.msra.mxu0 %v2800
  %3854 = vmatprep.subr.bf16.mxu0 0
  %3855 = vmatpush1.bf16.msra.mxu0 0
  %3856 = vmatprep.subr.bf16.mxu0 0
  %3857 = vmatpush1.bf16.msra.mxu0 0
  %3858 = vmatprep.subr.bf16.mxu0 0
  %3859 = vmatpush1.bf16.msra.mxu0 0
  %3860 = vmatprep.subr.bf16.mxu0 0
  %3861 = vmatpush1.bf16.msra.mxu0 0
  %3862 = vmatprep.subr.bf16.mxu0 0
  %3863 = vmatpush1.bf16.msra.mxu0 0
  %3864 = vmatprep.subr.bf16.mxu0 0
  %3865 = vmatpush1.bf16.msra.mxu0 0
  %3866 = vmatprep.subr.bf16.mxu0 0
  %3867 = vmatpush1.bf16.msra.mxu0 0
  %3868 = vmatprep.subr.bf16.mxu0 0
  %3869 = vmatpush1.bf16.msra.mxu0 0
  %3870 = vmatprep.mubr.bf16.mxu0 0
  %3871 = vmatmul.mubr.bf16.gmra.mrb[0].mxu0 %v3837
  %v3872 = vpop.f32.mrb[0].mxu0
  %v3873 = vadd.f32 0.0, %v3872
  %v3874 = vpop.f32.mrb[0].mxu0
  %v3875 = vadd.f32 0.0, %v3874
  %v3876 = vpop.f32.mrb[0].mxu0
  %v3877 = vadd.f32 0.0, %v3876
  %v3878 = vpop.f32.mrb[0].mxu0
  %v3879 = vadd.f32 0.0, %v3878
  %3880 = vdwg.mxu0
  %3881 = vmatprep.subr.bf16.mxu0 %v2775
  %3882 = vmatpush1.bf16.msra.mxu0 %v2774
  %3883 = vmatprep.subr.bf16.mxu0 %v2779
  %3884 = vmatpush1.bf16.msra.mxu0 %v2778
  %3885 = vmatprep.subr.bf16.mxu0 %v2783
  %3886 = vmatpush1.bf16.msra.mxu0 %v2782
  %3887 = vmatprep.subr.bf16.mxu0 %v2787
  %3888 = vmatpush1.bf16.msra.mxu0 %v2786
  %3889 = vmatprep.subr.bf16.mxu0 %v2791
  %3890 = vmatpush1.bf16.msra.mxu0 %v2790
  %3891 = vmatprep.subr.bf16.mxu0 %v2795
  %3892 = vmatpush1.bf16.msra.mxu0 %v2794
  %3893 = vmatprep.subr.bf16.mxu0 %v2799
  %3894 = vmatpush1.bf16.msra.mxu0 %v2798
  %3895 = vmatprep.subr.bf16.mxu0 %v2803
  %3896 = vmatpush1.bf16.msra.mxu0 %v2802
  %3897 = vmatprep.subr.bf16.mxu0 0
  %3898 = vmatpush1.bf16.msra.mxu0 0
  %3899 = vmatprep.subr.bf16.mxu0 0
  %3900 = vmatpush1.bf16.msra.mxu0 0
  %3901 = vmatprep.subr.bf16.mxu0 0
  %3902 = vmatpush1.bf16.msra.mxu0 0
  %3903 = vmatprep.subr.bf16.mxu0 0
  %3904 = vmatpush1.bf16.msra.mxu0 0
  %3905 = vmatprep.subr.bf16.mxu0 0
  %3906 = vmatpush1.bf16.msra.mxu0 0
  %3907 = vmatprep.subr.bf16.mxu0 0
  %3908 = vmatpush1.bf16.msra.mxu0 0
  %3909 = vmatprep.subr.bf16.mxu0 0
  %3910 = vmatpush1.bf16.msra.mxu0 0
  %3911 = vmatprep.subr.bf16.mxu0 0
  %3912 = vmatpush1.bf16.msra.mxu0 0
  %3913 = vmatprep.mubr.bf16.mxu0 0
  %3914 = vmatmul.mubr.bf16.gmra.mrb[0].mxu0 %v3837
  %v3915 = vpop.f32.mrb[0].mxu0
  %v3916 = vadd.f32 0.0, %v3915
  %v3917 = vpop.f32.mrb[0].mxu0
  %v3918 = vadd.f32 0.0, %v3917
  %v3919 = vpop.f32.mrb[0].mxu0
  %v3920 = vadd.f32 0.0, %v3919
  %v3921 = vpop.f32.mrb[0].mxu0
  %v3922 = vadd.f32 0.0, %v3921
  %3923 = vdwg.mxu0
  %v3924 = vadd.f32 %v3829, %v3873
  %v3925 = vadd.f32 %v3830, %v3875
  %v3926 = vadd.f32 %v3831, %v3916
  %v3927 = vadd.f32 %v3832, %v3918
  %v3928 = vadd.f32 %v3833, %v3877
  %v3929 = vadd.f32 %v3834, %v3879
  %v3930 = vadd.f32 %v3835, %v3920
  %v3931 = vadd.f32 %v3836, %v3922
  %v3932 = vxor.u32 %v3924, 2147483648
  %v3933 = vxor.u32 %v3925, 2147483648
  %v3934 = vxor.u32 %v3926, 2147483648
  %v3935 = vxor.u32 %v3928, 2147483648
  %v3936 = vxor.u32 %v3929, 2147483648
  %v3937 = vxor.u32 %v3930, 2147483648
  %v3938 = vmul.f32 %v3932, 1.442695
  %v3939 = vpow.pop %v3938
  %v3940 = vmul.f32 %v3933, 1.442695
  %v3941 = vpow.pop %v3940
  %v3942 = vmul.f32 %v3934, 1.442695
  %v3943 = vpow.pop %v3942
  %v3944 = vmul.f32 %v3935, 1.442695
  %v3945 = vpow.pop %v3944
  %v3946 = vmul.f32 %v3936, 1.442695
  %v3947 = vpow.pop %v3946
  %v3948 = vmul.f32 %v3937, 1.442695
  %v3949 = vpow.pop %v3948
  %v3950 = vadd.f32 %v3939, 1.0
  %v3951 = vadd.f32 %v3941, 1.0
  %v3952 = vadd.f32 %v3943, 1.0
  %v3953 = vadd.f32 %v3945, 1.0
  %v3954 = vadd.f32 %v3947, 1.0
  %v3955 = vadd.f32 %v3949, 1.0
  %v3956 = vrcp.pop %v3950
  %v3957 = vmul.f32 1.0, %v3956
  %v3958 = vrcp.pop %v3951
  %v3959 = vmul.f32 1.0, %v3958
  %v3960 = vrcp.pop %v3952
  %v3961 = vmul.f32 1.0, %v3960
  %v3962 = vrcp.pop %v3953
  %v3963 = vmul.f32 1.0, %v3962
  %v3964 = vrcp.pop %v3954
  %v3965 = vmul.f32 1.0, %v3964
  %v3966 = vrcp.pop %v3955
  %v3967 = vmul.f32 1.0, %v3966
  %v3968 = vtanh.pop %v3927
  %v3969 = vtanh.pop %v3931
  %v3970 = vmul.f32 %v3959, %v3815
  %v3971 = vmul.f32 %v3965, %v3816
  %v3972 = vmul.f32 %v3957, %v3968
  %v3973 = vmul.f32 %v3963, %v3969
  %v3974 = vadd.f32 %v3970, %v3972
  %v3975 = vadd.f32 %v3971, %v3973
  %v3976 = vtanh.pop %v3974
  %v3977 = vtanh.pop %v3975
  %v3978 = vmul.f32 %v3961, %v3976
  %v3979 = vmul.f32 %v3967, %v3977
  %v3980 = vsel %vm1919, %v3978, %v3813
  %v3981 = vsel %vm1920, %v3979, %v3814
  %v3982 = vsel %vm1919, %v3974, %v3815
  %v3983 = vsel %vm1920, %v3975, %v3816
  %v3984 = vld [vmem:[%s1930] sm:$0xff]
  %v3985 = vld [vmem:[%s1930 + $0x8] sm:$0xff]
  %v3986 = vld [vmem:[%s1930 + $0x10] sm:$0xff]
  %v3987 = vld [vmem:[%s1930 + $0x18] sm:$0xff]
  %v3988 = vunpack.c.l.bf16 %v3984
  %v3989 = vunpack.c.l.bf16 %v3985
  %v3990 = vunpack.c.l.bf16 %v3986
  %v3991 = vunpack.c.l.bf16 %v3987
  %v3992 = vunpack.c.h.bf16 %v3984
  %v3993 = vunpack.c.h.bf16 %v3985
  %v3994 = vunpack.c.h.bf16 %v3986
  %v3995 = vunpack.c.h.bf16 %v3987
  %v3996 = vadd.f32 %v3988, %v2651
  %v3997 = vadd.f32 %v3989, %v2655
  %v3998 = vadd.f32 %v3990, %v2659
  %v3999 = vadd.f32 %v3991, %v2663
  %v4000 = vadd.f32 %v3992, %v2651
  %v4001 = vadd.f32 %v3993, %v2655
  %v4002 = vadd.f32 %v3994, %v2659
  %v4003 = vadd.f32 %v3995, %v2663
  %v4004 = vpack.c.bf16 %v3981, %v3980
  %4005 = vmatprep.subr.bf16.mxu0 %v2773
  %4006 = vmatpush1.bf16.msra.mxu0 %v2772
  %4007 = vmatprep.subr.bf16.mxu0 %v2777
  %4008 = vmatpush1.bf16.msra.mxu0 %v2776
  %4009 = vmatprep.subr.bf16.mxu0 %v2781
  %4010 = vmatpush1.bf16.msra.mxu0 %v2780
  %4011 = vmatprep.subr.bf16.mxu0 %v2785
  %4012 = vmatpush1.bf16.msra.mxu0 %v2784
  %4013 = vmatprep.subr.bf16.mxu0 %v2789
  %4014 = vmatpush1.bf16.msra.mxu0 %v2788
  %4015 = vmatprep.subr.bf16.mxu0 %v2793
  %4016 = vmatpush1.bf16.msra.mxu0 %v2792
  %4017 = vmatprep.subr.bf16.mxu0 %v2797
  %4018 = vmatpush1.bf16.msra.mxu0 %v2796
  %4019 = vmatprep.subr.bf16.mxu0 %v2801
  %4020 = vmatpush1.bf16.msra.mxu0 %v2800
  %4021 = vmatprep.subr.bf16.mxu0 0
  %4022 = vmatpush1.bf16.msra.mxu0 0
  %4023 = vmatprep.subr.bf16.mxu0 0
  %4024 = vmatpush1.bf16.msra.mxu0 0
  %4025 = vmatprep.subr.bf16.mxu0 0
  %4026 = vmatpush1.bf16.msra.mxu0 0
  %4027 = vmatprep.subr.bf16.mxu0 0
  %4028 = vmatpush1.bf16.msra.mxu0 0
  %4029 = vmatprep.subr.bf16.mxu0 0
  %4030 = vmatpush1.bf16.msra.mxu0 0
  %4031 = vmatprep.subr.bf16.mxu0 0
  %4032 = vmatpush1.bf16.msra.mxu0 0
  %4033 = vmatprep.subr.bf16.mxu0 0
  %4034 = vmatpush1.bf16.msra.mxu0 0
  %4035 = vmatprep.subr.bf16.mxu0 0
  %4036 = vmatpush1.bf16.msra.mxu0 0
  %4037 = vmatprep.mubr.bf16.mxu0 0
  %4038 = vmatmul.mubr.bf16.gmra.mrb[0].mxu0 %v4004
  %v4039 = vpop.f32.mrb[0].mxu0
  %v4040 = vadd.f32 0.0, %v4039
  %v4041 = vpop.f32.mrb[0].mxu0
  %v4042 = vadd.f32 0.0, %v4041
  %v4043 = vpop.f32.mrb[0].mxu0
  %v4044 = vadd.f32 0.0, %v4043
  %v4045 = vpop.f32.mrb[0].mxu0
  %v4046 = vadd.f32 0.0, %v4045
  %4047 = vdwg.mxu0
  %4048 = vmatprep.subr.bf16.mxu0 %v2775
  %4049 = vmatpush1.bf16.msra.mxu0 %v2774
  %4050 = vmatprep.subr.bf16.mxu0 %v2779
  %4051 = vmatpush1.bf16.msra.mxu0 %v2778
  %4052 = vmatprep.subr.bf16.mxu0 %v2783
  %4053 = vmatpush1.bf16.msra.mxu0 %v2782
  %4054 = vmatprep.subr.bf16.mxu0 %v2787
  %4055 = vmatpush1.bf16.msra.mxu0 %v2786
  %4056 = vmatprep.subr.bf16.mxu0 %v2791
  %4057 = vmatpush1.bf16.msra.mxu0 %v2790
  %4058 = vmatprep.subr.bf16.mxu0 %v2795
  %4059 = vmatpush1.bf16.msra.mxu0 %v2794
  %4060 = vmatprep.subr.bf16.mxu0 %v2799
  %4061 = vmatpush1.bf16.msra.mxu0 %v2798
  %4062 = vmatprep.subr.bf16.mxu0 %v2803
  %4063 = vmatpush1.bf16.msra.mxu0 %v2802
  %4064 = vmatprep.subr.bf16.mxu0 0
  %4065 = vmatpush1.bf16.msra.mxu0 0
  %4066 = vmatprep.subr.bf16.mxu0 0
  %4067 = vmatpush1.bf16.msra.mxu0 0
  %4068 = vmatprep.subr.bf16.mxu0 0
  %4069 = vmatpush1.bf16.msra.mxu0 0
  %4070 = vmatprep.subr.bf16.mxu0 0
  %4071 = vmatpush1.bf16.msra.mxu0 0
  %4072 = vmatprep.subr.bf16.mxu0 0
  %4073 = vmatpush1.bf16.msra.mxu0 0
  %4074 = vmatprep.subr.bf16.mxu0 0
  %4075 = vmatpush1.bf16.msra.mxu0 0
  %4076 = vmatprep.subr.bf16.mxu0 0
  %4077 = vmatpush1.bf16.msra.mxu0 0
  %4078 = vmatprep.subr.bf16.mxu0 0
  %4079 = vmatpush1.bf16.msra.mxu0 0
  %4080 = vmatprep.mubr.bf16.mxu0 0
  %4081 = vmatmul.mubr.bf16.gmra.mrb[0].mxu0 %v4004
  %v4082 = vpop.f32.mrb[0].mxu0
  %v4083 = vadd.f32 0.0, %v4082
  %v4084 = vpop.f32.mrb[0].mxu0
  %v4085 = vadd.f32 0.0, %v4084
  %v4086 = vpop.f32.mrb[0].mxu0
  %v4087 = vadd.f32 0.0, %v4086
  %v4088 = vpop.f32.mrb[0].mxu0
  %v4089 = vadd.f32 0.0, %v4088
  %4090 = vdwg.mxu0
  %v4091 = vadd.f32 %v3996, %v4040
  %v4092 = vadd.f32 %v3997, %v4042
  %v4093 = vadd.f32 %v3998, %v4083
  %v4094 = vadd.f32 %v3999, %v4085
  %v4095 = vadd.f32 %v4000, %v4044
  %v4096 = vadd.f32 %v4001, %v4046
  %v4097 = vadd.f32 %v4002, %v4087
  %v4098 = vadd.f32 %v4003, %v4089
  %v4099 = vxor.u32 %v4091, 2147483648
  %v4100 = vxor.u32 %v4092, 2147483648
  %v4101 = vxor.u32 %v4093, 2147483648
  %v4102 = vxor.u32 %v4095, 2147483648
  %v4103 = vxor.u32 %v4096, 2147483648
  %v4104 = vxor.u32 %v4097, 2147483648
  %v4105 = vmul.f32 %v4099, 1.442695
  %v4106 = vpow.pop %v4105
  %v4107 = vmul.f32 %v4100, 1.442695
  %v4108 = vpow.pop %v4107
  %v4109 = vmul.f32 %v4101, 1.442695
  %v4110 = vpow.pop %v4109
  %v4111 = vmul.f32 %v4102, 1.442695
  %v4112 = vpow.pop %v4111
  %v4113 = vmul.f32 %v4103, 1.442695
  %v4114 = vpow.pop %v4113
  %v4115 = vmul.f32 %v4104, 1.442695
  %v4116 = vpow.pop %v4115
  %v4117 = vadd.f32 %v4106, 1.0
  %v4118 = vadd.f32 %v4108, 1.0
  %v4119 = vadd.f32 %v4110, 1.0
  %v4120 = vadd.f32 %v4112, 1.0
  %v4121 = vadd.f32 %v4114, 1.0
  %v4122 = vadd.f32 %v4116, 1.0
  %v4123 = vrcp.pop %v4117
  %v4124 = vmul.f32 1.0, %v4123
  %v4125 = vrcp.pop %v4118
  %v4126 = vmul.f32 1.0, %v4125
  %v4127 = vrcp.pop %v4119
  %v4128 = vmul.f32 1.0, %v4127
  %v4129 = vrcp.pop %v4120
  %v4130 = vmul.f32 1.0, %v4129
  %v4131 = vrcp.pop %v4121
  %v4132 = vmul.f32 1.0, %v4131
  %v4133 = vrcp.pop %v4122
  %v4134 = vmul.f32 1.0, %v4133
  %v4135 = vtanh.pop %v4094
  %v4136 = vtanh.pop %v4098
  %v4137 = vmul.f32 %v4126, %v3982
  %v4138 = vmul.f32 %v4132, %v3983
  %v4139 = vmul.f32 %v4124, %v4135
  %v4140 = vmul.f32 %v4130, %v4136
  %v4141 = vadd.f32 %v4137, %v4139
  %v4142 = vadd.f32 %v4138, %v4140
  %v4143 = vtanh.pop %v4141
  %v4144 = vtanh.pop %v4142
  %v4145 = vmul.f32 %v4128, %v4143
  %v4146 = vmul.f32 %v4134, %v4144
  %v4147 = vsel %vm2103, %v4145, %v3980
  %v4148 = vsel %vm2104, %v4146, %v3981
  %v4149 = vpack.c.bf16 %v4148, %v4147
  %v4150 = vld [vmem:[%s6] sm:$0xf]
  %v4151 = vld [vmem:[%s6 + $0x4] sm:$0xf]
  %v4152 = vld [vmem:[%s6 + $0x8] sm:$0xf]
  %v4153 = vld [vmem:[%s6 + $0xc] sm:$0xf]
  %v4154 = vld [vmem:[%s6 + $0x10] sm:$0xf]
  %v4155 = vld [vmem:[%s6 + $0x14] sm:$0xf]
  %v4156 = vld [vmem:[%s6 + $0x18] sm:$0xf]
  %v4157 = vld [vmem:[%s6 + $0x1c] sm:$0xf]
  %v4158 = vld [vmem:[%s6 + $0x20] sm:$0xf]
  %v4159 = vld [vmem:[%s6 + $0x24] sm:$0xf]
  %v4160 = vld [vmem:[%s6 + $0x28] sm:$0xf]
  %v4161 = vld [vmem:[%s6 + $0x2c] sm:$0xf]
  %v4162 = vld [vmem:[%s6 + $0x30] sm:$0xf]
  %v4163 = vld [vmem:[%s6 + $0x34] sm:$0xf]
  %v4164 = vld [vmem:[%s6 + $0x38] sm:$0xf]
  %v4165 = vld [vmem:[%s6 + $0x3c] sm:$0xf]
  %v4166 = vld [vmem:[%s7] sm:$0x1]
  %v4168 = vlaneseq
  %v4169 = vshrl.u32 %v4168, 7
  %v4170 = vsub.s32 0, %v4169
  %v4171 = vrot.slane %v4166, %v4170
  %v4189 = vunpack.c.l.b16 %v4150
  %v4190 = vunpack.c.l.b16 %v4151
  %v4191 = vunpack.c.l.b16 %v4152
  %v4192 = vunpack.c.l.b16 %v4153
  %v4193 = vunpack.c.l.b16 %v4154
  %v4194 = vunpack.c.l.b16 %v4155
  %v4195 = vunpack.c.l.b16 %v4156
  %v4196 = vunpack.c.l.b16 %v4157
  %v4197 = vunpack.c.l.b16 %v4158
  %v4198 = vunpack.c.l.b16 %v4159
  %v4199 = vunpack.c.l.b16 %v4160
  %v4200 = vunpack.c.l.b16 %v4161
  %v4201 = vunpack.c.l.b16 %v4162
  %v4202 = vunpack.c.l.b16 %v4163
  %v4203 = vunpack.c.l.b16 %v4164
  %v4204 = vunpack.c.l.b16 %v4165
  %v4205 = vpack.c.b16 %v4190, %v4189
  %v4206 = vpack.c.b16 %v4192, %v4191
  %v4207 = vpack.c.b16 %v4194, %v4193
  %v4208 = vpack.c.b16 %v4196, %v4195
  %v4209 = vpack.c.b16 %v4198, %v4197
  %v4210 = vpack.c.b16 %v4200, %v4199
  %v4211 = vpack.c.b16 %v4202, %v4201
  %v4212 = vpack.c.b16 %v4204, %v4203
  %4221 = vmatprep.subr.bf16.mxu0 0
  %4222 = vmatpush1.bf16.msra.mxu0 %v4205
  %4223 = vmatprep.subr.bf16.mxu0 0
  %4224 = vmatpush1.bf16.msra.mxu0 %v4206
  %4225 = vmatprep.subr.bf16.mxu0 0
  %4226 = vmatpush1.bf16.msra.mxu0 %v4207
  %4227 = vmatprep.subr.bf16.mxu0 0
  %4228 = vmatpush1.bf16.msra.mxu0 %v4208
  %4229 = vmatprep.subr.bf16.mxu0 0
  %4230 = vmatpush1.bf16.msra.mxu0 %v4209
  %4231 = vmatprep.subr.bf16.mxu0 0
  %4232 = vmatpush1.bf16.msra.mxu0 %v4210
  %4233 = vmatprep.subr.bf16.mxu0 0
  %4234 = vmatpush1.bf16.msra.mxu0 %v4211
  %4235 = vmatprep.subr.bf16.mxu0 0
  %4236 = vmatpush1.bf16.msra.mxu0 %v4212
  %4237 = vmatprep.subr.bf16.mxu0 0
  %4238 = vmatpush1.bf16.msra.mxu0 0
  %4239 = vmatprep.subr.bf16.mxu0 0
  %4240 = vmatpush1.bf16.msra.mxu0 0
  %4241 = vmatprep.subr.bf16.mxu0 0
  %4242 = vmatpush1.bf16.msra.mxu0 0
  %4243 = vmatprep.subr.bf16.mxu0 0
  %4244 = vmatpush1.bf16.msra.mxu0 0
  %4245 = vmatprep.subr.bf16.mxu0 0
  %4246 = vmatpush1.bf16.msra.mxu0 0
  %4247 = vmatprep.subr.bf16.mxu0 0
  %4248 = vmatpush1.bf16.msra.mxu0 0
  %4249 = vmatprep.subr.bf16.mxu0 0
  %4250 = vmatpush1.bf16.msra.mxu0 0
  %4251 = vmatprep.subr.bf16.mxu0 0
  %4252 = vmatpush1.bf16.msra.mxu0 0
  %4253 = vmatprep.mubr.bf16.mxu0 0
  %4254 = vmatmul.mubr.bf16.gmra.mrb[0].mxu0 %v4149
  %v4255 = vpop.f32.mrb[0].mxu0
  %v4256 = vadd.f32 %v4171, %v4255
  %v4257 = vpop.f32.mrb[0].mxu0
  %v4258 = vpop.f32.mrb[0].mxu0
  %v4259 = vadd.f32 %v4171, %v4258
  %v4260 = vpop.f32.mrb[0].mxu0
  %4261 = vdwg.mxu0
  %4262 = vst [vmem:[%s8] sm:$0xff] %v4256
  %4263 = vst [vmem:[%s8 + $0x8] sm:$0xff] %v4259
  // Predicated region
  $region34: #{lstm_classifier_forward.1} parent=0 // pred_check
    _
  $region35: #{lstm_classifier_forward.1} parent=0 // pred_check_branch
    %4265 = sbr.rel (0) target = $region37
  $region36: #{lstm_classifier_forward.1} parent=0 // pred_region
    _
  $region37: #{lstm_classifier_forward.1} parent=0 // pred_fallthru
    _
  // Predicated region
  $region38: #{lstm_classifier_forward.1} parent=0 // pred_check
    _
  $region39: #{lstm_classifier_forward.1} parent=0 // pred_check_branch
    %4267 = sbr.rel (0) target = $region41
  $region40: #{lstm_classifier_forward.1} parent=0 // pred_region
    _
  $region41: #{lstm_classifier_forward.1} parent=0 // pred_fallthru
    _

</llo_original>
